<compile_context>
chip_gen: v7x
topology: tpu7x:2x2x1
jax: 0.10.0
libtpu: 0.0.40
codegen_flags: <defaults>
</compile_context>

<pallas_src>
import jax
import jax.numpy as jnp
from jax.experimental import pallas as pl
from jax.experimental.pallas import tpu as pltpu


def decoder_kernel(enc_ref, w2_ref, b12_ref, w1p_ref, w3_ref, pre_ref,
                   wihp_ref, whh_ref, wfc_ctx_ref, wffh_ref, wffc_ref,
                   bff_ref, out_ref):
    f32 = jnp.float32
    bf16 = jnp.bfloat16

    enc = enc_ref[...]                           # (B, Tm1, E) f32
    B, Tm1, E = enc.shape
    HP = whh_ref.shape[0]                        # hidden size padded to 128 lanes

    # --- prologue: z2 = attn_layer2(enc) + (b1 + b2), computed in-kernel ---------
    enc_bf = enc.astype(bf16)
    w2b = jnp.broadcast_to(w2_ref[...], (B, E, E))               # bf16
    z2 = jnp.einsum("bte,bef->btf", enc_bf, w2b,
                    preferred_element_type=f32) + b12_ref[...]   # (B, Tm1, E) f32

    # Loop-invariant loads / views hoisted out of the unrolled loop.
    w1p = w1p_ref[...]                           # (2*HP, E)  bf16, fused attn1
    w3r = w3_ref[...].reshape(1, 1, E)           # (1, 1, E)  f32
    wihp = wihp_ref[...]                         # (1, 4*HP)  f32
    whh = whh_ref[...]                           # (HP, 4*HP) bf16 (cell rows dropped)
    wfc_ctx = wfc_ctx_ref[...]                   # (1, E)
    wffh = wffh_ref[...]                         # (1, HP)    zero-padded past D
    wffc = wffc_ref[...]                         # (1, E)
    bff = bff_ref[0]

    # hc = [hidden | cell]; padding lanes stay exactly 0 through the recurrence.
    hc = jnp.zeros((B, 2 * HP), f32)
    context = jnp.zeros((B, E), f32)

    # Fully unrolled decode loop (Tm1 static & small): every index below is static.
    for t in range(Tm1):
        hc_bf = hc.astype(bf16)

        # --- attention: attn_layer1(cat(hidden, cell)) as ONE fused bf16 matmul ---
        # (b1 is folded into z2; attn_layer3 bias omitted: softmax is shift-invariant)
        z1 = jnp.dot(hc_bf, w1p, preferred_element_type=f32)        # (B, E)
        z3 = jnp.tanh(z1[:, None, :] + z2)                          # (B, Tm1, E)
        z4 = jnp.sum(z3 * w3r, axis=-1)                             # (B, Tm1)

        # softmax over time: unnormalized context, then one (B,1) reciprocal scale.
        m = jnp.max(z4, axis=1, keepdims=True)
        ex = jnp.exp(z4 - m)
        ctx_un = jnp.sum(ex[:, :, None] * enc, axis=1)              # (B, E)
        context = ctx_un * pl.reciprocal(
            jnp.sum(ex, axis=1, keepdims=True), approx=True)        # (B, E)

        # --- gates: ctx part of fc * wih + hidden @ whh + precomputed term --------
        ctx_dot = jnp.sum(context * wfc_ctx, axis=1, keepdims=True)  # (B, 1)
        gates = (ctx_dot * wihp
                 + jnp.dot(hc_bf[:, :HP], whh, preferred_element_type=f32)
                 + pre_ref[t])                                       # (B, 4*HP)

        # gate order (i, f, o, g): one fused sigmoid + one tanh on the EUP.
        sg = jax.nn.sigmoid(gates[:, :3 * HP])
        g_g = jnp.tanh(gates[:, 3 * HP:])
        cell = sg[:, HP:2 * HP] * hc[:, HP:] + sg[:, :HP] * g_g      # (B, HP)
        hidden = sg[:, 2 * HP:3 * HP] * jnp.tanh(cell)               # (B, HP)
        hc = jnp.concatenate([hidden, cell], axis=1)                 # (B, 2*HP)

    # fc_final(cat(hidden, context)); padding lanes of hidden are zero.
    out = (jnp.sum(hc[:, :HP] * wffh, axis=1, keepdims=True)
           + jnp.sum(context * wffc, axis=1, keepdims=True)
           + bff)
    out_ref[...] = out.astype(out_ref.dtype)


def decoder_forward(input_encoded, y_history, params):
    """Wrapper: prepares padded / fused / bf16 weights and the precomputed gate term
    in plain XLA, then calls the kernel (which holds the serial decode loop)."""
    B, Tm1, E = input_encoded.shape
    D = params["whh_t"].shape[0]
    HP = ((D + 127) // 128) * 128          # pad hidden/cell (and each gate) to 128 lanes

    f32, bf16 = jnp.float32, jnp.bfloat16
    enc = input_encoded.astype(f32)
    y_history = y_history.astype(f32)

    # attn_layer2 weight as bf16 MXU operand; b1 folded into the z2 bias.
    w2 = params["w2_t"].astype(bf16)                                 # (E, E)
    b12 = (params["b1"] + params["b2"]).astype(f32)                  # (1, E)

    # attn_layer1 weight, fused for cat(hidden, cell), row-padded to (2*HP, E), bf16.
    w1_t = params["w1_t"]                                            # (2D, E)
    w1p = jnp.concatenate([
        jnp.pad(w1_t[:D], ((0, HP - D), (0, 0))),
        jnp.pad(w1_t[D:], ((0, HP - D), (0, 0))),
    ], axis=0).astype(bf16)                                          # (2*HP, E)

    # Gate order (i, f, o, g) — torch LSTM stores (i, f, g, o).  Each gate's D real
    # columns sit at the start of its own 128-lane block, zeros elsewhere (so padded
    # gate activations stay inert: sigmoid(0)*0, tanh(0)).
    GATE_ORDER = (0, 1, 3, 2)

    def pad_gate_cols(w):
        pads = [(0, 0)] * (w.ndim - 1) + [(0, HP - D)]
        return jnp.concatenate(
            [jnp.pad(w[..., k * D:(k + 1) * D], pads) for k in GATE_ORDER], axis=-1)

    wihp = pad_gate_cols(params["wih_t"]).astype(f32)                # (1, 4*HP)
    blstm = pad_gate_cols(params["bih"] + params["bhh"]).astype(f32)  # (1, 4*HP)
    # LSTM hh weight: hidden rows only (cell rows were all-zero) -> (HP, 4*HP), bf16.
    whh = jnp.pad(pad_gate_cols(params["whh_t"]),
                  ((0, HP - D), (0, 0))).astype(bf16)                # (HP, 4*HP)

    # Recurrence-independent gate term: (y_t*wfc_y + bfc)*wih + (bih + bhh).
    wfc_y = params["wfc"][:, E:E + 1]                                # (1, 1)
    bfc = params["bfc"]                                              # (1, 1)
    y_aff = jnp.swapaxes(y_history, 0, 1)[:, :, None] * wfc_y + bfc  # (Tm1, B, 1)
    pre = (y_aff * wihp[None] + blstm[None]).astype(f32)             # (Tm1, B, 4*HP)

    wfc_ctx = params["wfc"][:, :E].astype(f32)                       # (1, E)
    wffh = jnp.pad(params["wff"][:, :D], ((0, 0), (0, HP - D))).astype(f32)  # (1, HP)
    wffc = params["wff"][:, D:].astype(f32)                          # (1, E)
    bff = params["bff"].reshape(1).astype(f32)                       # SMEM scalar

    args = (enc, w2, b12, w1p, params["w3"].astype(f32), pre,
            wihp, whh, wfc_ctx, wffh, wffc, bff)

    vmem = pl.BlockSpec(memory_space=pltpu.MemorySpace.VMEM)
    smem = pl.BlockSpec(memory_space=pltpu.MemorySpace.SMEM)
    in_specs = [vmem] * 11 + [smem]

    # NOTE: largest throughput lever is batching more sequences per call (B up to 8+
    #       is essentially latency-flat: sublanes/MXU rows are underutilized at B=2).
    # NOTE(v7x): only shard batch across the two TensorCores
    #       (dimension_semantics=("parallel",)) when per-core batch stays >= 8, i.e.
    #       B >= 16; at small B the serial Tm1 chain gains nothing.
    # NOTE(v7x): whh grows O(HP^2); for large D set
    #       pltpu.CompilerParams(vmem_limit_bytes=...) or tile the gate matmul K —
    #       bf16 + cell-row drop already halves the footprint applied here.
    return pl.pallas_call(
        decoder_kernel,
        out_shape=jax.ShapeDtypeStruct((B, 1), jnp.float32),
        in_specs=in_specs,
        out_specs=vmem,
    )(*args)


def decoder_ref(enc, y_hist, p):
    """Pure-JAX reference with the exact (unpadded, f32) module semantics."""
    B, Tm1, E = enc.shape
    D = p["whh_t"].shape[0]
    hidden = jnp.zeros((B, D), jnp.float32)
    cell = jnp.zeros((B, D), jnp.float32)
    context = jnp.zeros((B, E), jnp.float32)
    z2 = (enc.reshape(B * Tm1, E) @ p["w2_t"] + p["b2"]).reshape(B, Tm1, E)
    for t in range(Tm1):
        z1 = hidden @ p["w1_t"][:D] + cell @ p["w1_t"][D:] + p["b1"]
        z3 = jnp.tanh(z1[:, None, :] + z2)
        z4 = jnp.sum(z3 * p["w3"].reshape(1, 1, E), axis=-1) + p["b3"]
        alpha = jax.nn.softmax(z4, axis=1)
        context = jnp.sum(alpha[:, :, None] * enc, axis=1)
        y_t = y_hist[:, t:t + 1]
        y_tilde = (jnp.sum(context * p["wfc"][:, :E], axis=1, keepdims=True)
                   + y_t * p["wfc"][:, E:] + p["bfc"])
        gates = y_tilde * p["wih_t"] + hidden @ p["whh_t"] + p["bih"] + p["bhh"]
        i_g = jax.nn.sigmoid(gates[:, 0 * D:1 * D])
        f_g = jax.nn.sigmoid(gates[:, 1 * D:2 * D])
        g_g = jnp.tanh(gates[:, 2 * D:3 * D])
        o_g = jax.nn.sigmoid(gates[:, 3 * D:4 * D])
        cell = f_g * cell + i_g * g_g
        hidden = o_g * jnp.tanh(cell)
    return (jnp.sum(hidden * p["wff"][:, :D], axis=1, keepdims=True)
            + jnp.sum(context * p["wff"][:, D:], axis=1, keepdims=True)
            + p["bff"])


def make_params(key, E, D, out_feats=1):
    ks = jax.random.split(key, 16)
    n = lambda k, s, sc=0.1: (jax.random.normal(k, s) * sc).astype(jnp.float32)
    return {
        # attn_layer1: Linear(2D -> E); stored transposed (in, out)
        "w1_t": n(ks[0], (2 * D, E)), "b1": n(ks[1], (1, E)),
        # attn_layer2: Linear(E -> E)
        "w2_t": n(ks[2], (E, E)), "b2": n(ks[3], (1, E)),
        # attn_layer3: Linear(E -> 1)
        "w3": n(ks[4], (1, E)), "b3": n(ks[5], (1, 1)),
        # LSTM(input=1, hidden=D): weight_ih (4D,1)->(1,4D), weight_hh (4D,D)->(D,4D)
        "wih_t": n(ks[6], (1, 4 * D)), "whh_t": n(ks[7], (D, 4 * D)),
        "bih": n(ks[8], (1, 4 * D)), "bhh": n(ks[9], (1, 4 * D)),
        # fc: Linear(E+1 -> 1), weight initialized ~ normal_() in torch
        "wfc": n(ks[10], (1, E + out_feats), 1.0), "bfc": n(ks[11], (1, 1)),
        # fc_final: Linear(D+E -> 1)
        "wff": n(ks[12], (1, D + E)), "bff": n(ks[13], (1, 1)),
    }


if __name__ == "__main__":
    B, T, E, D = 2, 9, 32, 32          # batch=2, T-1=8 timesteps, hidden=32
    Tm1 = T - 1
    key = jax.random.PRNGKey(0)
    k_p, k_enc, k_y = jax.random.split(key, 3)

    params = make_params(k_p, E, D)
    input_encoded = jax.random.normal(k_enc, (B, Tm1, E), jnp.float32)
    y_history = jax.random.normal(k_y, (B, Tm1), jnp.float32)

    fwd = jax.jit(decoder_forward)
    out = jax.block_until_ready(fwd(input_encoded, y_history, params))

    ref = decoder_ref(input_encoded, y_history, params)
    assert out.shape == (B, 1), out.shape
    # bf16 MXU operands + approx softmax reciprocal inside the 8-step recurrence
    # introduce a few e-3 of error vs the exact f32 reference -> modest tolerance.
    assert jnp.allclose(out, ref, atol=2e-2, rtol=2e-2), (out, ref)
    print("KERNEL_OK")
</pallas_src>

<mosaic_0001>
module attributes {stable_mosaic.version = 11 : i64} {
  func.func @decoder_kernel(%arg0: memref<2x8x32xf32, #tpu.memory_space<vmem>>, %arg1: memref<32x32xbf16, #tpu.memory_space<vmem>>, %arg2: memref<1x32xf32, #tpu.memory_space<vmem>>, %arg3: memref<256x32xbf16, #tpu.memory_space<vmem>>, %arg4: memref<1x32xf32, #tpu.memory_space<vmem>>, %arg5: memref<8x2x512xf32, #tpu.memory_space<vmem>>, %arg6: memref<1x512xf32, #tpu.memory_space<vmem>>, %arg7: memref<128x512xbf16, #tpu.memory_space<vmem>>, %arg8: memref<1x32xf32, #tpu.memory_space<vmem>>, %arg9: memref<1x128xf32, #tpu.memory_space<vmem>>, %arg10: memref<1x32xf32, #tpu.memory_space<vmem>>, %arg11: memref<1xf32, #tpu.memory_space<smem>>, %arg12: memref<2x1xf32, #tpu.memory_space<vmem>>) attributes {dimension_semantics = [], scalar_prefetch = 0 : i64, scratch_operands = 0 : i64, tpu.core_type = #tpu.core_type<tc>} {
    %c0 = arith.constant 0 : index
    %c0_0 = arith.constant 0 : index
    %c0_1 = arith.constant 0 : index
    %0 = vector.load %arg0[%c0, %c0_0, %c0_1] : memref<2x8x32xf32, #tpu.memory_space<vmem>>, vector<2x8x32xf32>
    %1 = arith.truncf %0 : vector<2x8x32xf32> to vector<2x8x32xbf16>
    %c0_2 = arith.constant 0 : index
    %c0_3 = arith.constant 0 : index
    %2 = vector.load %arg1[%c0_2, %c0_3] : memref<32x32xbf16, #tpu.memory_space<vmem>>, vector<32x32xbf16>
    %3 = vector.shape_cast %2 : vector<32x32xbf16> to vector<1x32x32xbf16>
    %4 = vector.broadcast %3 : vector<1x32x32xbf16> to vector<2x32x32xbf16>
    "tpu.trace_start"() <{level = 10 : i32, message = "bte,bef->btf"}> : () -> ()
    %cst = arith.constant dense<0.000000e+00> : vector<2x8x32xf32>
    %5 = tpu.matmul %1, %4, %cst {dimension_numbers = #tpu.dot_dimension_numbers<[2], [1], [1], [2], [0, 0, 0, 1, 1, 2], [0], [0]>} : vector<2x8x32xbf16>, vector<2x32x32xbf16>, vector<2x8x32xf32> -> vector<2x8x32xf32>
    "tpu.trace_stop"() : () -> ()
    %c0_4 = arith.constant 0 : index
    %c0_5 = arith.constant 0 : index
    %6 = vector.load %arg2[%c0_4, %c0_5] : memref<1x32xf32, #tpu.memory_space<vmem>>, vector<1x32xf32>
    %7 = vector.shape_cast %6 : vector<1x32xf32> to vector<1x1x32xf32>
    %8 = vector.broadcast %7 : vector<1x1x32xf32> to vector<2x8x32xf32>
    %9 = arith.addf %5, %8 : vector<2x8x32xf32>
    %c0_6 = arith.constant 0 : index
    %c0_7 = arith.constant 0 : index
    %10 = vector.load %arg3[%c0_6, %c0_7] : memref<256x32xbf16, #tpu.memory_space<vmem>>, vector<256x32xbf16>
    %c0_8 = arith.constant 0 : index
    %c0_9 = arith.constant 0 : index
    %11 = vector.load %arg4[%c0_8, %c0_9] : memref<1x32xf32, #tpu.memory_space<vmem>>, vector<1x32xf32>
    %12 = vector.shape_cast %11 : vector<1x32xf32> to vector<1x1x32xf32>
    %c0_10 = arith.constant 0 : index
    %c0_11 = arith.constant 0 : index
    %13 = vector.load %arg6[%c0_10, %c0_11] : memref<1x512xf32, #tpu.memory_space<vmem>>, vector<1x512xf32>
    %c0_12 = arith.constant 0 : index
    %c0_13 = arith.constant 0 : index
    %14 = vector.load %arg7[%c0_12, %c0_13] : memref<128x512xbf16, #tpu.memory_space<vmem>>, vector<128x512xbf16>
    %c0_14 = arith.constant 0 : index
    %c0_15 = arith.constant 0 : index
    %15 = vector.load %arg8[%c0_14, %c0_15] : memref<1x32xf32, #tpu.memory_space<vmem>>, vector<1x32xf32>
    %c0_16 = arith.constant 0 : index
    %c0_17 = arith.constant 0 : index
    %16 = vector.load %arg9[%c0_16, %c0_17] : memref<1x128xf32, #tpu.memory_space<vmem>>, vector<1x128xf32>
    %c0_18 = arith.constant 0 : index
    %c0_19 = arith.constant 0 : index
    %17 = vector.load %arg10[%c0_18, %c0_19] : memref<1x32xf32, #tpu.memory_space<vmem>>, vector<1x32xf32>
    %c0_20 = arith.constant 0 : index
    %18 = memref.load %arg11[%c0_20] : memref<1xf32, #tpu.memory_space<smem>>
    %cst_21 = arith.constant 0.000000e+00 : f32
    %19 = vector.broadcast %cst_21 : f32 to vector<2x256xf32>
    %20 = arith.truncf %19 : vector<2x256xf32> to vector<2x256xbf16>
    %cst_22 = arith.constant dense<0.000000e+00> : vector<2x32xf32>
    %21 = tpu.matmul %20, %10, %cst_22 {dimension_numbers = #tpu.dot_dimension_numbers<[1], [0], [0], [1], [0, 0, 1, 1], [], []>} : vector<2x256xbf16>, vector<256x32xbf16>, vector<2x32xf32> -> vector<2x32xf32>
    %22 = vector.shape_cast %21 : vector<2x32xf32> to vector<2x1x32xf32>
    %23 = vector.broadcast %22 : vector<2x1x32xf32> to vector<2x8x32xf32>
    %24 = arith.addf %23, %9 : vector<2x8x32xf32>
    %25 = math.tanh %24 : vector<2x8x32xf32>
    %26 = vector.broadcast %12 : vector<1x1x32xf32> to vector<2x8x32xf32>
    %27 = arith.mulf %25, %26 : vector<2x8x32xf32>
    %cst_23 = arith.constant dense<0.000000e+00> : vector<2x8xf32>
    %28 = vector.multi_reduction <add>, %27, %cst_23 [2] : vector<2x8x32xf32> to vector<2x8xf32>
    %cst_24 = arith.constant dense<0xFF800000> : vector<2xf32>
    %29 = vector.multi_reduction <maximumf>, %28, %cst_24 [1] : vector<2x8xf32> to vector<2xf32>
    %30 = vector.shape_cast %29 : vector<2xf32> to vector<2x1xf32>
    %31 = vector.broadcast %30 : vector<2x1xf32> to vector<2x8xf32>
    %32 = arith.subf %28, %31 : vector<2x8xf32>
    %33 = math.exp %32 : vector<2x8xf32>
    %34 = vector.shape_cast %33 : vector<2x8xf32> to vector<2x8x1xf32>
    %35 = vector.broadcast %34 : vector<2x8x1xf32> to vector<2x8x32xf32>
    %36 = arith.mulf %35, %0 : vector<2x8x32xf32>
    %cst_25 = arith.constant dense<0.000000e+00> : vector<2x32xf32>
    %37 = vector.multi_reduction <add>, %36, %cst_25 [1] : vector<2x8x32xf32> to vector<2x32xf32>
    %cst_26 = arith.constant dense<0.000000e+00> : vector<2xf32>
    %38 = vector.multi_reduction <add>, %33, %cst_26 [1] : vector<2x8xf32> to vector<2xf32>
    %39 = vector.shape_cast %38 : vector<2xf32> to vector<2x1xf32>
    %40 = tpu.reciprocal %39 {approx = true} : vector<2x1xf32> -> vector<2x1xf32>
    %41 = vector.broadcast %40 : vector<2x1xf32> to vector<2x32xf32>
    %42 = arith.mulf %37, %41 : vector<2x32xf32>
    %43 = vector.broadcast %15 : vector<1x32xf32> to vector<2x32xf32>
    %44 = arith.mulf %42, %43 : vector<2x32xf32>
    %cst_27 = arith.constant dense<0.000000e+00> : vector<2xf32>
    %45 = vector.multi_reduction <add>, %44, %cst_27 [1] : vector<2x32xf32> to vector<2xf32>
    %46 = vector.shape_cast %45 : vector<2xf32> to vector<2x1xf32>
    %47 = vector.broadcast %46 : vector<2x1xf32> to vector<2x512xf32>
    %48 = vector.broadcast %13 : vector<1x512xf32> to vector<2x512xf32>
    %49 = arith.mulf %47, %48 : vector<2x512xf32>
    %50 = vector.extract_strided_slice %20 {offsets = [0, 0], sizes = [2, 128], strides = [1, 1]} : vector<2x256xbf16> to vector<2x128xbf16>
    %cst_28 = arith.constant dense<0.000000e+00> : vector<2x512xf32>
    %51 = tpu.matmul %50, %14, %cst_28 {dimension_numbers = #tpu.dot_dimension_numbers<[1], [0], [0], [1], [0, 0, 1, 1], [], []>} : vector<2x128xbf16>, vector<128x512xbf16>, vector<2x512xf32> -> vector<2x512xf32>
    %52 = arith.addf %49, %51 : vector<2x512xf32>
    %c0_29 = arith.constant 0 : index
    %c0_30 = arith.constant 0 : index
    %c0_31 = arith.constant 0 : index
    %53 = vector.load %arg5[%c0_29, %c0_30, %c0_31] : memref<8x2x512xf32, #tpu.memory_space<vmem>>, vector<1x2x512xf32>
    %54 = vector.shape_cast %53 : vector<1x2x512xf32> to vector<2x512xf32>
    %55 = arith.addf %52, %54 : vector<2x512xf32>
    %56 = vector.extract_strided_slice %55 {offsets = [0, 0], sizes = [2, 384], strides = [1, 1]} : vector<2x512xf32> to vector<2x384xf32>
    %57 = arith.negf %56 : vector<2x384xf32>
    %58 = math.exp %57 : vector<2x384xf32>
    %cst_32 = arith.constant 1.000000e+00 : f32
    %59 = vector.broadcast %cst_32 : f32 to vector<2x384xf32>
    %60 = arith.addf %59, %58 : vector<2x384xf32>
    %61 = arith.divf %59, %60 : vector<2x384xf32>
    %62 = vector.extract_strided_slice %55 {offsets = [0, 384], sizes = [2, 128], strides = [1, 1]} : vector<2x512xf32> to vector<2x128xf32>
    %63 = math.tanh %62 : vector<2x128xf32>
    %64 = vector.extract_strided_slice %61 {offsets = [0, 128], sizes = [2, 128], strides = [1, 1]} : vector<2x384xf32> to vector<2x128xf32>
    %65 = vector.extract_strided_slice %19 {offsets = [0, 128], sizes = [2, 128], strides = [1, 1]} : vector<2x256xf32> to vector<2x128xf32>
    %66 = arith.mulf %64, %65 : vector<2x128xf32>
    %67 = vector.extract_strided_slice %61 {offsets = [0, 0], sizes = [2, 128], strides = [1, 1]} : vector<2x384xf32> to vector<2x128xf32>
    %68 = arith.mulf %67, %63 : vector<2x128xf32>
    %69 = arith.addf %66, %68 : vector<2x128xf32>
    %70 = vector.extract_strided_slice %61 {offsets = [0, 256], sizes = [2, 128], strides = [1, 1]} : vector<2x384xf32> to vector<2x128xf32>
    %71 = math.tanh %69 : vector<2x128xf32>
    %72 = arith.mulf %70, %71 : vector<2x128xf32>
    %73 = tpu.concatenate %72, %69 in 1 : vector<2x128xf32>, vector<2x128xf32> -> vector<2x256xf32>
    %74 = arith.truncf %73 : vector<2x256xf32> to vector<2x256xbf16>
    %cst_33 = arith.constant dense<0.000000e+00> : vector<2x32xf32>
    %75 = tpu.matmul %74, %10, %cst_33 {dimension_numbers = #tpu.dot_dimension_numbers<[1], [0], [0], [1], [0, 0, 1, 1], [], []>} : vector<2x256xbf16>, vector<256x32xbf16>, vector<2x32xf32> -> vector<2x32xf32>
    %76 = vector.shape_cast %75 : vector<2x32xf32> to vector<2x1x32xf32>
    %77 = vector.broadcast %76 : vector<2x1x32xf32> to vector<2x8x32xf32>
    %78 = arith.addf %77, %9 : vector<2x8x32xf32>
    %79 = math.tanh %78 : vector<2x8x32xf32>
    %80 = vector.broadcast %12 : vector<1x1x32xf32> to vector<2x8x32xf32>
    %81 = arith.mulf %79, %80 : vector<2x8x32xf32>
    %cst_34 = arith.constant dense<0.000000e+00> : vector<2x8xf32>
    %82 = vector.multi_reduction <add>, %81, %cst_34 [2] : vector<2x8x32xf32> to vector<2x8xf32>
    %cst_35 = arith.constant dense<0xFF800000> : vector<2xf32>
    %83 = vector.multi_reduction <maximumf>, %82, %cst_35 [1] : vector<2x8xf32> to vector<2xf32>
    %84 = vector.shape_cast %83 : vector<2xf32> to vector<2x1xf32>
    %85 = vector.broadcast %84 : vector<2x1xf32> to vector<2x8xf32>
    %86 = arith.subf %82, %85 : vector<2x8xf32>
    %87 = math.exp %86 : vector<2x8xf32>
    %88 = vector.shape_cast %87 : vector<2x8xf32> to vector<2x8x1xf32>
    %89 = vector.broadcast %88 : vector<2x8x1xf32> to vector<2x8x32xf32>
    %90 = arith.mulf %89, %0 : vector<2x8x32xf32>
    %cst_36 = arith.constant dense<0.000000e+00> : vector<2x32xf32>
    %91 = vector.multi_reduction <add>, %90, %cst_36 [1] : vector<2x8x32xf32> to vector<2x32xf32>
    %cst_37 = arith.constant dense<0.000000e+00> : vector<2xf32>
    %92 = vector.multi_reduction <add>, %87, %cst_37 [1] : vector<2x8xf32> to vector<2xf32>
    %93 = vector.shape_cast %92 : vector<2xf32> to vector<2x1xf32>
    %94 = tpu.reciprocal %93 {approx = true} : vector<2x1xf32> -> vector<2x1xf32>
    %95 = vector.broadcast %94 : vector<2x1xf32> to vector<2x32xf32>
    %96 = arith.mulf %91, %95 : vector<2x32xf32>
    %97 = vector.broadcast %15 : vector<1x32xf32> to vector<2x32xf32>
    %98 = arith.mulf %96, %97 : vector<2x32xf32>
    %cst_38 = arith.constant dense<0.000000e+00> : vector<2xf32>
    %99 = vector.multi_reduction <add>, %98, %cst_38 [1] : vector<2x32xf32> to vector<2xf32>
    %100 = vector.shape_cast %99 : vector<2xf32> to vector<2x1xf32>
    %101 = vector.broadcast %100 : vector<2x1xf32> to vector<2x512xf32>
    %102 = vector.broadcast %13 : vector<1x512xf32> to vector<2x512xf32>
    %103 = arith.mulf %101, %102 : vector<2x512xf32>
    %104 = vector.extract_strided_slice %74 {offsets = [0, 0], sizes = [2, 128], strides = [1, 1]} : vector<2x256xbf16> to vector<2x128xbf16>
    %cst_39 = arith.constant dense<0.000000e+00> : vector<2x512xf32>
    %105 = tpu.matmul %104, %14, %cst_39 {dimension_numbers = #tpu.dot_dimension_numbers<[1], [0], [0], [1], [0, 0, 1, 1], [], []>} : vector<2x128xbf16>, vector<128x512xbf16>, vector<2x512xf32> -> vector<2x512xf32>
    %106 = arith.addf %103, %105 : vector<2x512xf32>
    %c1 = arith.constant 1 : index
    %c0_40 = arith.constant 0 : index
    %c0_41 = arith.constant 0 : index
    %107 = vector.load %arg5[%c1, %c0_40, %c0_41] : memref<8x2x512xf32, #tpu.memory_space<vmem>>, vector<1x2x512xf32>
    %108 = vector.shape_cast %107 : vector<1x2x512xf32> to vector<2x512xf32>
    %109 = arith.addf %106, %108 : vector<2x512xf32>
    %110 = vector.extract_strided_slice %109 {offsets = [0, 0], sizes = [2, 384], strides = [1, 1]} : vector<2x512xf32> to vector<2x384xf32>
    %111 = arith.negf %110 : vector<2x384xf32>
    %112 = math.exp %111 : vector<2x384xf32>
    %cst_42 = arith.constant 1.000000e+00 : f32
    %113 = vector.broadcast %cst_42 : f32 to vector<2x384xf32>
    %114 = arith.addf %113, %112 : vector<2x384xf32>
    %115 = arith.divf %113, %114 : vector<2x384xf32>
    %116 = vector.extract_strided_slice %109 {offsets = [0, 384], sizes = [2, 128], strides = [1, 1]} : vector<2x512xf32> to vector<2x128xf32>
    %117 = math.tanh %116 : vector<2x128xf32>
    %118 = vector.extract_strided_slice %115 {offsets = [0, 128], sizes = [2, 128], strides = [1, 1]} : vector<2x384xf32> to vector<2x128xf32>
    %119 = vector.extract_strided_slice %73 {offsets = [0, 128], sizes = [2, 128], strides = [1, 1]} : vector<2x256xf32> to vector<2x128xf32>
    %120 = arith.mulf %118, %119 : vector<2x128xf32>
    %121 = vector.extract_strided_slice %115 {offsets = [0, 0], sizes = [2, 128], strides = [1, 1]} : vector<2x384xf32> to vector<2x128xf32>
    %122 = arith.mulf %121, %117 : vector<2x128xf32>
    %123 = arith.addf %120, %122 : vector<2x128xf32>
    %124 = vector.extract_strided_slice %115 {offsets = [0, 256], sizes = [2, 128], strides = [1, 1]} : vector<2x384xf32> to vector<2x128xf32>
    %125 = math.tanh %123 : vector<2x128xf32>
    %126 = arith.mulf %124, %125 : vector<2x128xf32>
    %127 = tpu.concatenate %126, %123 in 1 : vector<2x128xf32>, vector<2x128xf32> -> vector<2x256xf32>
    %128 = arith.truncf %127 : vector<2x256xf32> to vector<2x256xbf16>
    %cst_43 = arith.constant dense<0.000000e+00> : vector<2x32xf32>
    %129 = tpu.matmul %128, %10, %cst_43 {dimension_numbers = #tpu.dot_dimension_numbers<[1], [0], [0], [1], [0, 0, 1, 1], [], []>} : vector<2x256xbf16>, vector<256x32xbf16>, vector<2x32xf32> -> vector<2x32xf32>
    %130 = vector.shape_cast %129 : vector<2x32xf32> to vector<2x1x32xf32>
    %131 = vector.broadcast %130 : vector<2x1x32xf32> to vector<2x8x32xf32>
    %132 = arith.addf %131, %9 : vector<2x8x32xf32>
    %133 = math.tanh %132 : vector<2x8x32xf32>
    %134 = vector.broadcast %12 : vector<1x1x32xf32> to vector<2x8x32xf32>
    %135 = arith.mulf %133, %134 : vector<2x8x32xf32>
    %cst_44 = arith.constant dense<0.000000e+00> : vector<2x8xf32>
    %136 = vector.multi_reduction <add>, %135, %cst_44 [2] : vector<2x8x32xf32> to vector<2x8xf32>
    %cst_45 = arith.constant dense<0xFF800000> : vector<2xf32>
    %137 = vector.multi_reduction <maximumf>, %136, %cst_45 [1] : vector<2x8xf32> to vector<2xf32>
    %138 = vector.shape_cast %137 : vector<2xf32> to vector<2x1xf32>
    %139 = vector.broadcast %138 : vector<2x1xf32> to vector<2x8xf32>
    %140 = arith.subf %136, %139 : vector<2x8xf32>
    %141 = math.exp %140 : vector<2x8xf32>
    %142 = vector.shape_cast %141 : vector<2x8xf32> to vector<2x8x1xf32>
    %143 = vector.broadcast %142 : vector<2x8x1xf32> to vector<2x8x32xf32>
    %144 = arith.mulf %143, %0 : vector<2x8x32xf32>
    %cst_46 = arith.constant dense<0.000000e+00> : vector<2x32xf32>
    %145 = vector.multi_reduction <add>, %144, %cst_46 [1] : vector<2x8x32xf32> to vector<2x32xf32>
    %cst_47 = arith.constant dense<0.000000e+00> : vector<2xf32>
    %146 = vector.multi_reduction <add>, %141, %cst_47 [1] : vector<2x8xf32> to vector<2xf32>
    %147 = vector.shape_cast %146 : vector<2xf32> to vector<2x1xf32>
    %148 = tpu.reciprocal %147 {approx = true} : vector<2x1xf32> -> vector<2x1xf32>
    %149 = vector.broadcast %148 : vector<2x1xf32> to vector<2x32xf32>
    %150 = arith.mulf %145, %149 : vector<2x32xf32>
    %151 = vector.broadcast %15 : vector<1x32xf32> to vector<2x32xf32>
    %152 = arith.mulf %150, %151 : vector<2x32xf32>
    %cst_48 = arith.constant dense<0.000000e+00> : vector<2xf32>
    %153 = vector.multi_reduction <add>, %152, %cst_48 [1] : vector<2x32xf32> to vector<2xf32>
    %154 = vector.shape_cast %153 : vector<2xf32> to vector<2x1xf32>
    %155 = vector.broadcast %154 : vector<2x1xf32> to vector<2x512xf32>
    %156 = vector.broadcast %13 : vector<1x512xf32> to vector<2x512xf32>
    %157 = arith.mulf %155, %156 : vector<2x512xf32>
    %158 = vector.extract_strided_slice %128 {offsets = [0, 0], sizes = [2, 128], strides = [1, 1]} : vector<2x256xbf16> to vector<2x128xbf16>
    %cst_49 = arith.constant dense<0.000000e+00> : vector<2x512xf32>
    %159 = tpu.matmul %158, %14, %cst_49 {dimension_numbers = #tpu.dot_dimension_numbers<[1], [0], [0], [1], [0, 0, 1, 1], [], []>} : vector<2x128xbf16>, vector<128x512xbf16>, vector<2x512xf32> -> vector<2x512xf32>
    %160 = arith.addf %157, %159 : vector<2x512xf32>
    %c2 = arith.constant 2 : index
    %c0_50 = arith.constant 0 : index
    %c0_51 = arith.constant 0 : index
    %161 = vector.load %arg5[%c2, %c0_50, %c0_51] : memref<8x2x512xf32, #tpu.memory_space<vmem>>, vector<1x2x512xf32>
    %162 = vector.shape_cast %161 : vector<1x2x512xf32> to vector<2x512xf32>
    %163 = arith.addf %160, %162 : vector<2x512xf32>
    %164 = vector.extract_strided_slice %163 {offsets = [0, 0], sizes = [2, 384], strides = [1, 1]} : vector<2x512xf32> to vector<2x384xf32>
    %165 = arith.negf %164 : vector<2x384xf32>
    %166 = math.exp %165 : vector<2x384xf32>
    %cst_52 = arith.constant 1.000000e+00 : f32
    %167 = vector.broadcast %cst_52 : f32 to vector<2x384xf32>
    %168 = arith.addf %167, %166 : vector<2x384xf32>
    %169 = arith.divf %167, %168 : vector<2x384xf32>
    %170 = vector.extract_strided_slice %163 {offsets = [0, 384], sizes = [2, 128], strides = [1, 1]} : vector<2x512xf32> to vector<2x128xf32>
    %171 = math.tanh %170 : vector<2x128xf32>
    %172 = vector.extract_strided_slice %169 {offsets = [0, 128], sizes = [2, 128], strides = [1, 1]} : vector<2x384xf32> to vector<2x128xf32>
    %173 = vector.extract_strided_slice %127 {offsets = [0, 128], sizes = [2, 128], strides = [1, 1]} : vector<2x256xf32> to vector<2x128xf32>
    %174 = arith.mulf %172, %173 : vector<2x128xf32>
    %175 = vector.extract_strided_slice %169 {offsets = [0, 0], sizes = [2, 128], strides = [1, 1]} : vector<2x384xf32> to vector<2x128xf32>
    %176 = arith.mulf %175, %171 : vector<2x128xf32>
    %177 = arith.addf %174, %176 : vector<2x128xf32>
    %178 = vector.extract_strided_slice %169 {offsets = [0, 256], sizes = [2, 128], strides = [1, 1]} : vector<2x384xf32> to vector<2x128xf32>
    %179 = math.tanh %177 : vector<2x128xf32>
    %180 = arith.mulf %178, %179 : vector<2x128xf32>
    %181 = tpu.concatenate %180, %177 in 1 : vector<2x128xf32>, vector<2x128xf32> -> vector<2x256xf32>
    %182 = arith.truncf %181 : vector<2x256xf32> to vector<2x256xbf16>
    %cst_53 = arith.constant dense<0.000000e+00> : vector<2x32xf32>
    %183 = tpu.matmul %182, %10, %cst_53 {dimension_numbers = #tpu.dot_dimension_numbers<[1], [0], [0], [1], [0, 0, 1, 1], [], []>} : vector<2x256xbf16>, vector<256x32xbf16>, vector<2x32xf32> -> vector<2x32xf32>
    %184 = vector.shape_cast %183 : vector<2x32xf32> to vector<2x1x32xf32>
    %185 = vector.broadcast %184 : vector<2x1x32xf32> to vector<2x8x32xf32>
    %186 = arith.addf %185, %9 : vector<2x8x32xf32>
    %187 = math.tanh %186 : vector<2x8x32xf32>
    %188 = vector.broadcast %12 : vector<1x1x32xf32> to vector<2x8x32xf32>
    %189 = arith.mulf %187, %188 : vector<2x8x32xf32>
    %cst_54 = arith.constant dense<0.000000e+00> : vector<2x8xf32>
    %190 = vector.multi_reduction <add>, %189, %cst_54 [2] : vector<2x8x32xf32> to vector<2x8xf32>
    %cst_55 = arith.constant dense<0xFF800000> : vector<2xf32>
    %191 = vector.multi_reduction <maximumf>, %190, %cst_55 [1] : vector<2x8xf32> to vector<2xf32>
    %192 = vector.shape_cast %191 : vector<2xf32> to vector<2x1xf32>
    %193 = vector.broadcast %192 : vector<2x1xf32> to vector<2x8xf32>
    %194 = arith.subf %190, %193 : vector<2x8xf32>
    %195 = math.exp %194 : vector<2x8xf32>
    %196 = vector.shape_cast %195 : vector<2x8xf32> to vector<2x8x1xf32>
    %197 = vector.broadcast %196 : vector<2x8x1xf32> to vector<2x8x32xf32>
    %198 = arith.mulf %197, %0 : vector<2x8x32xf32>
    %cst_56 = arith.constant dense<0.000000e+00> : vector<2x32xf32>
    %199 = vector.multi_reduction <add>, %198, %cst_56 [1] : vector<2x8x32xf32> to vector<2x32xf32>
    %cst_57 = arith.constant dense<0.000000e+00> : vector<2xf32>
    %200 = vector.multi_reduction <add>, %195, %cst_57 [1] : vector<2x8xf32> to vector<2xf32>
    %201 = vector.shape_cast %200 : vector<2xf32> to vector<2x1xf32>
    %202 = tpu.reciprocal %201 {approx = true} : vector<2x1xf32> -> vector<2x1xf32>
    %203 = vector.broadcast %202 : vector<2x1xf32> to vector<2x32xf32>
    %204 = arith.mulf %199, %203 : vector<2x32xf32>
    %205 = vector.broadcast %15 : vector<1x32xf32> to vector<2x32xf32>
    %206 = arith.mulf %204, %205 : vector<2x32xf32>
    %cst_58 = arith.constant dense<0.000000e+00> : vector<2xf32>
    %207 = vector.multi_reduction <add>, %206, %cst_58 [1] : vector<2x32xf32> to vector<2xf32>
    %208 = vector.shape_cast %207 : vector<2xf32> to vector<2x1xf32>
    %209 = vector.broadcast %208 : vector<2x1xf32> to vector<2x512xf32>
    %210 = vector.broadcast %13 : vector<1x512xf32> to vector<2x512xf32>
    %211 = arith.mulf %209, %210 : vector<2x512xf32>
    %212 = vector.extract_strided_slice %182 {offsets = [0, 0], sizes = [2, 128], strides = [1, 1]} : vector<2x256xbf16> to vector<2x128xbf16>
    %cst_59 = arith.constant dense<0.000000e+00> : vector<2x512xf32>
    %213 = tpu.matmul %212, %14, %cst_59 {dimension_numbers = #tpu.dot_dimension_numbers<[1], [0], [0], [1], [0, 0, 1, 1], [], []>} : vector<2x128xbf16>, vector<128x512xbf16>, vector<2x512xf32> -> vector<2x512xf32>
    %214 = arith.addf %211, %213 : vector<2x512xf32>
    %c3 = arith.constant 3 : index
    %c0_60 = arith.constant 0 : index
    %c0_61 = arith.constant 0 : index
    %215 = vector.load %arg5[%c3, %c0_60, %c0_61] : memref<8x2x512xf32, #tpu.memory_space<vmem>>, vector<1x2x512xf32>
    %216 = vector.shape_cast %215 : vector<1x2x512xf32> to vector<2x512xf32>
    %217 = arith.addf %214, %216 : vector<2x512xf32>
    %218 = vector.extract_strided_slice %217 {offsets = [0, 0], sizes = [2, 384], strides = [1, 1]} : vector<2x512xf32> to vector<2x384xf32>
    %219 = arith.negf %218 : vector<2x384xf32>
    %220 = math.exp %219 : vector<2x384xf32>
    %cst_62 = arith.constant 1.000000e+00 : f32
    %221 = vector.broadcast %cst_62 : f32 to vector<2x384xf32>
    %222 = arith.addf %221, %220 : vector<2x384xf32>
    %223 = arith.divf %221, %222 : vector<2x384xf32>
    %224 = vector.extract_strided_slice %217 {offsets = [0, 384], sizes = [2, 128], strides = [1, 1]} : vector<2x512xf32> to vector<2x128xf32>
    %225 = math.tanh %224 : vector<2x128xf32>
    %226 = vector.extract_strided_slice %223 {offsets = [0, 128], sizes = [2, 128], strides = [1, 1]} : vector<2x384xf32> to vector<2x128xf32>
    %227 = vector.extract_strided_slice %181 {offsets = [0, 128], sizes = [2, 128], strides = [1, 1]} : vector<2x256xf32> to vector<2x128xf32>
    %228 = arith.mulf %226, %227 : vector<2x128xf32>
    %229 = vector.extract_strided_slice %223 {offsets = [0, 0], sizes = [2, 128], strides = [1, 1]} : vector<2x384xf32> to vector<2x128xf32>
    %230 = arith.mulf %229, %225 : vector<2x128xf32>
    %231 = arith.addf %228, %230 : vector<2x128xf32>
    %232 = vector.extract_strided_slice %223 {offsets = [0, 256], sizes = [2, 128], strides = [1, 1]} : vector<2x384xf32> to vector<2x128xf32>
    %233 = math.tanh %231 : vector<2x128xf32>
    %234 = arith.mulf %232, %233 : vector<2x128xf32>
    %235 = tpu.concatenate %234, %231 in 1 : vector<2x128xf32>, vector<2x128xf32> -> vector<2x256xf32>
    %236 = arith.truncf %235 : vector<2x256xf32> to vector<2x256xbf16>
    %cst_63 = arith.constant dense<0.000000e+00> : vector<2x32xf32>
    %237 = tpu.matmul %236, %10, %cst_63 {dimension_numbers = #tpu.dot_dimension_numbers<[1], [0], [0], [1], [0, 0, 1, 1], [], []>} : vector<2x256xbf16>, vector<256x32xbf16>, vector<2x32xf32> -> vector<2x32xf32>
    %238 = vector.shape_cast %237 : vector<2x32xf32> to vector<2x1x32xf32>
    %239 = vector.broadcast %238 : vector<2x1x32xf32> to vector<2x8x32xf32>
    %240 = arith.addf %239, %9 : vector<2x8x32xf32>
    %241 = math.tanh %240 : vector<2x8x32xf32>
    %242 = vector.broadcast %12 : vector<1x1x32xf32> to vector<2x8x32xf32>
    %243 = arith.mulf %241, %242 : vector<2x8x32xf32>
    %cst_64 = arith.constant dense<0.000000e+00> : vector<2x8xf32>
    %244 = vector.multi_reduction <add>, %243, %cst_64 [2] : vector<2x8x32xf32> to vector<2x8xf32>
    %cst_65 = arith.constant dense<0xFF800000> : vector<2xf32>
    %245 = vector.multi_reduction <maximumf>, %244, %cst_65 [1] : vector<2x8xf32> to vector<2xf32>
    %246 = vector.shape_cast %245 : vector<2xf32> to vector<2x1xf32>
    %247 = vector.broadcast %246 : vector<2x1xf32> to vector<2x8xf32>
    %248 = arith.subf %244, %247 : vector<2x8xf32>
    %249 = math.exp %248 : vector<2x8xf32>
    %250 = vector.shape_cast %249 : vector<2x8xf32> to vector<2x8x1xf32>
    %251 = vector.broadcast %250 : vector<2x8x1xf32> to vector<2x8x32xf32>
    %252 = arith.mulf %251, %0 : vector<2x8x32xf32>
    %cst_66 = arith.constant dense<0.000000e+00> : vector<2x32xf32>
    %253 = vector.multi_reduction <add>, %252, %cst_66 [1] : vector<2x8x32xf32> to vector<2x32xf32>
    %cst_67 = arith.constant dense<0.000000e+00> : vector<2xf32>
    %254 = vector.multi_reduction <add>, %249, %cst_67 [1] : vector<2x8xf32> to vector<2xf32>
    %255 = vector.shape_cast %254 : vector<2xf32> to vector<2x1xf32>
    %256 = tpu.reciprocal %255 {approx = true} : vector<2x1xf32> -> vector<2x1xf32>
    %257 = vector.broadcast %256 : vector<2x1xf32> to vector<2x32xf32>
    %258 = arith.mulf %253, %257 : vector<2x32xf32>
    %259 = vector.broadcast %15 : vector<1x32xf32> to vector<2x32xf32>
    %260 = arith.mulf %258, %259 : vector<2x32xf32>
    %cst_68 = arith.constant dense<0.000000e+00> : vector<2xf32>
    %261 = vector.multi_reduction <add>, %260, %cst_68 [1] : vector<2x32xf32> to vector<2xf32>
    %262 = vector.shape_cast %261 : vector<2xf32> to vector<2x1xf32>
    %263 = vector.broadcast %262 : vector<2x1xf32> to vector<2x512xf32>
    %264 = vector.broadcast %13 : vector<1x512xf32> to vector<2x512xf32>
    %265 = arith.mulf %263, %264 : vector<2x512xf32>
    %266 = vector.extract_strided_slice %236 {offsets = [0, 0], sizes = [2, 128], strides = [1, 1]} : vector<2x256xbf16> to vector<2x128xbf16>
    %cst_69 = arith.constant dense<0.000000e+00> : vector<2x512xf32>
    %267 = tpu.matmul %266, %14, %cst_69 {dimension_numbers = #tpu.dot_dimension_numbers<[1], [0], [0], [1], [0, 0, 1, 1], [], []>} : vector<2x128xbf16>, vector<128x512xbf16>, vector<2x512xf32> -> vector<2x512xf32>
    %268 = arith.addf %265, %267 : vector<2x512xf32>
    %c4 = arith.constant 4 : index
    %c0_70 = arith.constant 0 : index
    %c0_71 = arith.constant 0 : index
    %269 = vector.load %arg5[%c4, %c0_70, %c0_71] : memref<8x2x512xf32, #tpu.memory_space<vmem>>, vector<1x2x512xf32>
    %270 = vector.shape_cast %269 : vector<1x2x512xf32> to vector<2x512xf32>
    %271 = arith.addf %268, %270 : vector<2x512xf32>
    %272 = vector.extract_strided_slice %271 {offsets = [0, 0], sizes = [2, 384], strides = [1, 1]} : vector<2x512xf32> to vector<2x384xf32>
    %273 = arith.negf %272 : vector<2x384xf32>
    %274 = math.exp %273 : vector<2x384xf32>
    %cst_72 = arith.constant 1.000000e+00 : f32
    %275 = vector.broadcast %cst_72 : f32 to vector<2x384xf32>
    %276 = arith.addf %275, %274 : vector<2x384xf32>
    %277 = arith.divf %275, %276 : vector<2x384xf32>
    %278 = vector.extract_strided_slice %271 {offsets = [0, 384], sizes = [2, 128], strides = [1, 1]} : vector<2x512xf32> to vector<2x128xf32>
    %279 = math.tanh %278 : vector<2x128xf32>
    %280 = vector.extract_strided_slice %277 {offsets = [0, 128], sizes = [2, 128], strides = [1, 1]} : vector<2x384xf32> to vector<2x128xf32>
    %281 = vector.extract_strided_slice %235 {offsets = [0, 128], sizes = [2, 128], strides = [1, 1]} : vector<2x256xf32> to vector<2x128xf32>
    %282 = arith.mulf %280, %281 : vector<2x128xf32>
    %283 = vector.extract_strided_slice %277 {offsets = [0, 0], sizes = [2, 128], strides = [1, 1]} : vector<2x384xf32> to vector<2x128xf32>
    %284 = arith.mulf %283, %279 : vector<2x128xf32>
    %285 = arith.addf %282, %284 : vector<2x128xf32>
    %286 = vector.extract_strided_slice %277 {offsets = [0, 256], sizes = [2, 128], strides = [1, 1]} : vector<2x384xf32> to vector<2x128xf32>
    %287 = math.tanh %285 : vector<2x128xf32>
    %288 = arith.mulf %286, %287 : vector<2x128xf32>
    %289 = tpu.concatenate %288, %285 in 1 : vector<2x128xf32>, vector<2x128xf32> -> vector<2x256xf32>
    %290 = arith.truncf %289 : vector<2x256xf32> to vector<2x256xbf16>
    %cst_73 = arith.constant dense<0.000000e+00> : vector<2x32xf32>
    %291 = tpu.matmul %290, %10, %cst_73 {dimension_numbers = #tpu.dot_dimension_numbers<[1], [0], [0], [1], [0, 0, 1, 1], [], []>} : vector<2x256xbf16>, vector<256x32xbf16>, vector<2x32xf32> -> vector<2x32xf32>
    %292 = vector.shape_cast %291 : vector<2x32xf32> to vector<2x1x32xf32>
    %293 = vector.broadcast %292 : vector<2x1x32xf32> to vector<2x8x32xf32>
    %294 = arith.addf %293, %9 : vector<2x8x32xf32>
    %295 = math.tanh %294 : vector<2x8x32xf32>
    %296 = vector.broadcast %12 : vector<1x1x32xf32> to vector<2x8x32xf32>
    %297 = arith.mulf %295, %296 : vector<2x8x32xf32>
    %cst_74 = arith.constant dense<0.000000e+00> : vector<2x8xf32>
    %298 = vector.multi_reduction <add>, %297, %cst_74 [2] : vector<2x8x32xf32> to vector<2x8xf32>
    %cst_75 = arith.constant dense<0xFF800000> : vector<2xf32>
    %299 = vector.multi_reduction <maximumf>, %298, %cst_75 [1] : vector<2x8xf32> to vector<2xf32>
    %300 = vector.shape_cast %299 : vector<2xf32> to vector<2x1xf32>
    %301 = vector.broadcast %300 : vector<2x1xf32> to vector<2x8xf32>
    %302 = arith.subf %298, %301 : vector<2x8xf32>
    %303 = math.exp %302 : vector<2x8xf32>
    %304 = vector.shape_cast %303 : vector<2x8xf32> to vector<2x8x1xf32>
    %305 = vector.broadcast %304 : vector<2x8x1xf32> to vector<2x8x32xf32>
    %306 = arith.mulf %305, %0 : vector<2x8x32xf32>
    %cst_76 = arith.constant dense<0.000000e+00> : vector<2x32xf32>
    %307 = vector.multi_reduction <add>, %306, %cst_76 [1] : vector<2x8x32xf32> to vector<2x32xf32>
    %cst_77 = arith.constant dense<0.000000e+00> : vector<2xf32>
    %308 = vector.multi_reduction <add>, %303, %cst_77 [1] : vector<2x8xf32> to vector<2xf32>
    %309 = vector.shape_cast %308 : vector<2xf32> to vector<2x1xf32>
    %310 = tpu.reciprocal %309 {approx = true} : vector<2x1xf32> -> vector<2x1xf32>
    %311 = vector.broadcast %310 : vector<2x1xf32> to vector<2x32xf32>
    %312 = arith.mulf %307, %311 : vector<2x32xf32>
    %313 = vector.broadcast %15 : vector<1x32xf32> to vector<2x32xf32>
    %314 = arith.mulf %312, %313 : vector<2x32xf32>
    %cst_78 = arith.constant dense<0.000000e+00> : vector<2xf32>
    %315 = vector.multi_reduction <add>, %314, %cst_78 [1] : vector<2x32xf32> to vector<2xf32>
    %316 = vector.shape_cast %315 : vector<2xf32> to vector<2x1xf32>
    %317 = vector.broadcast %316 : vector<2x1xf32> to vector<2x512xf32>
    %318 = vector.broadcast %13 : vector<1x512xf32> to vector<2x512xf32>
    %319 = arith.mulf %317, %318 : vector<2x512xf32>
    %320 = vector.extract_strided_slice %290 {offsets = [0, 0], sizes = [2, 128], strides = [1, 1]} : vector<2x256xbf16> to vector<2x128xbf16>
    %cst_79 = arith.constant dense<0.000000e+00> : vector<2x512xf32>
    %321 = tpu.matmul %320, %14, %cst_79 {dimension_numbers = #tpu.dot_dimension_numbers<[1], [0], [0], [1], [0, 0, 1, 1], [], []>} : vector<2x128xbf16>, vector<128x512xbf16>, vector<2x512xf32> -> vector<2x512xf32>
    %322 = arith.addf %319, %321 : vector<2x512xf32>
    %c5 = arith.constant 5 : index
    %c0_80 = arith.constant 0 : index
    %c0_81 = arith.constant 0 : index
    %323 = vector.load %arg5[%c5, %c0_80, %c0_81] : memref<8x2x512xf32, #tpu.memory_space<vmem>>, vector<1x2x512xf32>
    %324 = vector.shape_cast %323 : vector<1x2x512xf32> to vector<2x512xf32>
    %325 = arith.addf %322, %324 : vector<2x512xf32>
    %326 = vector.extract_strided_slice %325 {offsets = [0, 0], sizes = [2, 384], strides = [1, 1]} : vector<2x512xf32> to vector<2x384xf32>
    %327 = arith.negf %326 : vector<2x384xf32>
    %328 = math.exp %327 : vector<2x384xf32>
    %cst_82 = arith.constant 1.000000e+00 : f32
    %329 = vector.broadcast %cst_82 : f32 to vector<2x384xf32>
    %330 = arith.addf %329, %328 : vector<2x384xf32>
    %331 = arith.divf %329, %330 : vector<2x384xf32>
    %332 = vector.extract_strided_slice %325 {offsets = [0, 384], sizes = [2, 128], strides = [1, 1]} : vector<2x512xf32> to vector<2x128xf32>
    %333 = math.tanh %332 : vector<2x128xf32>
    %334 = vector.extract_strided_slice %331 {offsets = [0, 128], sizes = [2, 128], strides = [1, 1]} : vector<2x384xf32> to vector<2x128xf32>
    %335 = vector.extract_strided_slice %289 {offsets = [0, 128], sizes = [2, 128], strides = [1, 1]} : vector<2x256xf32> to vector<2x128xf32>
    %336 = arith.mulf %334, %335 : vector<2x128xf32>
    %337 = vector.extract_strided_slice %331 {offsets = [0, 0], sizes = [2, 128], strides = [1, 1]} : vector<2x384xf32> to vector<2x128xf32>
    %338 = arith.mulf %337, %333 : vector<2x128xf32>
    %339 = arith.addf %336, %338 : vector<2x128xf32>
    %340 = vector.extract_strided_slice %331 {offsets = [0, 256], sizes = [2, 128], strides = [1, 1]} : vector<2x384xf32> to vector<2x128xf32>
    %341 = math.tanh %339 : vector<2x128xf32>
    %342 = arith.mulf %340, %341 : vector<2x128xf32>
    %343 = tpu.concatenate %342, %339 in 1 : vector<2x128xf32>, vector<2x128xf32> -> vector<2x256xf32>
    %344 = arith.truncf %343 : vector<2x256xf32> to vector<2x256xbf16>
    %cst_83 = arith.constant dense<0.000000e+00> : vector<2x32xf32>
    %345 = tpu.matmul %344, %10, %cst_83 {dimension_numbers = #tpu.dot_dimension_numbers<[1], [0], [0], [1], [0, 0, 1, 1], [], []>} : vector<2x256xbf16>, vector<256x32xbf16>, vector<2x32xf32> -> vector<2x32xf32>
    %346 = vector.shape_cast %345 : vector<2x32xf32> to vector<2x1x32xf32>
    %347 = vector.broadcast %346 : vector<2x1x32xf32> to vector<2x8x32xf32>
    %348 = arith.addf %347, %9 : vector<2x8x32xf32>
    %349 = math.tanh %348 : vector<2x8x32xf32>
    %350 = vector.broadcast %12 : vector<1x1x32xf32> to vector<2x8x32xf32>
    %351 = arith.mulf %349, %350 : vector<2x8x32xf32>
    %cst_84 = arith.constant dense<0.000000e+00> : vector<2x8xf32>
    %352 = vector.multi_reduction <add>, %351, %cst_84 [2] : vector<2x8x32xf32> to vector<2x8xf32>
    %cst_85 = arith.constant dense<0xFF800000> : vector<2xf32>
    %353 = vector.multi_reduction <maximumf>, %352, %cst_85 [1] : vector<2x8xf32> to vector<2xf32>
    %354 = vector.shape_cast %353 : vector<2xf32> to vector<2x1xf32>
    %355 = vector.broadcast %354 : vector<2x1xf32> to vector<2x8xf32>
    %356 = arith.subf %352, %355 : vector<2x8xf32>
    %357 = math.exp %356 : vector<2x8xf32>
    %358 = vector.shape_cast %357 : vector<2x8xf32> to vector<2x8x1xf32>
    %359 = vector.broadcast %358 : vector<2x8x1xf32> to vector<2x8x32xf32>
    %360 = arith.mulf %359, %0 : vector<2x8x32xf32>
    %cst_86 = arith.constant dense<0.000000e+00> : vector<2x32xf32>
    %361 = vector.multi_reduction <add>, %360, %cst_86 [1] : vector<2x8x32xf32> to vector<2x32xf32>
    %cst_87 = arith.constant dense<0.000000e+00> : vector<2xf32>
    %362 = vector.multi_reduction <add>, %357, %cst_87 [1] : vector<2x8xf32> to vector<2xf32>
    %363 = vector.shape_cast %362 : vector<2xf32> to vector<2x1xf32>
    %364 = tpu.reciprocal %363 {approx = true} : vector<2x1xf32> -> vector<2x1xf32>
    %365 = vector.broadcast %364 : vector<2x1xf32> to vector<2x32xf32>
    %366 = arith.mulf %361, %365 : vector<2x32xf32>
    %367 = vector.broadcast %15 : vector<1x32xf32> to vector<2x32xf32>
    %368 = arith.mulf %366, %367 : vector<2x32xf32>
    %cst_88 = arith.constant dense<0.000000e+00> : vector<2xf32>
    %369 = vector.multi_reduction <add>, %368, %cst_88 [1] : vector<2x32xf32> to vector<2xf32>
    %370 = vector.shape_cast %369 : vector<2xf32> to vector<2x1xf32>
    %371 = vector.broadcast %370 : vector<2x1xf32> to vector<2x512xf32>
    %372 = vector.broadcast %13 : vector<1x512xf32> to vector<2x512xf32>
    %373 = arith.mulf %371, %372 : vector<2x512xf32>
    %374 = vector.extract_strided_slice %344 {offsets = [0, 0], sizes = [2, 128], strides = [1, 1]} : vector<2x256xbf16> to vector<2x128xbf16>
    %cst_89 = arith.constant dense<0.000000e+00> : vector<2x512xf32>
    %375 = tpu.matmul %374, %14, %cst_89 {dimension_numbers = #tpu.dot_dimension_numbers<[1], [0], [0], [1], [0, 0, 1, 1], [], []>} : vector<2x128xbf16>, vector<128x512xbf16>, vector<2x512xf32> -> vector<2x512xf32>
    %376 = arith.addf %373, %375 : vector<2x512xf32>
    %c6 = arith.constant 6 : index
    %c0_90 = arith.constant 0 : index
    %c0_91 = arith.constant 0 : index
    %377 = vector.load %arg5[%c6, %c0_90, %c0_91] : memref<8x2x512xf32, #tpu.memory_space<vmem>>, vector<1x2x512xf32>
    %378 = vector.shape_cast %377 : vector<1x2x512xf32> to vector<2x512xf32>
    %379 = arith.addf %376, %378 : vector<2x512xf32>
    %380 = vector.extract_strided_slice %379 {offsets = [0, 0], sizes = [2, 384], strides = [1, 1]} : vector<2x512xf32> to vector<2x384xf32>
    %381 = arith.negf %380 : vector<2x384xf32>
    %382 = math.exp %381 : vector<2x384xf32>
    %cst_92 = arith.constant 1.000000e+00 : f32
    %383 = vector.broadcast %cst_92 : f32 to vector<2x384xf32>
    %384 = arith.addf %383, %382 : vector<2x384xf32>
    %385 = arith.divf %383, %384 : vector<2x384xf32>
    %386 = vector.extract_strided_slice %379 {offsets = [0, 384], sizes = [2, 128], strides = [1, 1]} : vector<2x512xf32> to vector<2x128xf32>
    %387 = math.tanh %386 : vector<2x128xf32>
    %388 = vector.extract_strided_slice %385 {offsets = [0, 128], sizes = [2, 128], strides = [1, 1]} : vector<2x384xf32> to vector<2x128xf32>
    %389 = vector.extract_strided_slice %343 {offsets = [0, 128], sizes = [2, 128], strides = [1, 1]} : vector<2x256xf32> to vector<2x128xf32>
    %390 = arith.mulf %388, %389 : vector<2x128xf32>
    %391 = vector.extract_strided_slice %385 {offsets = [0, 0], sizes = [2, 128], strides = [1, 1]} : vector<2x384xf32> to vector<2x128xf32>
    %392 = arith.mulf %391, %387 : vector<2x128xf32>
    %393 = arith.addf %390, %392 : vector<2x128xf32>
    %394 = vector.extract_strided_slice %385 {offsets = [0, 256], sizes = [2, 128], strides = [1, 1]} : vector<2x384xf32> to vector<2x128xf32>
    %395 = math.tanh %393 : vector<2x128xf32>
    %396 = arith.mulf %394, %395 : vector<2x128xf32>
    %397 = tpu.concatenate %396, %393 in 1 : vector<2x128xf32>, vector<2x128xf32> -> vector<2x256xf32>
    %398 = arith.truncf %397 : vector<2x256xf32> to vector<2x256xbf16>
    %cst_93 = arith.constant dense<0.000000e+00> : vector<2x32xf32>
    %399 = tpu.matmul %398, %10, %cst_93 {dimension_numbers = #tpu.dot_dimension_numbers<[1], [0], [0], [1], [0, 0, 1, 1], [], []>} : vector<2x256xbf16>, vector<256x32xbf16>, vector<2x32xf32> -> vector<2x32xf32>
    %400 = vector.shape_cast %399 : vector<2x32xf32> to vector<2x1x32xf32>
    %401 = vector.broadcast %400 : vector<2x1x32xf32> to vector<2x8x32xf32>
    %402 = arith.addf %401, %9 : vector<2x8x32xf32>
    %403 = math.tanh %402 : vector<2x8x32xf32>
    %404 = vector.broadcast %12 : vector<1x1x32xf32> to vector<2x8x32xf32>
    %405 = arith.mulf %403, %404 : vector<2x8x32xf32>
    %cst_94 = arith.constant dense<0.000000e+00> : vector<2x8xf32>
    %406 = vector.multi_reduction <add>, %405, %cst_94 [2] : vector<2x8x32xf32> to vector<2x8xf32>
    %cst_95 = arith.constant dense<0xFF800000> : vector<2xf32>
    %407 = vector.multi_reduction <maximumf>, %406, %cst_95 [1] : vector<2x8xf32> to vector<2xf32>
    %408 = vector.shape_cast %407 : vector<2xf32> to vector<2x1xf32>
    %409 = vector.broadcast %408 : vector<2x1xf32> to vector<2x8xf32>
    %410 = arith.subf %406, %409 : vector<2x8xf32>
    %411 = math.exp %410 : vector<2x8xf32>
    %412 = vector.shape_cast %411 : vector<2x8xf32> to vector<2x8x1xf32>
    %413 = vector.broadcast %412 : vector<2x8x1xf32> to vector<2x8x32xf32>
    %414 = arith.mulf %413, %0 : vector<2x8x32xf32>
    %cst_96 = arith.constant dense<0.000000e+00> : vector<2x32xf32>
    %415 = vector.multi_reduction <add>, %414, %cst_96 [1] : vector<2x8x32xf32> to vector<2x32xf32>
    %cst_97 = arith.constant dense<0.000000e+00> : vector<2xf32>
    %416 = vector.multi_reduction <add>, %411, %cst_97 [1] : vector<2x8xf32> to vector<2xf32>
    %417 = vector.shape_cast %416 : vector<2xf32> to vector<2x1xf32>
    %418 = tpu.reciprocal %417 {approx = true} : vector<2x1xf32> -> vector<2x1xf32>
    %419 = vector.broadcast %418 : vector<2x1xf32> to vector<2x32xf32>
    %420 = arith.mulf %415, %419 : vector<2x32xf32>
    %421 = vector.broadcast %15 : vector<1x32xf32> to vector<2x32xf32>
    %422 = arith.mulf %420, %421 : vector<2x32xf32>
    %cst_98 = arith.constant dense<0.000000e+00> : vector<2xf32>
    %423 = vector.multi_reduction <add>, %422, %cst_98 [1] : vector<2x32xf32> to vector<2xf32>
    %424 = vector.shape_cast %423 : vector<2xf32> to vector<2x1xf32>
    %425 = vector.broadcast %424 : vector<2x1xf32> to vector<2x512xf32>
    %426 = vector.broadcast %13 : vector<1x512xf32> to vector<2x512xf32>
    %427 = arith.mulf %425, %426 : vector<2x512xf32>
    %428 = vector.extract_strided_slice %398 {offsets = [0, 0], sizes = [2, 128], strides = [1, 1]} : vector<2x256xbf16> to vector<2x128xbf16>
    %cst_99 = arith.constant dense<0.000000e+00> : vector<2x512xf32>
    %429 = tpu.matmul %428, %14, %cst_99 {dimension_numbers = #tpu.dot_dimension_numbers<[1], [0], [0], [1], [0, 0, 1, 1], [], []>} : vector<2x128xbf16>, vector<128x512xbf16>, vector<2x512xf32> -> vector<2x512xf32>
    %430 = arith.addf %427, %429 : vector<2x512xf32>
    %c7 = arith.constant 7 : index
    %c0_100 = arith.constant 0 : index
    %c0_101 = arith.constant 0 : index
    %431 = vector.load %arg5[%c7, %c0_100, %c0_101] : memref<8x2x512xf32, #tpu.memory_space<vmem>>, vector<1x2x512xf32>
    %432 = vector.shape_cast %431 : vector<1x2x512xf32> to vector<2x512xf32>
    %433 = arith.addf %430, %432 : vector<2x512xf32>
    %434 = vector.extract_strided_slice %433 {offsets = [0, 0], sizes = [2, 384], strides = [1, 1]} : vector<2x512xf32> to vector<2x384xf32>
    %435 = arith.negf %434 : vector<2x384xf32>
    %436 = math.exp %435 : vector<2x384xf32>
    %cst_102 = arith.constant 1.000000e+00 : f32
    %437 = vector.broadcast %cst_102 : f32 to vector<2x384xf32>
    %438 = arith.addf %437, %436 : vector<2x384xf32>
    %439 = arith.divf %437, %438 : vector<2x384xf32>
    %440 = vector.extract_strided_slice %433 {offsets = [0, 384], sizes = [2, 128], strides = [1, 1]} : vector<2x512xf32> to vector<2x128xf32>
    %441 = math.tanh %440 : vector<2x128xf32>
    %442 = vector.extract_strided_slice %439 {offsets = [0, 128], sizes = [2, 128], strides = [1, 1]} : vector<2x384xf32> to vector<2x128xf32>
    %443 = vector.extract_strided_slice %397 {offsets = [0, 128], sizes = [2, 128], strides = [1, 1]} : vector<2x256xf32> to vector<2x128xf32>
    %444 = arith.mulf %442, %443 : vector<2x128xf32>
    %445 = vector.extract_strided_slice %439 {offsets = [0, 0], sizes = [2, 128], strides = [1, 1]} : vector<2x384xf32> to vector<2x128xf32>
    %446 = arith.mulf %445, %441 : vector<2x128xf32>
    %447 = arith.addf %444, %446 : vector<2x128xf32>
    %448 = vector.extract_strided_slice %439 {offsets = [0, 256], sizes = [2, 128], strides = [1, 1]} : vector<2x384xf32> to vector<2x128xf32>
    %449 = math.tanh %447 : vector<2x128xf32>
    %450 = arith.mulf %448, %449 : vector<2x128xf32>
    %451 = tpu.concatenate %450, %447 in 1 : vector<2x128xf32>, vector<2x128xf32> -> vector<2x256xf32>
    %452 = vector.extract_strided_slice %451 {offsets = [0, 0], sizes = [2, 128], strides = [1, 1]} : vector<2x256xf32> to vector<2x128xf32>
    %453 = vector.broadcast %16 : vector<1x128xf32> to vector<2x128xf32>
    %454 = arith.mulf %452, %453 : vector<2x128xf32>
    %cst_103 = arith.constant dense<0.000000e+00> : vector<2xf32>
    %455 = vector.multi_reduction <add>, %454, %cst_103 [1] : vector<2x128xf32> to vector<2xf32>
    %456 = vector.shape_cast %455 : vector<2xf32> to vector<2x1xf32>
    %457 = vector.broadcast %17 : vector<1x32xf32> to vector<2x32xf32>
    %458 = arith.mulf %420, %457 : vector<2x32xf32>
    %cst_104 = arith.constant dense<0.000000e+00> : vector<2xf32>
    %459 = vector.multi_reduction <add>, %458, %cst_104 [1] : vector<2x32xf32> to vector<2xf32>
    %460 = vector.shape_cast %459 : vector<2xf32> to vector<2x1xf32>
    %461 = arith.addf %456, %460 : vector<2x1xf32>
    %462 = vector.broadcast %18 : f32 to vector<2x1xf32>
    %463 = arith.addf %461, %462 : vector<2x1xf32>
    %c0_105 = arith.constant 0 : index
    %c0_106 = arith.constant 0 : index
    %464 = vector.load %arg12[%c0_105, %c0_106] : memref<2x1xf32, #tpu.memory_space<vmem>>, vector<2x1xf32>
    tpu.vector_store %arg12[%c0_105, %c0_106], %463 {strides = array<i32>} : memref<2x1xf32, #tpu.memory_space<vmem>>, vector<2x1xf32>,
    return
  }
}

</mosaic_0001>

<llo_original>
// kernel: decoder_forward.1
$region0: #{decoder_forward.1}
  #allocation0 [shape = 'u32[]', space=smem, size = 0x4, offset = 0x4, fixed_abs, tag = 'smem constant byte address 0x4 - core index']
  #allocation1 [shape = 'u32[144,128]{1,0:T(1,128)}', space=vmem, size = 0x12000, scoped, tag = 'internal scratch']
  #allocation2 [shape = 'f32[1]{0:T(128)S(6)}', space=smem, size = 0x200, scoped, tag = 'scoped memory for decoder_forward.1']
  %s0 = inlined_call_operand.vmem [shape: f32[2,8,32], index: 0, kind: input, shape index: {}]
  %s1 = inlined_call_operand.vmem [shape: bf16[32,32], index: 1, kind: input, shape index: {}]
  %s2 = inlined_call_operand.vmem [shape: f32[1,32], index: 2, kind: input, shape index: {}]
  %s3 = inlined_call_operand.vmem [shape: bf16[256,32], index: 3, kind: input, shape index: {}]
  %s4 = inlined_call_operand.vmem [shape: f32[1,32], index: 4, kind: input, shape index: {}]
  %s5 = inlined_call_operand.vmem [shape: f32[8,2,512], index: 5, kind: input, shape index: {}]
  %s6 = inlined_call_operand.vmem [shape: f32[1,512], index: 6, kind: input, shape index: {}]
  %s7 = inlined_call_operand.vmem [shape: bf16[128,512], index: 7, kind: input, shape index: {}]
  %s8 = inlined_call_operand.vmem [shape: f32[1,32], index: 8, kind: input, shape index: {}]
  %s9 = inlined_call_operand.vmem [shape: f32[1,128], index: 9, kind: input, shape index: {}]
  %s10 = inlined_call_operand.vmem [shape: f32[1,32], index: 10, kind: input, shape index: {}]
  %s11 = inlined_call_operand.<no memory space> [shape: f32[1], index: 11, kind: input, shape index: {}]
  %s12 = inlined_call_operand.vmem [shape: f32[2,1], index: 12, kind: output, shape index: {}]
  %s13 = sld [smem:[#allocation0]]
  $region58: #{decoder_forward.1} parent=0
    _
  %s15 = ssub.s32 1, %s13
  %s16 = scalar_select 0, %s15, %s13
  %17 = sst [smem:[#allocation2]] %s11
  // Predicated region
  $region2: #{decoder_forward.1} parent=0 // pred_check
    _
  $region3: #{decoder_forward.1} parent=0 // pred_check_branch
    %19 = sbr.rel (0) target = $region5
  $region4: #{decoder_forward.1} parent=0 // pred_region
    _
  $region5: #{decoder_forward.1} parent=0 // pred_fallthru
    _
  // Predicated region
  $region6: #{decoder_forward.1} parent=0 // pred_check
    _
  $region7: #{decoder_forward.1} parent=0 // pred_check_branch
    %21 = sbr.rel (0) target = $region9
  $region8: #{decoder_forward.1} parent=0 // pred_region
    _
  $region9: #{decoder_forward.1} parent=0 // pred_fallthru
    _
  // Predicated region
  $region10: #{decoder_forward.1} parent=0 // pred_check
    _
  $region11: #{decoder_forward.1} parent=0 // pred_check_branch
    %23 = sbr.rel (0) target = $region13
  $region12: #{decoder_forward.1} parent=0 // pred_region
    _
  $region13: #{decoder_forward.1} parent=0 // pred_fallthru
    _
  // Predicated region
  $region14: #{decoder_forward.1} parent=0 // pred_check
    _
  $region15: #{decoder_forward.1} parent=0 // pred_check_branch
    %25 = sbr.rel (0) target = $region17
  $region16: #{decoder_forward.1} parent=0 // pred_region
    _
  $region17: #{decoder_forward.1} parent=0 // pred_fallthru
    _
  // Predicated region
  $region18: #{decoder_forward.1} parent=0 // pred_check
    _
  $region19: #{decoder_forward.1} parent=0 // pred_check_branch
    %27 = sbr.rel (0) target = $region21
  $region20: #{decoder_forward.1} parent=0 // pred_region
    _
  $region21: #{decoder_forward.1} parent=0 // pred_fallthru
    _
  // Predicated region
  $region22: #{decoder_forward.1} parent=0 // pred_check
    _
  $region23: #{decoder_forward.1} parent=0 // pred_check_branch
    %29 = sbr.rel (0) target = $region25
  $region24: #{decoder_forward.1} parent=0 // pred_region
    _
  $region25: #{decoder_forward.1} parent=0 // pred_fallthru
    _
  // Predicated region
  $region26: #{decoder_forward.1} parent=0 // pred_check
    _
  $region27: #{decoder_forward.1} parent=0 // pred_check_branch
    %31 = sbr.rel (0) target = $region29
  $region28: #{decoder_forward.1} parent=0 // pred_region
    _
  $region29: #{decoder_forward.1} parent=0 // pred_fallthru
    _
  // Predicated region
  $region30: #{decoder_forward.1} parent=0 // pred_check
    _
  $region31: #{decoder_forward.1} parent=0 // pred_check_branch
    %33 = sbr.rel (0) target = $region33
  $region32: #{decoder_forward.1} parent=0 // pred_region
    _
  $region33: #{decoder_forward.1} parent=0 // pred_fallthru
    _
  // Predicated region
  $region34: #{decoder_forward.1} parent=0 // pred_check
    _
  $region35: #{decoder_forward.1} parent=0 // pred_check_branch
    %35 = sbr.rel (0) target = $region37
  $region36: #{decoder_forward.1} parent=0 // pred_region
    _
  $region37: #{decoder_forward.1} parent=0 // pred_fallthru
    _
  // Predicated region
  $region38: #{decoder_forward.1} parent=0 // pred_check
    _
  $region39: #{decoder_forward.1} parent=0 // pred_check_branch
    %37 = sbr.rel (0) target = $region41
  $region40: #{decoder_forward.1} parent=0 // pred_region
    _
  $region41: #{decoder_forward.1} parent=0 // pred_fallthru
    _
  // Predicated region
  $region42: #{decoder_forward.1} parent=0 // pred_check
    _
  $region43: #{decoder_forward.1} parent=0 // pred_check_branch
    %39 = sbr.rel (0) target = $region45
  $region44: #{decoder_forward.1} parent=0 // pred_region
    _
  $region45: #{decoder_forward.1} parent=0 // pred_fallthru
    _
  // Predicated region
  $region46: #{decoder_forward.1} parent=0 // pred_check
    _
  $region47: #{decoder_forward.1} parent=0 // pred_check_branch
    %41 = sbr.rel (0) target = $region49
  $region48: #{decoder_forward.1} parent=0 // pred_region
    _
  $region49: #{decoder_forward.1} parent=0 // pred_fallthru
    _
  %v43 = vld [vmem:[%s0] sm:$0xff]
  %v44 = vld [vmem:[%s0 + $0x8] sm:$0xff]
  %v45 = vpack.c.bf16 %v43, %v43
  %v46 = vpack.c.bf16 %v44, %v44
  %v47 = vld [vmem:[%s1] sm:$0xf]
  %v48 = vld [vmem:[%s1 + $0x4] sm:$0xf]
  %v49 = vld [vmem:[%s1 + $0x8] sm:$0xf]
  %v50 = vld [vmem:[%s1 + $0xc] sm:$0xf]
  %v51 = vld [vmem:[%s2] sm:$0x1]
  %v53 = vlaneseq
  %v54 = vshrl.u32 %v53, 7
  %v55 = vsub.s32 0, %v54
  %v56 = vrot.slane %v51, %v55
  %v62 = vunpack.c.l.b16 %v47
  %v63 = vunpack.c.l.b16 %v48
  %v64 = vunpack.c.l.b16 %v49
  %v65 = vunpack.c.l.b16 %v50
  %v66 = vpack.c.b16 %v63, %v62
  %v67 = vpack.c.b16 %v65, %v64
  %vm70 = vcmask 261120
  %v72 = vsel %vm70, %v45, 0
  %74 = vmatprep.subr.bf16.mxu0 0
  %75 = vmatpush1.bf16.msra.mxu0 %v66
  %76 = vmatprep.subr.bf16.mxu0 0
  %77 = vmatpush1.bf16.msra.mxu0 %v67
  %78 = vmatprep.subr.bf16.mxu0 0
  %79 = vmatpush1.bf16.msra.mxu0 0
  %80 = vmatprep.subr.bf16.mxu0 0
  %81 = vmatpush1.bf16.msra.mxu0 0
  %82 = vmatprep.subr.bf16.mxu0 0
  %83 = vmatpush1.bf16.msra.mxu0 0
  %84 = vmatprep.subr.bf16.mxu0 0
  %85 = vmatpush1.bf16.msra.mxu0 0
  %86 = vmatprep.subr.bf16.mxu0 0
  %87 = vmatpush1.bf16.msra.mxu0 0
  %88 = vmatprep.subr.bf16.mxu0 0
  %89 = vmatpush1.bf16.msra.mxu0 0
  %90 = vmatprep.subr.bf16.mxu0 0
  %91 = vmatpush1.bf16.msra.mxu0 0
  %92 = vmatprep.subr.bf16.mxu0 0
  %93 = vmatpush1.bf16.msra.mxu0 0
  %94 = vmatprep.subr.bf16.mxu0 0
  %95 = vmatpush1.bf16.msra.mxu0 0
  %96 = vmatprep.subr.bf16.mxu0 0
  %97 = vmatpush1.bf16.msra.mxu0 0
  %98 = vmatprep.subr.bf16.mxu0 0
  %99 = vmatpush1.bf16.msra.mxu0 0
  %100 = vmatprep.subr.bf16.mxu0 0
  %101 = vmatpush1.bf16.msra.mxu0 0
  %102 = vmatprep.subr.bf16.mxu0 0
  %103 = vmatpush1.bf16.msra.mxu0 0
  %104 = vmatprep.subr.bf16.mxu0 0
  %105 = vmatpush1.bf16.msra.mxu0 0
  %106 = vmatprep.mubr.bf16.mxu0 0
  %107 = vmatmul.mubr.bf16.gmra.mrb[0].mxu0 %v72
  %v108 = vpop.f32.mrb[0].mxu0
  %v109 = vadd.f32 %v56, %v108
  %v110 = vpop.f32.mrb[0].mxu0
  %v111 = vpop.f32.mrb[0].mxu0
  %v112 = vpop.f32.mrb[0].mxu0
  %113 = vdwg.mxu0
  %v115 = vsel %vm70, %v46, 0
  %117 = vmatprep.subr.bf16.mxu0 0
  %118 = vmatpush1.bf16.msra.mxu0 %v66
  %119 = vmatprep.subr.bf16.mxu0 0
  %120 = vmatpush1.bf16.msra.mxu0 %v67
  %121 = vmatprep.subr.bf16.mxu0 0
  %122 = vmatpush1.bf16.msra.mxu0 0
  %123 = vmatprep.subr.bf16.mxu0 0
  %124 = vmatpush1.bf16.msra.mxu0 0
  %125 = vmatprep.subr.bf16.mxu0 0
  %126 = vmatpush1.bf16.msra.mxu0 0
  %127 = vmatprep.subr.bf16.mxu0 0
  %128 = vmatpush1.bf16.msra.mxu0 0
  %129 = vmatprep.subr.bf16.mxu0 0
  %130 = vmatpush1.bf16.msra.mxu0 0
  %131 = vmatprep.subr.bf16.mxu0 0
  %132 = vmatpush1.bf16.msra.mxu0 0
  %133 = vmatprep.subr.bf16.mxu0 0
  %134 = vmatpush1.bf16.msra.mxu0 0
  %135 = vmatprep.subr.bf16.mxu0 0
  %136 = vmatpush1.bf16.msra.mxu0 0
  %137 = vmatprep.subr.bf16.mxu0 0
  %138 = vmatpush1.bf16.msra.mxu0 0
  %139 = vmatprep.subr.bf16.mxu0 0
  %140 = vmatpush1.bf16.msra.mxu0 0
  %141 = vmatprep.subr.bf16.mxu0 0
  %142 = vmatpush1.bf16.msra.mxu0 0
  %143 = vmatprep.subr.bf16.mxu0 0
  %144 = vmatpush1.bf16.msra.mxu0 0
  %145 = vmatprep.subr.bf16.mxu0 0
  %146 = vmatpush1.bf16.msra.mxu0 0
  %147 = vmatprep.subr.bf16.mxu0 0
  %148 = vmatpush1.bf16.msra.mxu0 0
  %149 = vmatprep.mubr.bf16.mxu0 0
  %150 = vmatmul.mubr.bf16.gmra.mrb[0].mxu0 %v115
  %v151 = vpop.f32.mrb[0].mxu0
  %v152 = vadd.f32 %v56, %v151
  %v153 = vpop.f32.mrb[0].mxu0
  %v154 = vpop.f32.mrb[0].mxu0
  %v155 = vpop.f32.mrb[0].mxu0
  %156 = vdwg.mxu0
  %v157 = vld [vmem:[%s3] sm:$0xf]
  %v158 = vld [vmem:[%s3 + $0x4] sm:$0xf]
  %v159 = vld [vmem:[%s3 + $0x8] sm:$0xf]
  %v160 = vld [vmem:[%s3 + $0xc] sm:$0xf]
  %v161 = vld [vmem:[%s3 + $0x10] sm:$0xf]
  %v162 = vld [vmem:[%s3 + $0x14] sm:$0xf]
  %v163 = vld [vmem:[%s3 + $0x18] sm:$0xf]
  %v164 = vld [vmem:[%s3 + $0x1c] sm:$0xf]
  %v165 = vld [vmem:[%s3 + $0x20] sm:$0xf]
  %v166 = vld [vmem:[%s3 + $0x24] sm:$0xf]
  %v167 = vld [vmem:[%s3 + $0x28] sm:$0xf]
  %v168 = vld [vmem:[%s3 + $0x2c] sm:$0xf]
  %v169 = vld [vmem:[%s3 + $0x30] sm:$0xf]
  %v170 = vld [vmem:[%s3 + $0x34] sm:$0xf]
  %v171 = vld [vmem:[%s3 + $0x38] sm:$0xf]
  %v172 = vld [vmem:[%s3 + $0x3c] sm:$0xf]
  %v173 = vld [vmem:[%s3 + $0x40] sm:$0xf]
  %v174 = vld [vmem:[%s3 + $0x44] sm:$0xf]
  %v175 = vld [vmem:[%s3 + $0x48] sm:$0xf]
  %v176 = vld [vmem:[%s3 + $0x4c] sm:$0xf]
  %v177 = vld [vmem:[%s3 + $0x50] sm:$0xf]
  %v178 = vld [vmem:[%s3 + $0x54] sm:$0xf]
  %v179 = vld [vmem:[%s3 + $0x58] sm:$0xf]
  %v180 = vld [vmem:[%s3 + $0x5c] sm:$0xf]
  %v181 = vld [vmem:[%s3 + $0x60] sm:$0xf]
  %v182 = vld [vmem:[%s3 + $0x64] sm:$0xf]
  %v183 = vld [vmem:[%s3 + $0x68] sm:$0xf]
  %v184 = vld [vmem:[%s3 + $0x6c] sm:$0xf]
  %v185 = vld [vmem:[%s3 + $0x70] sm:$0xf]
  %v186 = vld [vmem:[%s3 + $0x74] sm:$0xf]
  %v187 = vld [vmem:[%s3 + $0x78] sm:$0xf]
  %v188 = vld [vmem:[%s3 + $0x7c] sm:$0xf]
  %v189 = vld [vmem:[%s4] sm:$0x1]
  %v190 = vld [vmem:[%s6] sm:$0xf]
  %v191 = vld [vmem:[%s7] sm:$0xff]
  %v192 = vld [vmem:[%s7 + $0x8] sm:$0xff]
  %v193 = vld [vmem:[%s7 + $0x10] sm:$0xff]
  %v194 = vld [vmem:[%s7 + $0x18] sm:$0xff]
  %v195 = vld [vmem:[%s7 + $0x20] sm:$0xff]
  %v196 = vld [vmem:[%s7 + $0x28] sm:$0xff]
  %v197 = vld [vmem:[%s7 + $0x30] sm:$0xff]
  %v198 = vld [vmem:[%s7 + $0x38] sm:$0xff]
  %v199 = vld [vmem:[%s7 + $0x40] sm:$0xff]
  %v200 = vld [vmem:[%s7 + $0x48] sm:$0xff]
  %v201 = vld [vmem:[%s7 + $0x50] sm:$0xff]
  %v202 = vld [vmem:[%s7 + $0x58] sm:$0xff]
  %v203 = vld [vmem:[%s7 + $0x60] sm:$0xff]
  %v204 = vld [vmem:[%s7 + $0x68] sm:$0xff]
  %v205 = vld [vmem:[%s7 + $0x70] sm:$0xff]
  %v206 = vld [vmem:[%s7 + $0x78] sm:$0xff]
  %v207 = vld [vmem:[%s7 + $0x80] sm:$0xff]
  %v208 = vld [vmem:[%s7 + $0x88] sm:$0xff]
  %v209 = vld [vmem:[%s7 + $0x90] sm:$0xff]
  %v210 = vld [vmem:[%s7 + $0x98] sm:$0xff]
  %v211 = vld [vmem:[%s7 + $0xa0] sm:$0xff]
  %v212 = vld [vmem:[%s7 + $0xa8] sm:$0xff]
  %v213 = vld [vmem:[%s7 + $0xb0] sm:$0xff]
  %v214 = vld [vmem:[%s7 + $0xb8] sm:$0xff]
  %v215 = vld [vmem:[%s7 + $0xc0] sm:$0xff]
  %v216 = vld [vmem:[%s7 + $0xc8] sm:$0xff]
  %v217 = vld [vmem:[%s7 + $0xd0] sm:$0xff]
  %v218 = vld [vmem:[%s7 + $0xd8] sm:$0xff]
  %v219 = vld [vmem:[%s7 + $0xe0] sm:$0xff]
  %v220 = vld [vmem:[%s7 + $0xe8] sm:$0xff]
  %v221 = vld [vmem:[%s7 + $0xf0] sm:$0xff]
  %v222 = vld [vmem:[%s7 + $0xf8] sm:$0xff]
  %v223 = vld [vmem:[%s8] sm:$0x1]
  %v224 = vld [vmem:[%s9] sm:$0x1]
  %v225 = vld [vmem:[%s10] sm:$0x1]
  %s226 = sld [smem:[#allocation2]]
  %v259 = vunpack.c.l.b16 %v157
  %v260 = vunpack.c.l.b16 %v158
  %v261 = vunpack.c.l.b16 %v159
  %v262 = vunpack.c.l.b16 %v160
  %v263 = vunpack.c.l.b16 %v161
  %v264 = vunpack.c.l.b16 %v162
  %v265 = vunpack.c.l.b16 %v163
  %v266 = vunpack.c.l.b16 %v164
  %v267 = vunpack.c.l.b16 %v165
  %v268 = vunpack.c.l.b16 %v166
  %v269 = vunpack.c.l.b16 %v167
  %v270 = vunpack.c.l.b16 %v168
  %v271 = vunpack.c.l.b16 %v169
  %v272 = vunpack.c.l.b16 %v170
  %v273 = vunpack.c.l.b16 %v171
  %v274 = vunpack.c.l.b16 %v172
  %v275 = vunpack.c.l.b16 %v173
  %v276 = vunpack.c.l.b16 %v174
  %v277 = vunpack.c.l.b16 %v175
  %v278 = vunpack.c.l.b16 %v176
  %v279 = vunpack.c.l.b16 %v177
  %v280 = vunpack.c.l.b16 %v178
  %v281 = vunpack.c.l.b16 %v179
  %v282 = vunpack.c.l.b16 %v180
  %v283 = vunpack.c.l.b16 %v181
  %v284 = vunpack.c.l.b16 %v182
  %v285 = vunpack.c.l.b16 %v183
  %v286 = vunpack.c.l.b16 %v184
  %v287 = vunpack.c.l.b16 %v185
  %v288 = vunpack.c.l.b16 %v186
  %v289 = vunpack.c.l.b16 %v187
  %v290 = vunpack.c.l.b16 %v188
  %v291 = vpack.c.b16 %v260, %v259
  %v292 = vpack.c.b16 %v262, %v261
  %v293 = vpack.c.b16 %v264, %v263
  %v294 = vpack.c.b16 %v266, %v265
  %v295 = vpack.c.b16 %v268, %v267
  %v296 = vpack.c.b16 %v270, %v269
  %v297 = vpack.c.b16 %v272, %v271
  %v298 = vpack.c.b16 %v274, %v273
  %v299 = vpack.c.b16 %v276, %v275
  %v300 = vpack.c.b16 %v278, %v277
  %v301 = vpack.c.b16 %v280, %v279
  %v302 = vpack.c.b16 %v282, %v281
  %v303 = vpack.c.b16 %v284, %v283
  %v304 = vpack.c.b16 %v286, %v285
  %v305 = vpack.c.b16 %v288, %v287
  %v306 = vpack.c.b16 %v290, %v289
  %323 = vmatprep.subr.bf16.mxu0 0
  %324 = vmatpush1.bf16.msra.mxu0 %v291
  %325 = vmatprep.subr.bf16.mxu0 0
  %326 = vmatpush1.bf16.msra.mxu0 %v292
  %327 = vmatprep.subr.bf16.mxu0 0
  %328 = vmatpush1.bf16.msra.mxu0 %v293
  %329 = vmatprep.subr.bf16.mxu0 0
  %330 = vmatpush1.bf16.msra.mxu0 %v294
  %331 = vmatprep.subr.bf16.mxu0 0
  %332 = vmatpush1.bf16.msra.mxu0 %v295
  %333 = vmatprep.subr.bf16.mxu0 0
  %334 = vmatpush1.bf16.msra.mxu0 %v296
  %335 = vmatprep.subr.bf16.mxu0 0
  %336 = vmatpush1.bf16.msra.mxu0 %v297
  %337 = vmatprep.subr.bf16.mxu0 0
  %338 = vmatpush1.bf16.msra.mxu0 %v298
  %339 = vmatprep.subr.bf16.mxu0 0
  %340 = vmatpush1.bf16.msra.mxu0 %v299
  %341 = vmatprep.subr.bf16.mxu0 0
  %342 = vmatpush1.bf16.msra.mxu0 %v300
  %343 = vmatprep.subr.bf16.mxu0 0
  %344 = vmatpush1.bf16.msra.mxu0 %v301
  %345 = vmatprep.subr.bf16.mxu0 0
  %346 = vmatpush1.bf16.msra.mxu0 %v302
  %347 = vmatprep.subr.bf16.mxu0 0
  %348 = vmatpush1.bf16.msra.mxu0 %v303
  %349 = vmatprep.subr.bf16.mxu0 0
  %350 = vmatpush1.bf16.msra.mxu0 %v304
  %351 = vmatprep.subr.bf16.mxu0 0
  %352 = vmatpush1.bf16.msra.mxu0 %v305
  %353 = vmatprep.subr.bf16.mxu0 0
  %354 = vmatpush1.bf16.msra.mxu0 %v306
  %355 = vmatprep.mubr.bf16.mxu0 0
  %356 = vmatmul.mubr.bf16.gmra.mrb[0].mxu0 0
  %v357 = vpop.f32.mrb[0].mxu0
  %v358 = vadd.f32 0.0, %v357
  %v359 = vpop.f32.mrb[0].mxu0
  %v360 = vpop.f32.mrb[0].mxu0
  %v361 = vpop.f32.mrb[0].mxu0
  %362 = vdwg.mxu0
  %v365 = vunpack.c.l.s4 1966171168
  %v366 = vunpack.c.0.s8 %v365
  %v367 = vlaneseq
  %v368 = vshrl.u32 %v367, 7
  %v369 = vsub.s32 %v366, %v368
  %v370 = vrot.slane %v358, %v369
  %v371 = vcombine.high %v370, %v370
  %v373 = vunpack.c.l.s4 1966171168
  %v374 = vunpack.c.0.s8 %v373
  %v375 = vlaneseq
  %v376 = vshrl.u32 %v375, 7
  %v377 = vsub.s32 %v374, %v376
  %v378 = vrot.slane %v370, %v377
  %v380 = vunpack.c.l.s4 1966171168
  %v381 = vunpack.c.0.s8 %v380
  %v382 = vlaneseq
  %v383 = vshrl.u32 %v382, 7
  %v384 = vsub.s32 %v381, %v383
  %v385 = vrot.slane %v371, %v384
  %v386 = vlaneseq
  %v387 = vshrl.u32 %v386, 7
  %v388 = vsub.s32 0, %v387
  %v389 = vrot.slane %v378, %v388
  %v390 = vlaneseq
  %v391 = vshrl.u32 %v390, 7
  %v392 = vsub.s32 0, %v391
  %v393 = vrot.slane %v385, %v392
  %v396 = vadd.f32 %v389, %v109
  %v397 = vadd.f32 %v393, %v152
  %v398 = vtanh.pop %v396
  %v399 = vtanh.pop %v397
  %v401 = vlaneseq
  %v402 = vshrl.u32 %v401, 7
  %v403 = vsub.s32 0, %v402
  %v404 = vrot.slane %v189, %v403
  %v406 = vmul.f32 %v398, %v404
  %v407 = vmul.f32 %v399, %v404
  %v408 = vsel %vm70, %v406, 0.0
  %409 = vadd.xlane.f32.xlu0 %v408
  %v410 = vpop.xlane.xlu0 %409
  %v411 = vsel %vm70, %v407, 0.0
  %412 = vadd.xlane.f32.xlu0 %v411
  %v413 = vpop.xlane.xlu0 %412
  %v416 = vlaneseq
  %v417 = vand.u32 %v416, 127
  %v418 = vlaneseq
  %v419 = vshrl.u32 %v418, 7
  %v420 = vsub.s32 %v417, %v419
  %v421 = vrot.slane %v410, %v420
  %v422 = vlaneseq
  %v423 = vshrl.u32 %v422, 7
  %v424 = vsub.s32 %v417, %v423
  %v425 = vrot.slane %v413, %v424
  %vm426 = vcmask 1041409
  %v427 = vsel %vm426, %v425, %v421
  %vm429 = vcmask 58368
  %v430 = vsel %vm429, %v427, -inf
  %431 = vmax.xlane.f32.xlu0 %v430
  %v432 = vpop.xlane.xlu0 %431
  %v434 = vlaneseq
  %v435 = vshrl.u32 %v434, 7
  %v436 = vsub.s32 0, %v435
  %v437 = vrot.slane %v432, %v436
  %v438 = vlaneseq
  %v439 = vshrl.u32 %v438, 7
  %v440 = vsub.s32 1, %v439
  %v441 = vrot.slane %v432, %v440
  %v444 = vsub.f32 %v410, %v437
  %v445 = vsub.f32 %v413, %v441
  %v446 = vmul.f32 %v444, 1.442695
  %v447 = vpow.pop %v446
  %v448 = vmul.f32 %v445, 1.442695
  %v449 = vpow.pop %v448
  %451 = vset.pattern.permute.xlu0 0
  %452 = vperm.xlu0 %451, %v447
  %v453 = vpop.permute.xlu0 %452
  %456 = vset.pattern.permute.xlu0 0
  %457 = vperm.xlu0 %456, %v449
  %v458 = vpop.permute.xlu0 %457
  %v460 = vmul.f32 %v453, %v43
  %v461 = vmul.f32 %v458, %v44
  %v462 = vsel %vm70, %v460, 0.0
  %v463 = vrot.slane %v462, 4
  %v464 = vadd.f32 %v462, %v463
  %v465 = vrot.slane %v464, 2
  %v466 = vadd.f32 %v464, %v465
  %v467 = vrot.slane %v466, 1
  %v468 = vadd.f32 %v466, %v467
  %v469 = vsel %vm70, %v461, 0.0
  %v470 = vrot.slane %v469, 4
  %v471 = vadd.f32 %v469, %v470
  %v472 = vrot.slane %v471, 2
  %v473 = vadd.f32 %v471, %v472
  %v474 = vrot.slane %v473, 1
  %v475 = vadd.f32 %v473, %v474
  %v476 = vlaneseq
  %v477 = vshrl.u32 %v476, 7
  %v478 = vsub.s32 %v417, %v477
  %v479 = vrot.slane %v453, %v478
  %v480 = vlaneseq
  %v481 = vshrl.u32 %v480, 7
  %v482 = vsub.s32 %v417, %v481
  %v483 = vrot.slane %v458, %v482
  %v484 = vsel %vm426, %v483, %v479
  %v486 = vsel %vm429, %v484, 0.0
  %487 = vadd.xlane.f32.xlu0 %v486
  %v488 = vpop.xlane.xlu0 %487
  %v489 = vrcp.pop %v488
  %v491 = vrot.slane %v489, 1
  %v494 = vmul.f32 %v468, %v489
  %v495 = vmul.f32 %v475, %v491
  %v497 = vlaneseq
  %v498 = vshrl.u32 %v497, 7
  %v499 = vsub.s32 0, %v498
  %v500 = vrot.slane %v223, %v499
  %v502 = vmul.f32 %v494, %v500
  %v503 = vmul.f32 %v495, %v500
  %v506 = vrot.slane %v503, 7
  %v507 = vsel %vm426, %v506, %v502
  %vm509 = vcmask 254976
  %v510 = vsel %vm509, %v507, 0.0
  %511 = vadd.xlane.f32.xlu0 %v510
  %v512 = vpop.xlane.xlu0 %511
  %v514 = vlaneseq
  %v515 = vshrl.u32 %v514, 7
  %v516 = vsub.s32 0, %v515
  %v517 = vrot.slane %v190, %v516
  %v518 = vlaneseq
  %v519 = vshrl.u32 %v518, 7
  %v520 = vsub.s32 1, %v519
  %v521 = vrot.slane %v190, %v520
  %v522 = vlaneseq
  %v523 = vshrl.u32 %v522, 7
  %v524 = vsub.s32 2, %v523
  %v525 = vrot.slane %v190, %v524
  %v526 = vlaneseq
  %v527 = vshrl.u32 %v526, 7
  %v528 = vsub.s32 3, %v527
  %v529 = vrot.slane %v190, %v528
  %v534 = vmul.f32 %v512, %v517
  %v535 = vmul.f32 %v512, %v521
  %v536 = vmul.f32 %v512, %v525
  %v537 = vmul.f32 %v512, %v529
  %v570 = vunpack.c.l.b16 %v191
  %v571 = vunpack.c.h.b16 %v191
  %v572 = vunpack.c.l.b16 %v192
  %v573 = vunpack.c.h.b16 %v192
  %v574 = vunpack.c.l.b16 %v193
  %v575 = vunpack.c.h.b16 %v193
  %v576 = vunpack.c.l.b16 %v194
  %v577 = vunpack.c.h.b16 %v194
  %v578 = vunpack.c.l.b16 %v195
  %v579 = vunpack.c.h.b16 %v195
  %v580 = vunpack.c.l.b16 %v196
  %v581 = vunpack.c.h.b16 %v196
  %v582 = vunpack.c.l.b16 %v197
  %v583 = vunpack.c.h.b16 %v197
  %v584 = vunpack.c.l.b16 %v198
  %v585 = vunpack.c.h.b16 %v198
  %v586 = vunpack.c.l.b16 %v199
  %v587 = vunpack.c.h.b16 %v199
  %v588 = vunpack.c.l.b16 %v200
  %v589 = vunpack.c.h.b16 %v200
  %v590 = vunpack.c.l.b16 %v201
  %v591 = vunpack.c.h.b16 %v201
  %v592 = vunpack.c.l.b16 %v202
  %v593 = vunpack.c.h.b16 %v202
  %v594 = vunpack.c.l.b16 %v203
  %v595 = vunpack.c.h.b16 %v203
  %v596 = vunpack.c.l.b16 %v204
  %v597 = vunpack.c.h.b16 %v204
  %v598 = vunpack.c.l.b16 %v205
  %v599 = vunpack.c.h.b16 %v205
  %v600 = vunpack.c.l.b16 %v206
  %v601 = vunpack.c.h.b16 %v206
  %v602 = vunpack.c.l.b16 %v207
  %v603 = vunpack.c.h.b16 %v207
  %v604 = vunpack.c.l.b16 %v208
  %v605 = vunpack.c.h.b16 %v208
  %v606 = vunpack.c.l.b16 %v209
  %v607 = vunpack.c.h.b16 %v209
  %v608 = vunpack.c.l.b16 %v210
  %v609 = vunpack.c.h.b16 %v210
  %v610 = vunpack.c.l.b16 %v211
  %v611 = vunpack.c.h.b16 %v211
  %v612 = vunpack.c.l.b16 %v212
  %v613 = vunpack.c.h.b16 %v212
  %v614 = vunpack.c.l.b16 %v213
  %v615 = vunpack.c.h.b16 %v213
  %v616 = vunpack.c.l.b16 %v214
  %v617 = vunpack.c.h.b16 %v214
  %v618 = vunpack.c.l.b16 %v215
  %v619 = vunpack.c.h.b16 %v215
  %v620 = vunpack.c.l.b16 %v216
  %v621 = vunpack.c.h.b16 %v216
  %v622 = vunpack.c.l.b16 %v217
  %v623 = vunpack.c.h.b16 %v217
  %v624 = vunpack.c.l.b16 %v218
  %v625 = vunpack.c.h.b16 %v218
  %v626 = vunpack.c.l.b16 %v219
  %v627 = vunpack.c.h.b16 %v219
  %v628 = vunpack.c.l.b16 %v220
  %v629 = vunpack.c.h.b16 %v220
  %v630 = vunpack.c.l.b16 %v221
  %v631 = vunpack.c.h.b16 %v221
  %v632 = vunpack.c.l.b16 %v222
  %v633 = vunpack.c.h.b16 %v222
  %v634 = vpack.c.b16 %v574, %v570
  %v635 = vpack.c.b16 %v575, %v571
  %v636 = vpack.c.b16 %v576, %v572
  %v637 = vpack.c.b16 %v577, %v573
  %v638 = vpack.c.b16 %v582, %v578
  %v639 = vpack.c.b16 %v583, %v579
  %v640 = vpack.c.b16 %v584, %v580
  %v641 = vpack.c.b16 %v585, %v581
  %v642 = vpack.c.b16 %v590, %v586
  %v643 = vpack.c.b16 %v591, %v587
  %v644 = vpack.c.b16 %v592, %v588
  %v645 = vpack.c.b16 %v593, %v589
  %v646 = vpack.c.b16 %v598, %v594
  %v647 = vpack.c.b16 %v599, %v595
  %v648 = vpack.c.b16 %v600, %v596
  %v649 = vpack.c.b16 %v601, %v597
  %v650 = vpack.c.b16 %v606, %v602
  %v651 = vpack.c.b16 %v607, %v603
  %v652 = vpack.c.b16 %v608, %v604
  %v653 = vpack.c.b16 %v609, %v605
  %v654 = vpack.c.b16 %v614, %v610
  %v655 = vpack.c.b16 %v615, %v611
  %v656 = vpack.c.b16 %v616, %v612
  %v657 = vpack.c.b16 %v617, %v613
  %v658 = vpack.c.b16 %v622, %v618
  %v659 = vpack.c.b16 %v623, %v619
  %v660 = vpack.c.b16 %v624, %v620
  %v661 = vpack.c.b16 %v625, %v621
  %v662 = vpack.c.b16 %v630, %v626
  %v663 = vpack.c.b16 %v631, %v627
  %v664 = vpack.c.b16 %v632, %v628
  %v665 = vpack.c.b16 %v633, %v629
  %698 = vmatprep.subr.bf16.mxu0 %v635
  %699 = vmatpush1.bf16.msra.mxu0 %v634
  %700 = vmatprep.subr.bf16.mxu0 %v639
  %701 = vmatpush1.bf16.msra.mxu0 %v638
  %702 = vmatprep.subr.bf16.mxu0 %v643
  %703 = vmatpush1.bf16.msra.mxu0 %v642
  %704 = vmatprep.subr.bf16.mxu0 %v647
  %705 = vmatpush1.bf16.msra.mxu0 %v646
  %706 = vmatprep.subr.bf16.mxu0 %v651
  %707 = vmatpush1.bf16.msra.mxu0 %v650
  %708 = vmatprep.subr.bf16.mxu0 %v655
  %709 = vmatpush1.bf16.msra.mxu0 %v654
  %710 = vmatprep.subr.bf16.mxu0 %v659
  %711 = vmatpush1.bf16.msra.mxu0 %v658
  %712 = vmatprep.subr.bf16.mxu0 %v663
  %713 = vmatpush1.bf16.msra.mxu0 %v662
  %714 = vmatprep.subr.bf16.mxu0 0
  %715 = vmatpush1.bf16.msra.mxu0 0
  %716 = vmatprep.subr.bf16.mxu0 0
  %717 = vmatpush1.bf16.msra.mxu0 0
  %718 = vmatprep.subr.bf16.mxu0 0
  %719 = vmatpush1.bf16.msra.mxu0 0
  %720 = vmatprep.subr.bf16.mxu0 0
  %721 = vmatpush1.bf16.msra.mxu0 0
  %722 = vmatprep.subr.bf16.mxu0 0
  %723 = vmatpush1.bf16.msra.mxu0 0
  %724 = vmatprep.subr.bf16.mxu0 0
  %725 = vmatpush1.bf16.msra.mxu0 0
  %726 = vmatprep.subr.bf16.mxu0 0
  %727 = vmatpush1.bf16.msra.mxu0 0
  %728 = vmatprep.subr.bf16.mxu0 0
  %729 = vmatpush1.bf16.msra.mxu0 0
  %730 = vmatprep.mubr.bf16.mxu0 0
  %731 = vmatmul.mubr.bf16.gmra.mrb[0].mxu0 0
  %v732 = vpop.f32.mrb[0].mxu0
  %v733 = vadd.f32 0.0, %v732
  %v734 = vpop.f32.mrb[0].mxu0
  %v735 = vadd.f32 0.0, %v734
  %v736 = vpop.f32.mrb[0].mxu0
  %v737 = vpop.f32.mrb[0].mxu0
  %738 = vdwg.mxu0
  %739 = vmatprep.subr.bf16.mxu0 %v637
  %740 = vmatpush1.bf16.msra.mxu0 %v636
  %741 = vmatprep.subr.bf16.mxu0 %v641
  %742 = vmatpush1.bf16.msra.mxu0 %v640
  %743 = vmatprep.subr.bf16.mxu0 %v645
  %744 = vmatpush1.bf16.msra.mxu0 %v644
  %745 = vmatprep.subr.bf16.mxu0 %v649
  %746 = vmatpush1.bf16.msra.mxu0 %v648
  %747 = vmatprep.subr.bf16.mxu0 %v653
  %748 = vmatpush1.bf16.msra.mxu0 %v652
  %749 = vmatprep.subr.bf16.mxu0 %v657
  %750 = vmatpush1.bf16.msra.mxu0 %v656
  %751 = vmatprep.subr.bf16.mxu0 %v661
  %752 = vmatpush1.bf16.msra.mxu0 %v660
  %753 = vmatprep.subr.bf16.mxu0 %v665
  %754 = vmatpush1.bf16.msra.mxu0 %v664
  %755 = vmatprep.subr.bf16.mxu0 0
  %756 = vmatpush1.bf16.msra.mxu0 0
  %757 = vmatprep.subr.bf16.mxu0 0
  %758 = vmatpush1.bf16.msra.mxu0 0
  %759 = vmatprep.subr.bf16.mxu0 0
  %760 = vmatpush1.bf16.msra.mxu0 0
  %761 = vmatprep.subr.bf16.mxu0 0
  %762 = vmatpush1.bf16.msra.mxu0 0
  %763 = vmatprep.subr.bf16.mxu0 0
  %764 = vmatpush1.bf16.msra.mxu0 0
  %765 = vmatprep.subr.bf16.mxu0 0
  %766 = vmatpush1.bf16.msra.mxu0 0
  %767 = vmatprep.subr.bf16.mxu0 0
  %768 = vmatpush1.bf16.msra.mxu0 0
  %769 = vmatprep.subr.bf16.mxu0 0
  %770 = vmatpush1.bf16.msra.mxu0 0
  %771 = vmatprep.mubr.bf16.mxu0 0
  %772 = vmatmul.mubr.bf16.gmra.mrb[0].mxu0 0
  %v773 = vpop.f32.mrb[0].mxu0
  %v774 = vadd.f32 0.0, %v773
  %v775 = vpop.f32.mrb[0].mxu0
  %v776 = vadd.f32 0.0, %v775
  %v777 = vpop.f32.mrb[0].mxu0
  %v778 = vpop.f32.mrb[0].mxu0
  %779 = vdwg.mxu0
  %v780 = vadd.f32 %v534, %v733
  %v781 = vadd.f32 %v535, %v735
  %v782 = vadd.f32 %v536, %v774
  %v783 = vadd.f32 %v537, %v776
  %v784 = vld [vmem:[%s5] sm:$0xff]
  %v786 = vcombine.high %v784, %v784
  %v788 = vunpack.c.l.s4 1983009808
  %v789 = vunpack.c.0.s8 %v788
  %v790 = vlaneseq
  %v791 = vshrl.u32 %v790, 7
  %v792 = vsub.s32 %v789, %v791
  %v793 = vrot.slane %v784, %v792
  %v795 = vunpack.c.l.s4 1983009808
  %v796 = vunpack.c.0.s8 %v795
  %v797 = vlaneseq
  %v798 = vshrl.u32 %v797, 7
  %v799 = vsub.s32 %v796, %v798
  %v800 = vrot.slane %v786, %v799
  %v801 = vcombine.high %v793, %v793
  %v802 = vcombine.high %v800, %v800
  %v807 = vadd.f32 %v780, %v793
  %v808 = vadd.f32 %v781, %v801
  %v809 = vadd.f32 %v782, %v800
  %v810 = vadd.f32 %v783, %v802
  %v811 = vxor.u32 %v807, 2147483648
  %v812 = vxor.u32 %v808, 2147483648
  %v813 = vxor.u32 %v809, 2147483648
  %v814 = vmul.f32 %v811, 1.442695
  %v815 = vpow.pop %v814
  %v816 = vmul.f32 %v812, 1.442695
  %v817 = vpow.pop %v816
  %v818 = vmul.f32 %v813, 1.442695
  %v819 = vpow.pop %v818
  %v820 = vadd.f32 %v815, 1.0
  %v821 = vadd.f32 %v817, 1.0
  %v822 = vadd.f32 %v819, 1.0
  %v823 = vrcp.pop %v820
  %v824 = vmul.f32 1.0, %v823
  %v825 = vrcp.pop %v821
  %v826 = vmul.f32 1.0, %v825
  %v827 = vrcp.pop %v822
  %v828 = vmul.f32 1.0, %v827
  %v829 = vtanh.pop %v810
  %v830 = vmul.f32 %v826, 0.0
  %v831 = vmul.f32 %v824, %v829
  %v832 = vadd.f32 %v830, %v831
  %v833 = vtanh.pop %v832
  %v834 = vmul.f32 %v828, %v833
  %v835 = vpack.c.bf16 %v834, %v834
  %v836 = vpack.c.bf16 %v832, %v832
  %837 = vmatprep.subr.bf16.mxu0 0
  %838 = vmatpush1.bf16.msra.mxu0 %v291
  %839 = vmatprep.subr.bf16.mxu0 0
  %840 = vmatpush1.bf16.msra.mxu0 %v292
  %841 = vmatprep.subr.bf16.mxu0 0
  %842 = vmatpush1.bf16.msra.mxu0 %v293
  %843 = vmatprep.subr.bf16.mxu0 0
  %844 = vmatpush1.bf16.msra.mxu0 %v294
  %845 = vmatprep.subr.bf16.mxu0 0
  %846 = vmatpush1.bf16.msra.mxu0 %v295
  %847 = vmatprep.subr.bf16.mxu0 0
  %848 = vmatpush1.bf16.msra.mxu0 %v296
  %849 = vmatprep.subr.bf16.mxu0 0
  %850 = vmatpush1.bf16.msra.mxu0 %v297
  %851 = vmatprep.subr.bf16.mxu0 0
  %852 = vmatpush1.bf16.msra.mxu0 %v298
  %853 = vmatprep.subr.bf16.mxu0 0
  %854 = vmatpush1.bf16.msra.mxu0 %v299
  %855 = vmatprep.subr.bf16.mxu0 0
  %856 = vmatpush1.bf16.msra.mxu0 %v300
  %857 = vmatprep.subr.bf16.mxu0 0
  %858 = vmatpush1.bf16.msra.mxu0 %v301
  %859 = vmatprep.subr.bf16.mxu0 0
  %860 = vmatpush1.bf16.msra.mxu0 %v302
  %861 = vmatprep.subr.bf16.mxu0 0
  %862 = vmatpush1.bf16.msra.mxu0 %v303
  %863 = vmatprep.subr.bf16.mxu0 0
  %864 = vmatpush1.bf16.msra.mxu0 %v304
  %865 = vmatprep.subr.bf16.mxu0 0
  %866 = vmatpush1.bf16.msra.mxu0 %v305
  %867 = vmatprep.subr.bf16.mxu0 0
  %868 = vmatpush1.bf16.msra.mxu0 %v306
  %869 = vmatprep.mubr.bf16.mxu0 %v836
  %870 = vmatmul.mubr.bf16.gmra.mrb[0].mxu0 %v835
  %v871 = vpop.f32.mrb[0].mxu0
  %v872 = vadd.f32 0.0, %v871
  %v873 = vpop.f32.mrb[0].mxu0
  %v874 = vpop.f32.mrb[0].mxu0
  %v875 = vpop.f32.mrb[0].mxu0
  %876 = vdwg.mxu0
  %v879 = vunpack.c.l.s4 1966171168
  %v880 = vunpack.c.0.s8 %v879
  %v881 = vlaneseq
  %v882 = vshrl.u32 %v881, 7
  %v883 = vsub.s32 %v880, %v882
  %v884 = vrot.slane %v872, %v883
  %v885 = vcombine.high %v884, %v884
  %v887 = vunpack.c.l.s4 1966171168
  %v888 = vunpack.c.0.s8 %v887
  %v889 = vlaneseq
  %v890 = vshrl.u32 %v889, 7
  %v891 = vsub.s32 %v888, %v890
  %v892 = vrot.slane %v884, %v891
  %v894 = vunpack.c.l.s4 1966171168
  %v895 = vunpack.c.0.s8 %v894
  %v896 = vlaneseq
  %v897 = vshrl.u32 %v896, 7
  %v898 = vsub.s32 %v895, %v897
  %v899 = vrot.slane %v885, %v898
  %v900 = vlaneseq
  %v901 = vshrl.u32 %v900, 7
  %v902 = vsub.s32 0, %v901
  %v903 = vrot.slane %v892, %v902
  %v904 = vlaneseq
  %v905 = vshrl.u32 %v904, 7
  %v906 = vsub.s32 0, %v905
  %v907 = vrot.slane %v899, %v906
  %v910 = vadd.f32 %v903, %v109
  %v911 = vadd.f32 %v907, %v152
  %v912 = vtanh.pop %v910
  %v913 = vtanh.pop %v911
  %v914 = vmul.f32 %v912, %v404
  %v915 = vmul.f32 %v913, %v404
  %v916 = vsel %vm70, %v914, 0.0
  %917 = vadd.xlane.f32.xlu0 %v916
  %v918 = vpop.xlane.xlu0 %917
  %v919 = vsel %vm70, %v915, 0.0
  %920 = vadd.xlane.f32.xlu0 %v919
  %v921 = vpop.xlane.xlu0 %920
  %v924 = vlaneseq
  %v925 = vshrl.u32 %v924, 7
  %v926 = vsub.s32 %v417, %v925
  %v927 = vrot.slane %v918, %v926
  %v928 = vlaneseq
  %v929 = vshrl.u32 %v928, 7
  %v930 = vsub.s32 %v417, %v929
  %v931 = vrot.slane %v921, %v930
  %v932 = vsel %vm426, %v931, %v927
  %v934 = vsel %vm429, %v932, -inf
  %935 = vmax.xlane.f32.xlu0 %v934
  %v936 = vpop.xlane.xlu0 %935
  %v938 = vlaneseq
  %v939 = vshrl.u32 %v938, 7
  %v940 = vsub.s32 0, %v939
  %v941 = vrot.slane %v936, %v940
  %v942 = vlaneseq
  %v943 = vshrl.u32 %v942, 7
  %v944 = vsub.s32 1, %v943
  %v945 = vrot.slane %v936, %v944
  %v948 = vsub.f32 %v918, %v941
  %v949 = vsub.f32 %v921, %v945
  %v950 = vmul.f32 %v948, 1.442695
  %v951 = vpow.pop %v950
  %v952 = vmul.f32 %v949, 1.442695
  %v953 = vpow.pop %v952
  %955 = vset.pattern.permute.xlu0 0
  %956 = vperm.xlu0 %955, %v951
  %v957 = vpop.permute.xlu0 %956
  %960 = vset.pattern.permute.xlu0 0
  %961 = vperm.xlu0 %960, %v953
  %v962 = vpop.permute.xlu0 %961
  %v964 = vmul.f32 %v957, %v43
  %v965 = vmul.f32 %v962, %v44
  %v966 = vsel %vm70, %v964, 0.0
  %v967 = vrot.slane %v966, 4
  %v968 = vadd.f32 %v966, %v967
  %v969 = vrot.slane %v968, 2
  %v970 = vadd.f32 %v968, %v969
  %v971 = vrot.slane %v970, 1
  %v972 = vadd.f32 %v970, %v971
  %v973 = vsel %vm70, %v965, 0.0
  %v974 = vrot.slane %v973, 4
  %v975 = vadd.f32 %v973, %v974
  %v976 = vrot.slane %v975, 2
  %v977 = vadd.f32 %v975, %v976
  %v978 = vrot.slane %v977, 1
  %v979 = vadd.f32 %v977, %v978
  %v980 = vlaneseq
  %v981 = vshrl.u32 %v980, 7
  %v982 = vsub.s32 %v417, %v981
  %v983 = vrot.slane %v957, %v982
  %v984 = vlaneseq
  %v985 = vshrl.u32 %v984, 7
  %v986 = vsub.s32 %v417, %v985
  %v987 = vrot.slane %v962, %v986
  %v988 = vsel %vm426, %v987, %v983
  %v990 = vsel %vm429, %v988, 0.0
  %991 = vadd.xlane.f32.xlu0 %v990
  %v992 = vpop.xlane.xlu0 %991
  %v993 = vrcp.pop %v992
  %v995 = vrot.slane %v993, 1
  %v998 = vmul.f32 %v972, %v993
  %v999 = vmul.f32 %v979, %v995
  %v1000 = vmul.f32 %v998, %v500
  %v1001 = vmul.f32 %v999, %v500
  %v1004 = vrot.slane %v1001, 7
  %v1005 = vsel %vm426, %v1004, %v1000
  %v1007 = vsel %vm509, %v1005, 0.0
  %1008 = vadd.xlane.f32.xlu0 %v1007
  %v1009 = vpop.xlane.xlu0 %1008
  %v1010 = vmul.f32 %v1009, %v517
  %v1011 = vmul.f32 %v1009, %v521
  %v1012 = vmul.f32 %v1009, %v525
  %v1013 = vmul.f32 %v1009, %v529
  %1014 = vmatprep.subr.bf16.mxu0 %v635
  %1015 = vmatpush1.bf16.msra.mxu0 %v634
  %1016 = vmatprep.subr.bf16.mxu0 %v639
  %1017 = vmatpush1.bf16.msra.mxu0 %v638
  %1018 = vmatprep.subr.bf16.mxu0 %v643
  %1019 = vmatpush1.bf16.msra.mxu0 %v642
  %1020 = vmatprep.subr.bf16.mxu0 %v647
  %1021 = vmatpush1.bf16.msra.mxu0 %v646
  %1022 = vmatprep.subr.bf16.mxu0 %v651
  %1023 = vmatpush1.bf16.msra.mxu0 %v650
  %1024 = vmatprep.subr.bf16.mxu0 %v655
  %1025 = vmatpush1.bf16.msra.mxu0 %v654
  %1026 = vmatprep.subr.bf16.mxu0 %v659
  %1027 = vmatpush1.bf16.msra.mxu0 %v658
  %1028 = vmatprep.subr.bf16.mxu0 %v663
  %1029 = vmatpush1.bf16.msra.mxu0 %v662
  %1030 = vmatprep.subr.bf16.mxu0 0
  %1031 = vmatpush1.bf16.msra.mxu0 0
  %1032 = vmatprep.subr.bf16.mxu0 0
  %1033 = vmatpush1.bf16.msra.mxu0 0
  %1034 = vmatprep.subr.bf16.mxu0 0
  %1035 = vmatpush1.bf16.msra.mxu0 0
  %1036 = vmatprep.subr.bf16.mxu0 0
  %1037 = vmatpush1.bf16.msra.mxu0 0
  %1038 = vmatprep.subr.bf16.mxu0 0
  %1039 = vmatpush1.bf16.msra.mxu0 0
  %1040 = vmatprep.subr.bf16.mxu0 0
  %1041 = vmatpush1.bf16.msra.mxu0 0
  %1042 = vmatprep.subr.bf16.mxu0 0
  %1043 = vmatpush1.bf16.msra.mxu0 0
  %1044 = vmatprep.subr.bf16.mxu0 0
  %1045 = vmatpush1.bf16.msra.mxu0 0
  %1046 = vmatprep.mubr.bf16.mxu0 0
  %1047 = vmatmul.mubr.bf16.gmra.mrb[0].mxu0 %v835
  %v1048 = vpop.f32.mrb[0].mxu0
  %v1049 = vadd.f32 0.0, %v1048
  %v1050 = vpop.f32.mrb[0].mxu0
  %v1051 = vadd.f32 0.0, %v1050
  %v1052 = vpop.f32.mrb[0].mxu0
  %v1053 = vpop.f32.mrb[0].mxu0
  %1054 = vdwg.mxu0
  %1055 = vmatprep.subr.bf16.mxu0 %v637
  %1056 = vmatpush1.bf16.msra.mxu0 %v636
  %1057 = vmatprep.subr.bf16.mxu0 %v641
  %1058 = vmatpush1.bf16.msra.mxu0 %v640
  %1059 = vmatprep.subr.bf16.mxu0 %v645
  %1060 = vmatpush1.bf16.msra.mxu0 %v644
  %1061 = vmatprep.subr.bf16.mxu0 %v649
  %1062 = vmatpush1.bf16.msra.mxu0 %v648
  %1063 = vmatprep.subr.bf16.mxu0 %v653
  %1064 = vmatpush1.bf16.msra.mxu0 %v652
  %1065 = vmatprep.subr.bf16.mxu0 %v657
  %1066 = vmatpush1.bf16.msra.mxu0 %v656
  %1067 = vmatprep.subr.bf16.mxu0 %v661
  %1068 = vmatpush1.bf16.msra.mxu0 %v660
  %1069 = vmatprep.subr.bf16.mxu0 %v665
  %1070 = vmatpush1.bf16.msra.mxu0 %v664
  %1071 = vmatprep.subr.bf16.mxu0 0
  %1072 = vmatpush1.bf16.msra.mxu0 0
  %1073 = vmatprep.subr.bf16.mxu0 0
  %1074 = vmatpush1.bf16.msra.mxu0 0
  %1075 = vmatprep.subr.bf16.mxu0 0
  %1076 = vmatpush1.bf16.msra.mxu0 0
  %1077 = vmatprep.subr.bf16.mxu0 0
  %1078 = vmatpush1.bf16.msra.mxu0 0
  %1079 = vmatprep.subr.bf16.mxu0 0
  %1080 = vmatpush1.bf16.msra.mxu0 0
  %1081 = vmatprep.subr.bf16.mxu0 0
  %1082 = vmatpush1.bf16.msra.mxu0 0
  %1083 = vmatprep.subr.bf16.mxu0 0
  %1084 = vmatpush1.bf16.msra.mxu0 0
  %1085 = vmatprep.subr.bf16.mxu0 0
  %1086 = vmatpush1.bf16.msra.mxu0 0
  %1087 = vmatprep.mubr.bf16.mxu0 0
  %1088 = vmatmul.mubr.bf16.gmra.mrb[0].mxu0 %v835
  %v1089 = vpop.f32.mrb[0].mxu0
  %v1090 = vadd.f32 0.0, %v1089
  %v1091 = vpop.f32.mrb[0].mxu0
  %v1092 = vadd.f32 0.0, %v1091
  %v1093 = vpop.f32.mrb[0].mxu0
  %v1094 = vpop.f32.mrb[0].mxu0
  %1095 = vdwg.mxu0
  %v1096 = vadd.f32 %v1010, %v1049
  %v1097 = vadd.f32 %v1011, %v1051
  %v1098 = vadd.f32 %v1012, %v1090
  %v1099 = vadd.f32 %v1013, %v1092
  %s1100 = scalar_lea.vmem %s5, 8
  %v1101 = vld [vmem:[%s1100] sm:$0xff]
  %v1103 = vcombine.high %v1101, %v1101
  %v1105 = vunpack.c.l.s4 1983009808
  %v1106 = vunpack.c.0.s8 %v1105
  %v1107 = vlaneseq
  %v1108 = vshrl.u32 %v1107, 7
  %v1109 = vsub.s32 %v1106, %v1108
  %v1110 = vrot.slane %v1101, %v1109
  %v1112 = vunpack.c.l.s4 1983009808
  %v1113 = vunpack.c.0.s8 %v1112
  %v1114 = vlaneseq
  %v1115 = vshrl.u32 %v1114, 7
  %v1116 = vsub.s32 %v1113, %v1115
  %v1117 = vrot.slane %v1103, %v1116
  %v1118 = vcombine.high %v1110, %v1110
  %v1119 = vcombine.high %v1117, %v1117
  %v1124 = vadd.f32 %v1096, %v1110
  %v1125 = vadd.f32 %v1097, %v1118
  %v1126 = vadd.f32 %v1098, %v1117
  %v1127 = vadd.f32 %v1099, %v1119
  %v1128 = vxor.u32 %v1124, 2147483648
  %v1129 = vxor.u32 %v1125, 2147483648
  %v1130 = vxor.u32 %v1126, 2147483648
  %v1131 = vmul.f32 %v1128, 1.442695
  %v1132 = vpow.pop %v1131
  %v1133 = vmul.f32 %v1129, 1.442695
  %v1134 = vpow.pop %v1133
  %v1135 = vmul.f32 %v1130, 1.442695
  %v1136 = vpow.pop %v1135
  %v1137 = vadd.f32 %v1132, 1.0
  %v1138 = vadd.f32 %v1134, 1.0
  %v1139 = vadd.f32 %v1136, 1.0
  %v1140 = vrcp.pop %v1137
  %v1141 = vmul.f32 1.0, %v1140
  %v1142 = vrcp.pop %v1138
  %v1143 = vmul.f32 1.0, %v1142
  %v1144 = vrcp.pop %v1139
  %v1145 = vmul.f32 1.0, %v1144
  %v1146 = vtanh.pop %v1127
  %v1147 = vmul.f32 %v1143, %v832
  %v1148 = vmul.f32 %v1141, %v1146
  %v1149 = vadd.f32 %v1147, %v1148
  %v1150 = vtanh.pop %v1149
  %v1151 = vmul.f32 %v1145, %v1150
  %v1152 = vpack.c.bf16 %v1151, %v1151
  %v1153 = vpack.c.bf16 %v1149, %v1149
  %1154 = vmatprep.subr.bf16.mxu0 0
  %1155 = vmatpush1.bf16.msra.mxu0 %v291
  %1156 = vmatprep.subr.bf16.mxu0 0
  %1157 = vmatpush1.bf16.msra.mxu0 %v292
  %1158 = vmatprep.subr.bf16.mxu0 0
  %1159 = vmatpush1.bf16.msra.mxu0 %v293
  %1160 = vmatprep.subr.bf16.mxu0 0
  %1161 = vmatpush1.bf16.msra.mxu0 %v294
  %1162 = vmatprep.subr.bf16.mxu0 0
  %1163 = vmatpush1.bf16.msra.mxu0 %v295
  %1164 = vmatprep.subr.bf16.mxu0 0
  %1165 = vmatpush1.bf16.msra.mxu0 %v296
  %1166 = vmatprep.subr.bf16.mxu0 0
  %1167 = vmatpush1.bf16.msra.mxu0 %v297
  %1168 = vmatprep.subr.bf16.mxu0 0
  %1169 = vmatpush1.bf16.msra.mxu0 %v298
  %1170 = vmatprep.subr.bf16.mxu0 0
  %1171 = vmatpush1.bf16.msra.mxu0 %v299
  %1172 = vmatprep.subr.bf16.mxu0 0
  %1173 = vmatpush1.bf16.msra.mxu0 %v300
  %1174 = vmatprep.subr.bf16.mxu0 0
  %1175 = vmatpush1.bf16.msra.mxu0 %v301
  %1176 = vmatprep.subr.bf16.mxu0 0
  %1177 = vmatpush1.bf16.msra.mxu0 %v302
  %1178 = vmatprep.subr.bf16.mxu0 0
  %1179 = vmatpush1.bf16.msra.mxu0 %v303
  %1180 = vmatprep.subr.bf16.mxu0 0
  %1181 = vmatpush1.bf16.msra.mxu0 %v304
  %1182 = vmatprep.subr.bf16.mxu0 0
  %1183 = vmatpush1.bf16.msra.mxu0 %v305
  %1184 = vmatprep.subr.bf16.mxu0 0
  %1185 = vmatpush1.bf16.msra.mxu0 %v306
  %1186 = vmatprep.mubr.bf16.mxu0 %v1153
  %1187 = vmatmul.mubr.bf16.gmra.mrb[0].mxu0 %v1152
  %v1188 = vpop.f32.mrb[0].mxu0
  %v1189 = vadd.f32 0.0, %v1188
  %v1190 = vpop.f32.mrb[0].mxu0
  %v1191 = vpop.f32.mrb[0].mxu0
  %v1192 = vpop.f32.mrb[0].mxu0
  %1193 = vdwg.mxu0
  %v1196 = vunpack.c.l.s4 1966171168
  %v1197 = vunpack.c.0.s8 %v1196
  %v1198 = vlaneseq
  %v1199 = vshrl.u32 %v1198, 7
  %v1200 = vsub.s32 %v1197, %v1199
  %v1201 = vrot.slane %v1189, %v1200
  %v1202 = vcombine.high %v1201, %v1201
  %v1204 = vunpack.c.l.s4 1966171168
  %v1205 = vunpack.c.0.s8 %v1204
  %v1206 = vlaneseq
  %v1207 = vshrl.u32 %v1206, 7
  %v1208 = vsub.s32 %v1205, %v1207
  %v1209 = vrot.slane %v1201, %v1208
  %v1211 = vunpack.c.l.s4 1966171168
  %v1212 = vunpack.c.0.s8 %v1211
  %v1213 = vlaneseq
  %v1214 = vshrl.u32 %v1213, 7
  %v1215 = vsub.s32 %v1212, %v1214
  %v1216 = vrot.slane %v1202, %v1215
  %v1217 = vlaneseq
  %v1218 = vshrl.u32 %v1217, 7
  %v1219 = vsub.s32 0, %v1218
  %v1220 = vrot.slane %v1209, %v1219
  %v1221 = vlaneseq
  %v1222 = vshrl.u32 %v1221, 7
  %v1223 = vsub.s32 0, %v1222
  %v1224 = vrot.slane %v1216, %v1223
  %v1227 = vadd.f32 %v1220, %v109
  %v1228 = vadd.f32 %v1224, %v152
  %v1229 = vtanh.pop %v1227
  %v1230 = vtanh.pop %v1228
  %v1231 = vmul.f32 %v1229, %v404
  %v1232 = vmul.f32 %v1230, %v404
  %v1233 = vsel %vm70, %v1231, 0.0
  %1234 = vadd.xlane.f32.xlu0 %v1233
  %v1235 = vpop.xlane.xlu0 %1234
  %v1236 = vsel %vm70, %v1232, 0.0
  %1237 = vadd.xlane.f32.xlu0 %v1236
  %v1238 = vpop.xlane.xlu0 %1237
  %v1241 = vlaneseq
  %v1242 = vshrl.u32 %v1241, 7
  %v1243 = vsub.s32 %v417, %v1242
  %v1244 = vrot.slane %v1235, %v1243
  %v1245 = vlaneseq
  %v1246 = vshrl.u32 %v1245, 7
  %v1247 = vsub.s32 %v417, %v1246
  %v1248 = vrot.slane %v1238, %v1247
  %v1249 = vsel %vm426, %v1248, %v1244
  %v1251 = vsel %vm429, %v1249, -inf
  %1252 = vmax.xlane.f32.xlu0 %v1251
  %v1253 = vpop.xlane.xlu0 %1252
  %v1255 = vlaneseq
  %v1256 = vshrl.u32 %v1255, 7
  %v1257 = vsub.s32 0, %v1256
  %v1258 = vrot.slane %v1253, %v1257
  %v1259 = vlaneseq
  %v1260 = vshrl.u32 %v1259, 7
  %v1261 = vsub.s32 1, %v1260
  %v1262 = vrot.slane %v1253, %v1261
  %v1265 = vsub.f32 %v1235, %v1258
  %v1266 = vsub.f32 %v1238, %v1262
  %v1267 = vmul.f32 %v1265, 1.442695
  %v1268 = vpow.pop %v1267
  %v1269 = vmul.f32 %v1266, 1.442695
  %v1270 = vpow.pop %v1269
  %1272 = vset.pattern.permute.xlu0 0
  %1273 = vperm.xlu0 %1272, %v1268
  %v1274 = vpop.permute.xlu0 %1273
  %1277 = vset.pattern.permute.xlu0 0
  %1278 = vperm.xlu0 %1277, %v1270
  %v1279 = vpop.permute.xlu0 %1278
  %v1281 = vmul.f32 %v1274, %v43
  %v1282 = vmul.f32 %v1279, %v44
  %v1283 = vsel %vm70, %v1281, 0.0
  %v1284 = vrot.slane %v1283, 4
  %v1285 = vadd.f32 %v1283, %v1284
  %v1286 = vrot.slane %v1285, 2
  %v1287 = vadd.f32 %v1285, %v1286
  %v1288 = vrot.slane %v1287, 1
  %v1289 = vadd.f32 %v1287, %v1288
  %v1290 = vsel %vm70, %v1282, 0.0
  %v1291 = vrot.slane %v1290, 4
  %v1292 = vadd.f32 %v1290, %v1291
  %v1293 = vrot.slane %v1292, 2
  %v1294 = vadd.f32 %v1292, %v1293
  %v1295 = vrot.slane %v1294, 1
  %v1296 = vadd.f32 %v1294, %v1295
  %v1297 = vlaneseq
  %v1298 = vshrl.u32 %v1297, 7
  %v1299 = vsub.s32 %v417, %v1298
  %v1300 = vrot.slane %v1274, %v1299
  %v1301 = vlaneseq
  %v1302 = vshrl.u32 %v1301, 7
  %v1303 = vsub.s32 %v417, %v1302
  %v1304 = vrot.slane %v1279, %v1303
  %v1305 = vsel %vm426, %v1304, %v1300
  %v1307 = vsel %vm429, %v1305, 0.0
  %1308 = vadd.xlane.f32.xlu0 %v1307
  %v1309 = vpop.xlane.xlu0 %1308
  %v1310 = vrcp.pop %v1309
  %v1312 = vrot.slane %v1310, 1
  %v1315 = vmul.f32 %v1289, %v1310
  %v1316 = vmul.f32 %v1296, %v1312
  %v1317 = vmul.f32 %v1315, %v500
  %v1318 = vmul.f32 %v1316, %v500
  %v1321 = vrot.slane %v1318, 7
  %v1322 = vsel %vm426, %v1321, %v1317
  %v1324 = vsel %vm509, %v1322, 0.0
  %1325 = vadd.xlane.f32.xlu0 %v1324
  %v1326 = vpop.xlane.xlu0 %1325
  %v1327 = vmul.f32 %v1326, %v517
  %v1328 = vmul.f32 %v1326, %v521
  %v1329 = vmul.f32 %v1326, %v525
  %v1330 = vmul.f32 %v1326, %v529
  %1331 = vmatprep.subr.bf16.mxu0 %v635
  %1332 = vmatpush1.bf16.msra.mxu0 %v634
  %1333 = vmatprep.subr.bf16.mxu0 %v639
  %1334 = vmatpush1.bf16.msra.mxu0 %v638
  %1335 = vmatprep.subr.bf16.mxu0 %v643
  %1336 = vmatpush1.bf16.msra.mxu0 %v642
  %1337 = vmatprep.subr.bf16.mxu0 %v647
  %1338 = vmatpush1.bf16.msra.mxu0 %v646
  %1339 = vmatprep.subr.bf16.mxu0 %v651
  %1340 = vmatpush1.bf16.msra.mxu0 %v650
  %1341 = vmatprep.subr.bf16.mxu0 %v655
  %1342 = vmatpush1.bf16.msra.mxu0 %v654
  %1343 = vmatprep.subr.bf16.mxu0 %v659
  %1344 = vmatpush1.bf16.msra.mxu0 %v658
  %1345 = vmatprep.subr.bf16.mxu0 %v663
  %1346 = vmatpush1.bf16.msra.mxu0 %v662
  %1347 = vmatprep.subr.bf16.mxu0 0
  %1348 = vmatpush1.bf16.msra.mxu0 0
  %1349 = vmatprep.subr.bf16.mxu0 0
  %1350 = vmatpush1.bf16.msra.mxu0 0
  %1351 = vmatprep.subr.bf16.mxu0 0
  %1352 = vmatpush1.bf16.msra.mxu0 0
  %1353 = vmatprep.subr.bf16.mxu0 0
  %1354 = vmatpush1.bf16.msra.mxu0 0
  %1355 = vmatprep.subr.bf16.mxu0 0
  %1356 = vmatpush1.bf16.msra.mxu0 0
  %1357 = vmatprep.subr.bf16.mxu0 0
  %1358 = vmatpush1.bf16.msra.mxu0 0
  %1359 = vmatprep.subr.bf16.mxu0 0
  %1360 = vmatpush1.bf16.msra.mxu0 0
  %1361 = vmatprep.subr.bf16.mxu0 0
  %1362 = vmatpush1.bf16.msra.mxu0 0
  %1363 = vmatprep.mubr.bf16.mxu0 0
  %1364 = vmatmul.mubr.bf16.gmra.mrb[0].mxu0 %v1152
  %v1365 = vpop.f32.mrb[0].mxu0
  %v1366 = vadd.f32 0.0, %v1365
  %v1367 = vpop.f32.mrb[0].mxu0
  %v1368 = vadd.f32 0.0, %v1367
  %v1369 = vpop.f32.mrb[0].mxu0
  %v1370 = vpop.f32.mrb[0].mxu0
  %1371 = vdwg.mxu0
  %1372 = vmatprep.subr.bf16.mxu0 %v637
  %1373 = vmatpush1.bf16.msra.mxu0 %v636
  %1374 = vmatprep.subr.bf16.mxu0 %v641
  %1375 = vmatpush1.bf16.msra.mxu0 %v640
  %1376 = vmatprep.subr.bf16.mxu0 %v645
  %1377 = vmatpush1.bf16.msra.mxu0 %v644
  %1378 = vmatprep.subr.bf16.mxu0 %v649
  %1379 = vmatpush1.bf16.msra.mxu0 %v648
  %1380 = vmatprep.subr.bf16.mxu0 %v653
  %1381 = vmatpush1.bf16.msra.mxu0 %v652
  %1382 = vmatprep.subr.bf16.mxu0 %v657
  %1383 = vmatpush1.bf16.msra.mxu0 %v656
  %1384 = vmatprep.subr.bf16.mxu0 %v661
  %1385 = vmatpush1.bf16.msra.mxu0 %v660
  %1386 = vmatprep.subr.bf16.mxu0 %v665
  %1387 = vmatpush1.bf16.msra.mxu0 %v664
  %1388 = vmatprep.subr.bf16.mxu0 0
  %1389 = vmatpush1.bf16.msra.mxu0 0
  %1390 = vmatprep.subr.bf16.mxu0 0
  %1391 = vmatpush1.bf16.msra.mxu0 0
  %1392 = vmatprep.subr.bf16.mxu0 0
  %1393 = vmatpush1.bf16.msra.mxu0 0
  %1394 = vmatprep.subr.bf16.mxu0 0
  %1395 = vmatpush1.bf16.msra.mxu0 0
  %1396 = vmatprep.subr.bf16.mxu0 0
  %1397 = vmatpush1.bf16.msra.mxu0 0
  %1398 = vmatprep.subr.bf16.mxu0 0
  %1399 = vmatpush1.bf16.msra.mxu0 0
  %1400 = vmatprep.subr.bf16.mxu0 0
  %1401 = vmatpush1.bf16.msra.mxu0 0
  %1402 = vmatprep.subr.bf16.mxu0 0
  %1403 = vmatpush1.bf16.msra.mxu0 0
  %1404 = vmatprep.mubr.bf16.mxu0 0
  %1405 = vmatmul.mubr.bf16.gmra.mrb[0].mxu0 %v1152
  %v1406 = vpop.f32.mrb[0].mxu0
  %v1407 = vadd.f32 0.0, %v1406
  %v1408 = vpop.f32.mrb[0].mxu0
  %v1409 = vadd.f32 0.0, %v1408
  %v1410 = vpop.f32.mrb[0].mxu0
  %v1411 = vpop.f32.mrb[0].mxu0
  %1412 = vdwg.mxu0
  %v1413 = vadd.f32 %v1327, %v1366
  %v1414 = vadd.f32 %v1328, %v1368
  %v1415 = vadd.f32 %v1329, %v1407
  %v1416 = vadd.f32 %v1330, %v1409
  %s1417 = scalar_lea.vmem %s5, 16
  %v1418 = vld [vmem:[%s1417] sm:$0xff]
  %v1420 = vcombine.high %v1418, %v1418
  %v1422 = vunpack.c.l.s4 1983009808
  %v1423 = vunpack.c.0.s8 %v1422
  %v1424 = vlaneseq
  %v1425 = vshrl.u32 %v1424, 7
  %v1426 = vsub.s32 %v1423, %v1425
  %v1427 = vrot.slane %v1418, %v1426
  %v1429 = vunpack.c.l.s4 1983009808
  %v1430 = vunpack.c.0.s8 %v1429
  %v1431 = vlaneseq
  %v1432 = vshrl.u32 %v1431, 7
  %v1433 = vsub.s32 %v1430, %v1432
  %v1434 = vrot.slane %v1420, %v1433
  %v1435 = vcombine.high %v1427, %v1427
  %v1436 = vcombine.high %v1434, %v1434
  %v1441 = vadd.f32 %v1413, %v1427
  %v1442 = vadd.f32 %v1414, %v1435
  %v1443 = vadd.f32 %v1415, %v1434
  %v1444 = vadd.f32 %v1416, %v1436
  %v1445 = vxor.u32 %v1441, 2147483648
  %v1446 = vxor.u32 %v1442, 2147483648
  %v1447 = vxor.u32 %v1443, 2147483648
  %v1448 = vmul.f32 %v1445, 1.442695
  %v1449 = vpow.pop %v1448
  %v1450 = vmul.f32 %v1446, 1.442695
  %v1451 = vpow.pop %v1450
  %v1452 = vmul.f32 %v1447, 1.442695
  %v1453 = vpow.pop %v1452
  %v1454 = vadd.f32 %v1449, 1.0
  %v1455 = vadd.f32 %v1451, 1.0
  %v1456 = vadd.f32 %v1453, 1.0
  %v1457 = vrcp.pop %v1454
  %v1458 = vmul.f32 1.0, %v1457
  %v1459 = vrcp.pop %v1455
  %v1460 = vmul.f32 1.0, %v1459
  %v1461 = vrcp.pop %v1456
  %v1462 = vmul.f32 1.0, %v1461
  %v1463 = vtanh.pop %v1444
  %v1464 = vmul.f32 %v1460, %v1149
  %v1465 = vmul.f32 %v1458, %v1463
  %v1466 = vadd.f32 %v1464, %v1465
  %v1467 = vtanh.pop %v1466
  %v1468 = vmul.f32 %v1462, %v1467
  %v1469 = vpack.c.bf16 %v1468, %v1468
  %v1470 = vpack.c.bf16 %v1466, %v1466
  %1471 = vmatprep.subr.bf16.mxu0 0
  %1472 = vmatpush1.bf16.msra.mxu0 %v291
  %1473 = vmatprep.subr.bf16.mxu0 0
  %1474 = vmatpush1.bf16.msra.mxu0 %v292
  %1475 = vmatprep.subr.bf16.mxu0 0
  %1476 = vmatpush1.bf16.msra.mxu0 %v293
  %1477 = vmatprep.subr.bf16.mxu0 0
  %1478 = vmatpush1.bf16.msra.mxu0 %v294
  %1479 = vmatprep.subr.bf16.mxu0 0
  %1480 = vmatpush1.bf16.msra.mxu0 %v295
  %1481 = vmatprep.subr.bf16.mxu0 0
  %1482 = vmatpush1.bf16.msra.mxu0 %v296
  %1483 = vmatprep.subr.bf16.mxu0 0
  %1484 = vmatpush1.bf16.msra.mxu0 %v297
  %1485 = vmatprep.subr.bf16.mxu0 0
  %1486 = vmatpush1.bf16.msra.mxu0 %v298
  %1487 = vmatprep.subr.bf16.mxu0 0
  %1488 = vmatpush1.bf16.msra.mxu0 %v299
  %1489 = vmatprep.subr.bf16.mxu0 0
  %1490 = vmatpush1.bf16.msra.mxu0 %v300
  %1491 = vmatprep.subr.bf16.mxu0 0
  %1492 = vmatpush1.bf16.msra.mxu0 %v301
  %1493 = vmatprep.subr.bf16.mxu0 0
  %1494 = vmatpush1.bf16.msra.mxu0 %v302
  %1495 = vmatprep.subr.bf16.mxu0 0
  %1496 = vmatpush1.bf16.msra.mxu0 %v303
  %1497 = vmatprep.subr.bf16.mxu0 0
  %1498 = vmatpush1.bf16.msra.mxu0 %v304
  %1499 = vmatprep.subr.bf16.mxu0 0
  %1500 = vmatpush1.bf16.msra.mxu0 %v305
  %1501 = vmatprep.subr.bf16.mxu0 0
  %1502 = vmatpush1.bf16.msra.mxu0 %v306
  %1503 = vmatprep.mubr.bf16.mxu0 %v1470
  %1504 = vmatmul.mubr.bf16.gmra.mrb[0].mxu0 %v1469
  %v1505 = vpop.f32.mrb[0].mxu0
  %v1506 = vadd.f32 0.0, %v1505
  %v1507 = vpop.f32.mrb[0].mxu0
  %v1508 = vpop.f32.mrb[0].mxu0
  %v1509 = vpop.f32.mrb[0].mxu0
  %1510 = vdwg.mxu0
  %v1513 = vunpack.c.l.s4 1966171168
  %v1514 = vunpack.c.0.s8 %v1513
  %v1515 = vlaneseq
  %v1516 = vshrl.u32 %v1515, 7
  %v1517 = vsub.s32 %v1514, %v1516
  %v1518 = vrot.slane %v1506, %v1517
  %v1519 = vcombine.high %v1518, %v1518
  %v1521 = vunpack.c.l.s4 1966171168
  %v1522 = vunpack.c.0.s8 %v1521
  %v1523 = vlaneseq
  %v1524 = vshrl.u32 %v1523, 7
  %v1525 = vsub.s32 %v1522, %v1524
  %v1526 = vrot.slane %v1518, %v1525
  %v1528 = vunpack.c.l.s4 1966171168
  %v1529 = vunpack.c.0.s8 %v1528
  %v1530 = vlaneseq
  %v1531 = vshrl.u32 %v1530, 7
  %v1532 = vsub.s32 %v1529, %v1531
  %v1533 = vrot.slane %v1519, %v1532
  %v1534 = vlaneseq
  %v1535 = vshrl.u32 %v1534, 7
  %v1536 = vsub.s32 0, %v1535
  %v1537 = vrot.slane %v1526, %v1536
  %v1538 = vlaneseq
  %v1539 = vshrl.u32 %v1538, 7
  %v1540 = vsub.s32 0, %v1539
  %v1541 = vrot.slane %v1533, %v1540
  %v1544 = vadd.f32 %v1537, %v109
  %v1545 = vadd.f32 %v1541, %v152
  %v1546 = vtanh.pop %v1544
  %v1547 = vtanh.pop %v1545
  %v1548 = vmul.f32 %v1546, %v404
  %v1549 = vmul.f32 %v1547, %v404
  %v1550 = vsel %vm70, %v1548, 0.0
  %1551 = vadd.xlane.f32.xlu0 %v1550
  %v1552 = vpop.xlane.xlu0 %1551
  %v1553 = vsel %vm70, %v1549, 0.0
  %1554 = vadd.xlane.f32.xlu0 %v1553
  %v1555 = vpop.xlane.xlu0 %1554
  %v1558 = vlaneseq
  %v1559 = vshrl.u32 %v1558, 7
  %v1560 = vsub.s32 %v417, %v1559
  %v1561 = vrot.slane %v1552, %v1560
  %v1562 = vlaneseq
  %v1563 = vshrl.u32 %v1562, 7
  %v1564 = vsub.s32 %v417, %v1563
  %v1565 = vrot.slane %v1555, %v1564
  %v1566 = vsel %vm426, %v1565, %v1561
  %v1568 = vsel %vm429, %v1566, -inf
  %1569 = vmax.xlane.f32.xlu0 %v1568
  %v1570 = vpop.xlane.xlu0 %1569
  %v1572 = vlaneseq
  %v1573 = vshrl.u32 %v1572, 7
  %v1574 = vsub.s32 0, %v1573
  %v1575 = vrot.slane %v1570, %v1574
  %v1576 = vlaneseq
  %v1577 = vshrl.u32 %v1576, 7
  %v1578 = vsub.s32 1, %v1577
  %v1579 = vrot.slane %v1570, %v1578
  %v1582 = vsub.f32 %v1552, %v1575
  %v1583 = vsub.f32 %v1555, %v1579
  %v1584 = vmul.f32 %v1582, 1.442695
  %v1585 = vpow.pop %v1584
  %v1586 = vmul.f32 %v1583, 1.442695
  %v1587 = vpow.pop %v1586
  %1589 = vset.pattern.permute.xlu0 0
  %1590 = vperm.xlu0 %1589, %v1585
  %v1591 = vpop.permute.xlu0 %1590
  %1594 = vset.pattern.permute.xlu0 0
  %1595 = vperm.xlu0 %1594, %v1587
  %v1596 = vpop.permute.xlu0 %1595
  %v1598 = vmul.f32 %v1591, %v43
  %v1599 = vmul.f32 %v1596, %v44
  %v1600 = vsel %vm70, %v1598, 0.0
  %v1601 = vrot.slane %v1600, 4
  %v1602 = vadd.f32 %v1600, %v1601
  %v1603 = vrot.slane %v1602, 2
  %v1604 = vadd.f32 %v1602, %v1603
  %v1605 = vrot.slane %v1604, 1
  %v1606 = vadd.f32 %v1604, %v1605
  %v1607 = vsel %vm70, %v1599, 0.0
  %v1608 = vrot.slane %v1607, 4
  %v1609 = vadd.f32 %v1607, %v1608
  %v1610 = vrot.slane %v1609, 2
  %v1611 = vadd.f32 %v1609, %v1610
  %v1612 = vrot.slane %v1611, 1
  %v1613 = vadd.f32 %v1611, %v1612
  %v1614 = vlaneseq
  %v1615 = vshrl.u32 %v1614, 7
  %v1616 = vsub.s32 %v417, %v1615
  %v1617 = vrot.slane %v1591, %v1616
  %v1618 = vlaneseq
  %v1619 = vshrl.u32 %v1618, 7
  %v1620 = vsub.s32 %v417, %v1619
  %v1621 = vrot.slane %v1596, %v1620
  %v1622 = vsel %vm426, %v1621, %v1617
  %v1624 = vsel %vm429, %v1622, 0.0
  %1625 = vadd.xlane.f32.xlu0 %v1624
  %v1626 = vpop.xlane.xlu0 %1625
  %v1627 = vrcp.pop %v1626
  %v1629 = vrot.slane %v1627, 1
  %v1632 = vmul.f32 %v1606, %v1627
  %v1633 = vmul.f32 %v1613, %v1629
  %v1634 = vmul.f32 %v1632, %v500
  %v1635 = vmul.f32 %v1633, %v500
  %v1638 = vrot.slane %v1635, 7
  %v1639 = vsel %vm426, %v1638, %v1634
  %v1641 = vsel %vm509, %v1639, 0.0
  %1642 = vadd.xlane.f32.xlu0 %v1641
  %v1643 = vpop.xlane.xlu0 %1642
  %v1644 = vmul.f32 %v1643, %v517
  %v1645 = vmul.f32 %v1643, %v521
  %v1646 = vmul.f32 %v1643, %v525
  %v1647 = vmul.f32 %v1643, %v529
  %1648 = vmatprep.subr.bf16.mxu0 %v635
  %1649 = vmatpush1.bf16.msra.mxu0 %v634
  %1650 = vmatprep.subr.bf16.mxu0 %v639
  %1651 = vmatpush1.bf16.msra.mxu0 %v638
  %1652 = vmatprep.subr.bf16.mxu0 %v643
  %1653 = vmatpush1.bf16.msra.mxu0 %v642
  %1654 = vmatprep.subr.bf16.mxu0 %v647
  %1655 = vmatpush1.bf16.msra.mxu0 %v646
  %1656 = vmatprep.subr.bf16.mxu0 %v651
  %1657 = vmatpush1.bf16.msra.mxu0 %v650
  %1658 = vmatprep.subr.bf16.mxu0 %v655
  %1659 = vmatpush1.bf16.msra.mxu0 %v654
  %1660 = vmatprep.subr.bf16.mxu0 %v659
  %1661 = vmatpush1.bf16.msra.mxu0 %v658
  %1662 = vmatprep.subr.bf16.mxu0 %v663
  %1663 = vmatpush1.bf16.msra.mxu0 %v662
  %1664 = vmatprep.subr.bf16.mxu0 0
  %1665 = vmatpush1.bf16.msra.mxu0 0
  %1666 = vmatprep.subr.bf16.mxu0 0
  %1667 = vmatpush1.bf16.msra.mxu0 0
  %1668 = vmatprep.subr.bf16.mxu0 0
  %1669 = vmatpush1.bf16.msra.mxu0 0
  %1670 = vmatprep.subr.bf16.mxu0 0
  %1671 = vmatpush1.bf16.msra.mxu0 0
  %1672 = vmatprep.subr.bf16.mxu0 0
  %1673 = vmatpush1.bf16.msra.mxu0 0
  %1674 = vmatprep.subr.bf16.mxu0 0
  %1675 = vmatpush1.bf16.msra.mxu0 0
  %1676 = vmatprep.subr.bf16.mxu0 0
  %1677 = vmatpush1.bf16.msra.mxu0 0
  %1678 = vmatprep.subr.bf16.mxu0 0
  %1679 = vmatpush1.bf16.msra.mxu0 0
  %1680 = vmatprep.mubr.bf16.mxu0 0
  %1681 = vmatmul.mubr.bf16.gmra.mrb[0].mxu0 %v1469
  %v1682 = vpop.f32.mrb[0].mxu0
  %v1683 = vadd.f32 0.0, %v1682
  %v1684 = vpop.f32.mrb[0].mxu0
  %v1685 = vadd.f32 0.0, %v1684
  %v1686 = vpop.f32.mrb[0].mxu0
  %v1687 = vpop.f32.mrb[0].mxu0
  %1688 = vdwg.mxu0
  %1689 = vmatprep.subr.bf16.mxu0 %v637
  %1690 = vmatpush1.bf16.msra.mxu0 %v636
  %1691 = vmatprep.subr.bf16.mxu0 %v641
  %1692 = vmatpush1.bf16.msra.mxu0 %v640
  %1693 = vmatprep.subr.bf16.mxu0 %v645
  %1694 = vmatpush1.bf16.msra.mxu0 %v644
  %1695 = vmatprep.subr.bf16.mxu0 %v649
  %1696 = vmatpush1.bf16.msra.mxu0 %v648
  %1697 = vmatprep.subr.bf16.mxu0 %v653
  %1698 = vmatpush1.bf16.msra.mxu0 %v652
  %1699 = vmatprep.subr.bf16.mxu0 %v657
  %1700 = vmatpush1.bf16.msra.mxu0 %v656
  %1701 = vmatprep.subr.bf16.mxu0 %v661
  %1702 = vmatpush1.bf16.msra.mxu0 %v660
  %1703 = vmatprep.subr.bf16.mxu0 %v665
  %1704 = vmatpush1.bf16.msra.mxu0 %v664
  %1705 = vmatprep.subr.bf16.mxu0 0
  %1706 = vmatpush1.bf16.msra.mxu0 0
  %1707 = vmatprep.subr.bf16.mxu0 0
  %1708 = vmatpush1.bf16.msra.mxu0 0
  %1709 = vmatprep.subr.bf16.mxu0 0
  %1710 = vmatpush1.bf16.msra.mxu0 0
  %1711 = vmatprep.subr.bf16.mxu0 0
  %1712 = vmatpush1.bf16.msra.mxu0 0
  %1713 = vmatprep.subr.bf16.mxu0 0
  %1714 = vmatpush1.bf16.msra.mxu0 0
  %1715 = vmatprep.subr.bf16.mxu0 0
  %1716 = vmatpush1.bf16.msra.mxu0 0
  %1717 = vmatprep.subr.bf16.mxu0 0
  %1718 = vmatpush1.bf16.msra.mxu0 0
  %1719 = vmatprep.subr.bf16.mxu0 0
  %1720 = vmatpush1.bf16.msra.mxu0 0
  %1721 = vmatprep.mubr.bf16.mxu0 0
  %1722 = vmatmul.mubr.bf16.gmra.mrb[0].mxu0 %v1469
  %v1723 = vpop.f32.mrb[0].mxu0
  %v1724 = vadd.f32 0.0, %v1723
  %v1725 = vpop.f32.mrb[0].mxu0
  %v1726 = vadd.f32 0.0, %v1725
  %v1727 = vpop.f32.mrb[0].mxu0
  %v1728 = vpop.f32.mrb[0].mxu0
  %1729 = vdwg.mxu0
  %v1730 = vadd.f32 %v1644, %v1683
  %v1731 = vadd.f32 %v1645, %v1685
  %v1732 = vadd.f32 %v1646, %v1724
  %v1733 = vadd.f32 %v1647, %v1726
  %s1734 = scalar_lea.vmem %s5, 24
  %v1735 = vld [vmem:[%s1734] sm:$0xff]
  %v1737 = vcombine.high %v1735, %v1735
  %v1739 = vunpack.c.l.s4 1983009808
  %v1740 = vunpack.c.0.s8 %v1739
  %v1741 = vlaneseq
  %v1742 = vshrl.u32 %v1741, 7
  %v1743 = vsub.s32 %v1740, %v1742
  %v1744 = vrot.slane %v1735, %v1743
  %v1746 = vunpack.c.l.s4 1983009808
  %v1747 = vunpack.c.0.s8 %v1746
  %v1748 = vlaneseq
  %v1749 = vshrl.u32 %v1748, 7
  %v1750 = vsub.s32 %v1747, %v1749
  %v1751 = vrot.slane %v1737, %v1750
  %v1752 = vcombine.high %v1744, %v1744
  %v1753 = vcombine.high %v1751, %v1751
  %v1758 = vadd.f32 %v1730, %v1744
  %v1759 = vadd.f32 %v1731, %v1752
  %v1760 = vadd.f32 %v1732, %v1751
  %v1761 = vadd.f32 %v1733, %v1753
  %v1762 = vxor.u32 %v1758, 2147483648
  %v1763 = vxor.u32 %v1759, 2147483648
  %v1764 = vxor.u32 %v1760, 2147483648
  %v1765 = vmul.f32 %v1762, 1.442695
  %v1766 = vpow.pop %v1765
  %v1767 = vmul.f32 %v1763, 1.442695
  %v1768 = vpow.pop %v1767
  %v1769 = vmul.f32 %v1764, 1.442695
  %v1770 = vpow.pop %v1769
  %v1771 = vadd.f32 %v1766, 1.0
  %v1772 = vadd.f32 %v1768, 1.0
  %v1773 = vadd.f32 %v1770, 1.0
  %v1774 = vrcp.pop %v1771
  %v1775 = vmul.f32 1.0, %v1774
  %v1776 = vrcp.pop %v1772
  %v1777 = vmul.f32 1.0, %v1776
  %v1778 = vrcp.pop %v1773
  %v1779 = vmul.f32 1.0, %v1778
  %v1780 = vtanh.pop %v1761
  %v1781 = vmul.f32 %v1777, %v1466
  %v1782 = vmul.f32 %v1775, %v1780
  %v1783 = vadd.f32 %v1781, %v1782
  %v1784 = vtanh.pop %v1783
  %v1785 = vmul.f32 %v1779, %v1784
  %v1786 = vpack.c.bf16 %v1785, %v1785
  %v1787 = vpack.c.bf16 %v1783, %v1783
  %1788 = vmatprep.subr.bf16.mxu0 0
  %1789 = vmatpush1.bf16.msra.mxu0 %v291
  %1790 = vmatprep.subr.bf16.mxu0 0
  %1791 = vmatpush1.bf16.msra.mxu0 %v292
  %1792 = vmatprep.subr.bf16.mxu0 0
  %1793 = vmatpush1.bf16.msra.mxu0 %v293
  %1794 = vmatprep.subr.bf16.mxu0 0
  %1795 = vmatpush1.bf16.msra.mxu0 %v294
  %1796 = vmatprep.subr.bf16.mxu0 0
  %1797 = vmatpush1.bf16.msra.mxu0 %v295
  %1798 = vmatprep.subr.bf16.mxu0 0
  %1799 = vmatpush1.bf16.msra.mxu0 %v296
  %1800 = vmatprep.subr.bf16.mxu0 0
  %1801 = vmatpush1.bf16.msra.mxu0 %v297
  %1802 = vmatprep.subr.bf16.mxu0 0
  %1803 = vmatpush1.bf16.msra.mxu0 %v298
  %1804 = vmatprep.subr.bf16.mxu0 0
  %1805 = vmatpush1.bf16.msra.mxu0 %v299
  %1806 = vmatprep.subr.bf16.mxu0 0
  %1807 = vmatpush1.bf16.msra.mxu0 %v300
  %1808 = vmatprep.subr.bf16.mxu0 0
  %1809 = vmatpush1.bf16.msra.mxu0 %v301
  %1810 = vmatprep.subr.bf16.mxu0 0
  %1811 = vmatpush1.bf16.msra.mxu0 %v302
  %1812 = vmatprep.subr.bf16.mxu0 0
  %1813 = vmatpush1.bf16.msra.mxu0 %v303
  %1814 = vmatprep.subr.bf16.mxu0 0
  %1815 = vmatpush1.bf16.msra.mxu0 %v304
  %1816 = vmatprep.subr.bf16.mxu0 0
  %1817 = vmatpush1.bf16.msra.mxu0 %v305
  %1818 = vmatprep.subr.bf16.mxu0 0
  %1819 = vmatpush1.bf16.msra.mxu0 %v306
  %1820 = vmatprep.mubr.bf16.mxu0 %v1787
  %1821 = vmatmul.mubr.bf16.gmra.mrb[0].mxu0 %v1786
  %v1822 = vpop.f32.mrb[0].mxu0
  %v1823 = vadd.f32 0.0, %v1822
  %v1824 = vpop.f32.mrb[0].mxu0
  %v1825 = vpop.f32.mrb[0].mxu0
  %v1826 = vpop.f32.mrb[0].mxu0
  %1827 = vdwg.mxu0
  %v1830 = vunpack.c.l.s4 1966171168
  %v1831 = vunpack.c.0.s8 %v1830
  %v1832 = vlaneseq
  %v1833 = vshrl.u32 %v1832, 7
  %v1834 = vsub.s32 %v1831, %v1833
  %v1835 = vrot.slane %v1823, %v1834
  %v1836 = vcombine.high %v1835, %v1835
  %v1838 = vunpack.c.l.s4 1966171168
  %v1839 = vunpack.c.0.s8 %v1838
  %v1840 = vlaneseq
  %v1841 = vshrl.u32 %v1840, 7
  %v1842 = vsub.s32 %v1839, %v1841
  %v1843 = vrot.slane %v1835, %v1842
  %v1845 = vunpack.c.l.s4 1966171168
  %v1846 = vunpack.c.0.s8 %v1845
  %v1847 = vlaneseq
  %v1848 = vshrl.u32 %v1847, 7
  %v1849 = vsub.s32 %v1846, %v1848
  %v1850 = vrot.slane %v1836, %v1849
  %v1851 = vlaneseq
  %v1852 = vshrl.u32 %v1851, 7
  %v1853 = vsub.s32 0, %v1852
  %v1854 = vrot.slane %v1843, %v1853
  %v1855 = vlaneseq
  %v1856 = vshrl.u32 %v1855, 7
  %v1857 = vsub.s32 0, %v1856
  %v1858 = vrot.slane %v1850, %v1857
  %v1861 = vadd.f32 %v1854, %v109
  %v1862 = vadd.f32 %v1858, %v152
  %v1863 = vtanh.pop %v1861
  %v1864 = vtanh.pop %v1862
  %v1865 = vmul.f32 %v1863, %v404
  %v1866 = vmul.f32 %v1864, %v404
  %v1867 = vsel %vm70, %v1865, 0.0
  %1868 = vadd.xlane.f32.xlu0 %v1867
  %v1869 = vpop.xlane.xlu0 %1868
  %v1870 = vsel %vm70, %v1866, 0.0
  %1871 = vadd.xlane.f32.xlu0 %v1870
  %v1872 = vpop.xlane.xlu0 %1871
  %v1875 = vlaneseq
  %v1876 = vshrl.u32 %v1875, 7
  %v1877 = vsub.s32 %v417, %v1876
  %v1878 = vrot.slane %v1869, %v1877
  %v1879 = vlaneseq
  %v1880 = vshrl.u32 %v1879, 7
  %v1881 = vsub.s32 %v417, %v1880
  %v1882 = vrot.slane %v1872, %v1881
  %v1883 = vsel %vm426, %v1882, %v1878
  %v1885 = vsel %vm429, %v1883, -inf
  %1886 = vmax.xlane.f32.xlu0 %v1885
  %v1887 = vpop.xlane.xlu0 %1886
  %v1889 = vlaneseq
  %v1890 = vshrl.u32 %v1889, 7
  %v1891 = vsub.s32 0, %v1890
  %v1892 = vrot.slane %v1887, %v1891
  %v1893 = vlaneseq
  %v1894 = vshrl.u32 %v1893, 7
  %v1895 = vsub.s32 1, %v1894
  %v1896 = vrot.slane %v1887, %v1895
  %v1899 = vsub.f32 %v1869, %v1892
  %v1900 = vsub.f32 %v1872, %v1896
  %v1901 = vmul.f32 %v1899, 1.442695
  %v1902 = vpow.pop %v1901
  %v1903 = vmul.f32 %v1900, 1.442695
  %v1904 = vpow.pop %v1903
  %1906 = vset.pattern.permute.xlu0 0
  %1907 = vperm.xlu0 %1906, %v1902
  %v1908 = vpop.permute.xlu0 %1907
  %1911 = vset.pattern.permute.xlu0 0
  %1912 = vperm.xlu0 %1911, %v1904
  %v1913 = vpop.permute.xlu0 %1912
  %v1915 = vmul.f32 %v1908, %v43
  %v1916 = vmul.f32 %v1913, %v44
  %v1917 = vsel %vm70, %v1915, 0.0
  %v1918 = vrot.slane %v1917, 4
  %v1919 = vadd.f32 %v1917, %v1918
  %v1920 = vrot.slane %v1919, 2
  %v1921 = vadd.f32 %v1919, %v1920
  %v1922 = vrot.slane %v1921, 1
  %v1923 = vadd.f32 %v1921, %v1922
  %v1924 = vsel %vm70, %v1916, 0.0
  %v1925 = vrot.slane %v1924, 4
  %v1926 = vadd.f32 %v1924, %v1925
  %v1927 = vrot.slane %v1926, 2
  %v1928 = vadd.f32 %v1926, %v1927
  %v1929 = vrot.slane %v1928, 1
  %v1930 = vadd.f32 %v1928, %v1929
  %v1931 = vlaneseq
  %v1932 = vshrl.u32 %v1931, 7
  %v1933 = vsub.s32 %v417, %v1932
  %v1934 = vrot.slane %v1908, %v1933
  %v1935 = vlaneseq
  %v1936 = vshrl.u32 %v1935, 7
  %v1937 = vsub.s32 %v417, %v1936
  %v1938 = vrot.slane %v1913, %v1937
  %v1939 = vsel %vm426, %v1938, %v1934
  %v1941 = vsel %vm429, %v1939, 0.0
  %1942 = vadd.xlane.f32.xlu0 %v1941
  %v1943 = vpop.xlane.xlu0 %1942
  %v1944 = vrcp.pop %v1943
  %v1946 = vrot.slane %v1944, 1
  %v1949 = vmul.f32 %v1923, %v1944
  %v1950 = vmul.f32 %v1930, %v1946
  %v1951 = vmul.f32 %v1949, %v500
  %v1952 = vmul.f32 %v1950, %v500
  %v1955 = vrot.slane %v1952, 7
  %v1956 = vsel %vm426, %v1955, %v1951
  %v1958 = vsel %vm509, %v1956, 0.0
  %1959 = vadd.xlane.f32.xlu0 %v1958
  %v1960 = vpop.xlane.xlu0 %1959
  %v1961 = vmul.f32 %v1960, %v517
  %v1962 = vmul.f32 %v1960, %v521
  %v1963 = vmul.f32 %v1960, %v525
  %v1964 = vmul.f32 %v1960, %v529
  %1965 = vmatprep.subr.bf16.mxu0 %v635
  %1966 = vmatpush1.bf16.msra.mxu0 %v634
  %1967 = vmatprep.subr.bf16.mxu0 %v639
  %1968 = vmatpush1.bf16.msra.mxu0 %v638
  %1969 = vmatprep.subr.bf16.mxu0 %v643
  %1970 = vmatpush1.bf16.msra.mxu0 %v642
  %1971 = vmatprep.subr.bf16.mxu0 %v647
  %1972 = vmatpush1.bf16.msra.mxu0 %v646
  %1973 = vmatprep.subr.bf16.mxu0 %v651
  %1974 = vmatpush1.bf16.msra.mxu0 %v650
  %1975 = vmatprep.subr.bf16.mxu0 %v655
  %1976 = vmatpush1.bf16.msra.mxu0 %v654
  %1977 = vmatprep.subr.bf16.mxu0 %v659
  %1978 = vmatpush1.bf16.msra.mxu0 %v658
  %1979 = vmatprep.subr.bf16.mxu0 %v663
  %1980 = vmatpush1.bf16.msra.mxu0 %v662
  %1981 = vmatprep.subr.bf16.mxu0 0
  %1982 = vmatpush1.bf16.msra.mxu0 0
  %1983 = vmatprep.subr.bf16.mxu0 0
  %1984 = vmatpush1.bf16.msra.mxu0 0
  %1985 = vmatprep.subr.bf16.mxu0 0
  %1986 = vmatpush1.bf16.msra.mxu0 0
  %1987 = vmatprep.subr.bf16.mxu0 0
  %1988 = vmatpush1.bf16.msra.mxu0 0
  %1989 = vmatprep.subr.bf16.mxu0 0
  %1990 = vmatpush1.bf16.msra.mxu0 0
  %1991 = vmatprep.subr.bf16.mxu0 0
  %1992 = vmatpush1.bf16.msra.mxu0 0
  %1993 = vmatprep.subr.bf16.mxu0 0
  %1994 = vmatpush1.bf16.msra.mxu0 0
  %1995 = vmatprep.subr.bf16.mxu0 0
  %1996 = vmatpush1.bf16.msra.mxu0 0
  %1997 = vmatprep.mubr.bf16.mxu0 0
  %1998 = vmatmul.mubr.bf16.gmra.mrb[0].mxu0 %v1786
  %v1999 = vpop.f32.mrb[0].mxu0
  %v2000 = vadd.f32 0.0, %v1999
  %v2001 = vpop.f32.mrb[0].mxu0
  %v2002 = vadd.f32 0.0, %v2001
  %v2003 = vpop.f32.mrb[0].mxu0
  %v2004 = vpop.f32.mrb[0].mxu0
  %2005 = vdwg.mxu0
  %2006 = vmatprep.subr.bf16.mxu0 %v637
  %2007 = vmatpush1.bf16.msra.mxu0 %v636
  %2008 = vmatprep.subr.bf16.mxu0 %v641
  %2009 = vmatpush1.bf16.msra.mxu0 %v640
  %2010 = vmatprep.subr.bf16.mxu0 %v645
  %2011 = vmatpush1.bf16.msra.mxu0 %v644
  %2012 = vmatprep.subr.bf16.mxu0 %v649
  %2013 = vmatpush1.bf16.msra.mxu0 %v648
  %2014 = vmatprep.subr.bf16.mxu0 %v653
  %2015 = vmatpush1.bf16.msra.mxu0 %v652
  %2016 = vmatprep.subr.bf16.mxu0 %v657
  %2017 = vmatpush1.bf16.msra.mxu0 %v656
  %2018 = vmatprep.subr.bf16.mxu0 %v661
  %2019 = vmatpush1.bf16.msra.mxu0 %v660
  %2020 = vmatprep.subr.bf16.mxu0 %v665
  %2021 = vmatpush1.bf16.msra.mxu0 %v664
  %2022 = vmatprep.subr.bf16.mxu0 0
  %2023 = vmatpush1.bf16.msra.mxu0 0
  %2024 = vmatprep.subr.bf16.mxu0 0
  %2025 = vmatpush1.bf16.msra.mxu0 0
  %2026 = vmatprep.subr.bf16.mxu0 0
  %2027 = vmatpush1.bf16.msra.mxu0 0
  %2028 = vmatprep.subr.bf16.mxu0 0
  %2029 = vmatpush1.bf16.msra.mxu0 0
  %2030 = vmatprep.subr.bf16.mxu0 0
  %2031 = vmatpush1.bf16.msra.mxu0 0
  %2032 = vmatprep.subr.bf16.mxu0 0
  %2033 = vmatpush1.bf16.msra.mxu0 0
  %2034 = vmatprep.subr.bf16.mxu0 0
  %2035 = vmatpush1.bf16.msra.mxu0 0
  %2036 = vmatprep.subr.bf16.mxu0 0
  %2037 = vmatpush1.bf16.msra.mxu0 0
  %2038 = vmatprep.mubr.bf16.mxu0 0
  %2039 = vmatmul.mubr.bf16.gmra.mrb[0].mxu0 %v1786
  %v2040 = vpop.f32.mrb[0].mxu0
  %v2041 = vadd.f32 0.0, %v2040
  %v2042 = vpop.f32.mrb[0].mxu0
  %v2043 = vadd.f32 0.0, %v2042
  %v2044 = vpop.f32.mrb[0].mxu0
  %v2045 = vpop.f32.mrb[0].mxu0
  %2046 = vdwg.mxu0
  %v2047 = vadd.f32 %v1961, %v2000
  %v2048 = vadd.f32 %v1962, %v2002
  %v2049 = vadd.f32 %v1963, %v2041
  %v2050 = vadd.f32 %v1964, %v2043
  %s2051 = scalar_lea.vmem %s5, 32
  %v2052 = vld [vmem:[%s2051] sm:$0xff]
  %v2054 = vcombine.high %v2052, %v2052
  %v2056 = vunpack.c.l.s4 1983009808
  %v2057 = vunpack.c.0.s8 %v2056
  %v2058 = vlaneseq
  %v2059 = vshrl.u32 %v2058, 7
  %v2060 = vsub.s32 %v2057, %v2059
  %v2061 = vrot.slane %v2052, %v2060
  %v2063 = vunpack.c.l.s4 1983009808
  %v2064 = vunpack.c.0.s8 %v2063
  %v2065 = vlaneseq
  %v2066 = vshrl.u32 %v2065, 7
  %v2067 = vsub.s32 %v2064, %v2066
  %v2068 = vrot.slane %v2054, %v2067
  %v2069 = vcombine.high %v2061, %v2061
  %v2070 = vcombine.high %v2068, %v2068
  %v2075 = vadd.f32 %v2047, %v2061
  %v2076 = vadd.f32 %v2048, %v2069
  %v2077 = vadd.f32 %v2049, %v2068
  %v2078 = vadd.f32 %v2050, %v2070
  %v2079 = vxor.u32 %v2075, 2147483648
  %v2080 = vxor.u32 %v2076, 2147483648
  %v2081 = vxor.u32 %v2077, 2147483648
  %v2082 = vmul.f32 %v2079, 1.442695
  %v2083 = vpow.pop %v2082
  %v2084 = vmul.f32 %v2080, 1.442695
  %v2085 = vpow.pop %v2084
  %v2086 = vmul.f32 %v2081, 1.442695
  %v2087 = vpow.pop %v2086
  %v2088 = vadd.f32 %v2083, 1.0
  %v2089 = vadd.f32 %v2085, 1.0
  %v2090 = vadd.f32 %v2087, 1.0
  %v2091 = vrcp.pop %v2088
  %v2092 = vmul.f32 1.0, %v2091
  %v2093 = vrcp.pop %v2089
  %v2094 = vmul.f32 1.0, %v2093
  %v2095 = vrcp.pop %v2090
  %v2096 = vmul.f32 1.0, %v2095
  %v2097 = vtanh.pop %v2078
  %v2098 = vmul.f32 %v2094, %v1783
  %v2099 = vmul.f32 %v2092, %v2097
  %v2100 = vadd.f32 %v2098, %v2099
  %v2101 = vtanh.pop %v2100
  %v2102 = vmul.f32 %v2096, %v2101
  %v2103 = vpack.c.bf16 %v2102, %v2102
  %v2104 = vpack.c.bf16 %v2100, %v2100
  %2105 = vmatprep.subr.bf16.mxu0 0
  %2106 = vmatpush1.bf16.msra.mxu0 %v291
  %2107 = vmatprep.subr.bf16.mxu0 0
  %2108 = vmatpush1.bf16.msra.mxu0 %v292
  %2109 = vmatprep.subr.bf16.mxu0 0
  %2110 = vmatpush1.bf16.msra.mxu0 %v293
  %2111 = vmatprep.subr.bf16.mxu0 0
  %2112 = vmatpush1.bf16.msra.mxu0 %v294
  %2113 = vmatprep.subr.bf16.mxu0 0
  %2114 = vmatpush1.bf16.msra.mxu0 %v295
  %2115 = vmatprep.subr.bf16.mxu0 0
  %2116 = vmatpush1.bf16.msra.mxu0 %v296
  %2117 = vmatprep.subr.bf16.mxu0 0
  %2118 = vmatpush1.bf16.msra.mxu0 %v297
  %2119 = vmatprep.subr.bf16.mxu0 0
  %2120 = vmatpush1.bf16.msra.mxu0 %v298
  %2121 = vmatprep.subr.bf16.mxu0 0
  %2122 = vmatpush1.bf16.msra.mxu0 %v299
  %2123 = vmatprep.subr.bf16.mxu0 0
  %2124 = vmatpush1.bf16.msra.mxu0 %v300
  %2125 = vmatprep.subr.bf16.mxu0 0
  %2126 = vmatpush1.bf16.msra.mxu0 %v301
  %2127 = vmatprep.subr.bf16.mxu0 0
  %2128 = vmatpush1.bf16.msra.mxu0 %v302
  %2129 = vmatprep.subr.bf16.mxu0 0
  %2130 = vmatpush1.bf16.msra.mxu0 %v303
  %2131 = vmatprep.subr.bf16.mxu0 0
  %2132 = vmatpush1.bf16.msra.mxu0 %v304
  %2133 = vmatprep.subr.bf16.mxu0 0
  %2134 = vmatpush1.bf16.msra.mxu0 %v305
  %2135 = vmatprep.subr.bf16.mxu0 0
  %2136 = vmatpush1.bf16.msra.mxu0 %v306
  %2137 = vmatprep.mubr.bf16.mxu0 %v2104
  %2138 = vmatmul.mubr.bf16.gmra.mrb[0].mxu0 %v2103
  %v2139 = vpop.f32.mrb[0].mxu0
  %v2140 = vadd.f32 0.0, %v2139
  %v2141 = vpop.f32.mrb[0].mxu0
  %v2142 = vpop.f32.mrb[0].mxu0
  %v2143 = vpop.f32.mrb[0].mxu0
  %2144 = vdwg.mxu0
  %v2147 = vunpack.c.l.s4 1966171168
  %v2148 = vunpack.c.0.s8 %v2147
  %v2149 = vlaneseq
  %v2150 = vshrl.u32 %v2149, 7
  %v2151 = vsub.s32 %v2148, %v2150
  %v2152 = vrot.slane %v2140, %v2151
  %v2153 = vcombine.high %v2152, %v2152
  %v2155 = vunpack.c.l.s4 1966171168
  %v2156 = vunpack.c.0.s8 %v2155
  %v2157 = vlaneseq
  %v2158 = vshrl.u32 %v2157, 7
  %v2159 = vsub.s32 %v2156, %v2158
  %v2160 = vrot.slane %v2152, %v2159
  %v2162 = vunpack.c.l.s4 1966171168
  %v2163 = vunpack.c.0.s8 %v2162
  %v2164 = vlaneseq
  %v2165 = vshrl.u32 %v2164, 7
  %v2166 = vsub.s32 %v2163, %v2165
  %v2167 = vrot.slane %v2153, %v2166
  %v2168 = vlaneseq
  %v2169 = vshrl.u32 %v2168, 7
  %v2170 = vsub.s32 0, %v2169
  %v2171 = vrot.slane %v2160, %v2170
  %v2172 = vlaneseq
  %v2173 = vshrl.u32 %v2172, 7
  %v2174 = vsub.s32 0, %v2173
  %v2175 = vrot.slane %v2167, %v2174
  %v2178 = vadd.f32 %v2171, %v109
  %v2179 = vadd.f32 %v2175, %v152
  %v2180 = vtanh.pop %v2178
  %v2181 = vtanh.pop %v2179
  %v2182 = vmul.f32 %v2180, %v404
  %v2183 = vmul.f32 %v2181, %v404
  %v2184 = vsel %vm70, %v2182, 0.0
  %2185 = vadd.xlane.f32.xlu0 %v2184
  %v2186 = vpop.xlane.xlu0 %2185
  %v2187 = vsel %vm70, %v2183, 0.0
  %2188 = vadd.xlane.f32.xlu0 %v2187
  %v2189 = vpop.xlane.xlu0 %2188
  %v2192 = vlaneseq
  %v2193 = vshrl.u32 %v2192, 7
  %v2194 = vsub.s32 %v417, %v2193
  %v2195 = vrot.slane %v2186, %v2194
  %v2196 = vlaneseq
  %v2197 = vshrl.u32 %v2196, 7
  %v2198 = vsub.s32 %v417, %v2197
  %v2199 = vrot.slane %v2189, %v2198
  %v2200 = vsel %vm426, %v2199, %v2195
  %v2202 = vsel %vm429, %v2200, -inf
  %2203 = vmax.xlane.f32.xlu0 %v2202
  %v2204 = vpop.xlane.xlu0 %2203
  %v2206 = vlaneseq
  %v2207 = vshrl.u32 %v2206, 7
  %v2208 = vsub.s32 0, %v2207
  %v2209 = vrot.slane %v2204, %v2208
  %v2210 = vlaneseq
  %v2211 = vshrl.u32 %v2210, 7
  %v2212 = vsub.s32 1, %v2211
  %v2213 = vrot.slane %v2204, %v2212
  %v2216 = vsub.f32 %v2186, %v2209
  %v2217 = vsub.f32 %v2189, %v2213
  %v2218 = vmul.f32 %v2216, 1.442695
  %v2219 = vpow.pop %v2218
  %v2220 = vmul.f32 %v2217, 1.442695
  %v2221 = vpow.pop %v2220
  %2223 = vset.pattern.permute.xlu0 0
  %2224 = vperm.xlu0 %2223, %v2219
  %v2225 = vpop.permute.xlu0 %2224
  %2228 = vset.pattern.permute.xlu0 0
  %2229 = vperm.xlu0 %2228, %v2221
  %v2230 = vpop.permute.xlu0 %2229
  %v2232 = vmul.f32 %v2225, %v43
  %v2233 = vmul.f32 %v2230, %v44
  %v2234 = vsel %vm70, %v2232, 0.0
  %v2235 = vrot.slane %v2234, 4
  %v2236 = vadd.f32 %v2234, %v2235
  %v2237 = vrot.slane %v2236, 2
  %v2238 = vadd.f32 %v2236, %v2237
  %v2239 = vrot.slane %v2238, 1
  %v2240 = vadd.f32 %v2238, %v2239
  %v2241 = vsel %vm70, %v2233, 0.0
  %v2242 = vrot.slane %v2241, 4
  %v2243 = vadd.f32 %v2241, %v2242
  %v2244 = vrot.slane %v2243, 2
  %v2245 = vadd.f32 %v2243, %v2244
  %v2246 = vrot.slane %v2245, 1
  %v2247 = vadd.f32 %v2245, %v2246
  %v2248 = vlaneseq
  %v2249 = vshrl.u32 %v2248, 7
  %v2250 = vsub.s32 %v417, %v2249
  %v2251 = vrot.slane %v2225, %v2250
  %v2252 = vlaneseq
  %v2253 = vshrl.u32 %v2252, 7
  %v2254 = vsub.s32 %v417, %v2253
  %v2255 = vrot.slane %v2230, %v2254
  %v2256 = vsel %vm426, %v2255, %v2251
  %v2258 = vsel %vm429, %v2256, 0.0
  %2259 = vadd.xlane.f32.xlu0 %v2258
  %v2260 = vpop.xlane.xlu0 %2259
  %v2261 = vrcp.pop %v2260
  %v2263 = vrot.slane %v2261, 1
  %v2266 = vmul.f32 %v2240, %v2261
  %v2267 = vmul.f32 %v2247, %v2263
  %v2268 = vmul.f32 %v2266, %v500
  %v2269 = vmul.f32 %v2267, %v500
  %v2272 = vrot.slane %v2269, 7
  %v2273 = vsel %vm426, %v2272, %v2268
  %v2275 = vsel %vm509, %v2273, 0.0
  %2276 = vadd.xlane.f32.xlu0 %v2275
  %v2277 = vpop.xlane.xlu0 %2276
  %v2278 = vmul.f32 %v2277, %v517
  %v2279 = vmul.f32 %v2277, %v521
  %v2280 = vmul.f32 %v2277, %v525
  %v2281 = vmul.f32 %v2277, %v529
  %2282 = vmatprep.subr.bf16.mxu0 %v635
  %2283 = vmatpush1.bf16.msra.mxu0 %v634
  %2284 = vmatprep.subr.bf16.mxu0 %v639
  %2285 = vmatpush1.bf16.msra.mxu0 %v638
  %2286 = vmatprep.subr.bf16.mxu0 %v643
  %2287 = vmatpush1.bf16.msra.mxu0 %v642
  %2288 = vmatprep.subr.bf16.mxu0 %v647
  %2289 = vmatpush1.bf16.msra.mxu0 %v646
  %2290 = vmatprep.subr.bf16.mxu0 %v651
  %2291 = vmatpush1.bf16.msra.mxu0 %v650
  %2292 = vmatprep.subr.bf16.mxu0 %v655
  %2293 = vmatpush1.bf16.msra.mxu0 %v654
  %2294 = vmatprep.subr.bf16.mxu0 %v659
  %2295 = vmatpush1.bf16.msra.mxu0 %v658
  %2296 = vmatprep.subr.bf16.mxu0 %v663
  %2297 = vmatpush1.bf16.msra.mxu0 %v662
  %2298 = vmatprep.subr.bf16.mxu0 0
  %2299 = vmatpush1.bf16.msra.mxu0 0
  %2300 = vmatprep.subr.bf16.mxu0 0
  %2301 = vmatpush1.bf16.msra.mxu0 0
  %2302 = vmatprep.subr.bf16.mxu0 0
  %2303 = vmatpush1.bf16.msra.mxu0 0
  %2304 = vmatprep.subr.bf16.mxu0 0
  %2305 = vmatpush1.bf16.msra.mxu0 0
  %2306 = vmatprep.subr.bf16.mxu0 0
  %2307 = vmatpush1.bf16.msra.mxu0 0
  %2308 = vmatprep.subr.bf16.mxu0 0
  %2309 = vmatpush1.bf16.msra.mxu0 0
  %2310 = vmatprep.subr.bf16.mxu0 0
  %2311 = vmatpush1.bf16.msra.mxu0 0
  %2312 = vmatprep.subr.bf16.mxu0 0
  %2313 = vmatpush1.bf16.msra.mxu0 0
  %2314 = vmatprep.mubr.bf16.mxu0 0
  %2315 = vmatmul.mubr.bf16.gmra.mrb[0].mxu0 %v2103
  %v2316 = vpop.f32.mrb[0].mxu0
  %v2317 = vadd.f32 0.0, %v2316
  %v2318 = vpop.f32.mrb[0].mxu0
  %v2319 = vadd.f32 0.0, %v2318
  %v2320 = vpop.f32.mrb[0].mxu0
  %v2321 = vpop.f32.mrb[0].mxu0
  %2322 = vdwg.mxu0
  %2323 = vmatprep.subr.bf16.mxu0 %v637
  %2324 = vmatpush1.bf16.msra.mxu0 %v636
  %2325 = vmatprep.subr.bf16.mxu0 %v641
  %2326 = vmatpush1.bf16.msra.mxu0 %v640
  %2327 = vmatprep.subr.bf16.mxu0 %v645
  %2328 = vmatpush1.bf16.msra.mxu0 %v644
  %2329 = vmatprep.subr.bf16.mxu0 %v649
  %2330 = vmatpush1.bf16.msra.mxu0 %v648
  %2331 = vmatprep.subr.bf16.mxu0 %v653
  %2332 = vmatpush1.bf16.msra.mxu0 %v652
  %2333 = vmatprep.subr.bf16.mxu0 %v657
  %2334 = vmatpush1.bf16.msra.mxu0 %v656
  %2335 = vmatprep.subr.bf16.mxu0 %v661
  %2336 = vmatpush1.bf16.msra.mxu0 %v660
  %2337 = vmatprep.subr.bf16.mxu0 %v665
  %2338 = vmatpush1.bf16.msra.mxu0 %v664
  %2339 = vmatprep.subr.bf16.mxu0 0
  %2340 = vmatpush1.bf16.msra.mxu0 0
  %2341 = vmatprep.subr.bf16.mxu0 0
  %2342 = vmatpush1.bf16.msra.mxu0 0
  %2343 = vmatprep.subr.bf16.mxu0 0
  %2344 = vmatpush1.bf16.msra.mxu0 0
  %2345 = vmatprep.subr.bf16.mxu0 0
  %2346 = vmatpush1.bf16.msra.mxu0 0
  %2347 = vmatprep.subr.bf16.mxu0 0
  %2348 = vmatpush1.bf16.msra.mxu0 0
  %2349 = vmatprep.subr.bf16.mxu0 0
  %2350 = vmatpush1.bf16.msra.mxu0 0
  %2351 = vmatprep.subr.bf16.mxu0 0
  %2352 = vmatpush1.bf16.msra.mxu0 0
  %2353 = vmatprep.subr.bf16.mxu0 0
  %2354 = vmatpush1.bf16.msra.mxu0 0
  %2355 = vmatprep.mubr.bf16.mxu0 0
  %2356 = vmatmul.mubr.bf16.gmra.mrb[0].mxu0 %v2103
  %v2357 = vpop.f32.mrb[0].mxu0
  %v2358 = vadd.f32 0.0, %v2357
  %v2359 = vpop.f32.mrb[0].mxu0
  %v2360 = vadd.f32 0.0, %v2359
  %v2361 = vpop.f32.mrb[0].mxu0
  %v2362 = vpop.f32.mrb[0].mxu0
  %2363 = vdwg.mxu0
  %v2364 = vadd.f32 %v2278, %v2317
  %v2365 = vadd.f32 %v2279, %v2319
  %v2366 = vadd.f32 %v2280, %v2358
  %v2367 = vadd.f32 %v2281, %v2360
  %s2368 = scalar_lea.vmem %s5, 40
  %v2369 = vld [vmem:[%s2368] sm:$0xff]
  %v2371 = vcombine.high %v2369, %v2369
  %v2373 = vunpack.c.l.s4 1983009808
  %v2374 = vunpack.c.0.s8 %v2373
  %v2375 = vlaneseq
  %v2376 = vshrl.u32 %v2375, 7
  %v2377 = vsub.s32 %v2374, %v2376
  %v2378 = vrot.slane %v2369, %v2377
  %v2380 = vunpack.c.l.s4 1983009808
  %v2381 = vunpack.c.0.s8 %v2380
  %v2382 = vlaneseq
  %v2383 = vshrl.u32 %v2382, 7
  %v2384 = vsub.s32 %v2381, %v2383
  %v2385 = vrot.slane %v2371, %v2384
  %v2386 = vcombine.high %v2378, %v2378
  %v2387 = vcombine.high %v2385, %v2385
  %v2392 = vadd.f32 %v2364, %v2378
  %v2393 = vadd.f32 %v2365, %v2386
  %v2394 = vadd.f32 %v2366, %v2385
  %v2395 = vadd.f32 %v2367, %v2387
  %v2396 = vxor.u32 %v2392, 2147483648
  %v2397 = vxor.u32 %v2393, 2147483648
  %v2398 = vxor.u32 %v2394, 2147483648
  %v2399 = vmul.f32 %v2396, 1.442695
  %v2400 = vpow.pop %v2399
  %v2401 = vmul.f32 %v2397, 1.442695
  %v2402 = vpow.pop %v2401
  %v2403 = vmul.f32 %v2398, 1.442695
  %v2404 = vpow.pop %v2403
  %v2405 = vadd.f32 %v2400, 1.0
  %v2406 = vadd.f32 %v2402, 1.0
  %v2407 = vadd.f32 %v2404, 1.0
  %v2408 = vrcp.pop %v2405
  %v2409 = vmul.f32 1.0, %v2408
  %v2410 = vrcp.pop %v2406
  %v2411 = vmul.f32 1.0, %v2410
  %v2412 = vrcp.pop %v2407
  %v2413 = vmul.f32 1.0, %v2412
  %v2414 = vtanh.pop %v2395
  %v2415 = vmul.f32 %v2411, %v2100
  %v2416 = vmul.f32 %v2409, %v2414
  %v2417 = vadd.f32 %v2415, %v2416
  %v2418 = vtanh.pop %v2417
  %v2419 = vmul.f32 %v2413, %v2418
  %v2420 = vpack.c.bf16 %v2419, %v2419
  %v2421 = vpack.c.bf16 %v2417, %v2417
  %2422 = vmatprep.subr.bf16.mxu0 0
  %2423 = vmatpush1.bf16.msra.mxu0 %v291
  %2424 = vmatprep.subr.bf16.mxu0 0
  %2425 = vmatpush1.bf16.msra.mxu0 %v292
  %2426 = vmatprep.subr.bf16.mxu0 0
  %2427 = vmatpush1.bf16.msra.mxu0 %v293
  %2428 = vmatprep.subr.bf16.mxu0 0
  %2429 = vmatpush1.bf16.msra.mxu0 %v294
  %2430 = vmatprep.subr.bf16.mxu0 0
  %2431 = vmatpush1.bf16.msra.mxu0 %v295
  %2432 = vmatprep.subr.bf16.mxu0 0
  %2433 = vmatpush1.bf16.msra.mxu0 %v296
  %2434 = vmatprep.subr.bf16.mxu0 0
  %2435 = vmatpush1.bf16.msra.mxu0 %v297
  %2436 = vmatprep.subr.bf16.mxu0 0
  %2437 = vmatpush1.bf16.msra.mxu0 %v298
  %2438 = vmatprep.subr.bf16.mxu0 0
  %2439 = vmatpush1.bf16.msra.mxu0 %v299
  %2440 = vmatprep.subr.bf16.mxu0 0
  %2441 = vmatpush1.bf16.msra.mxu0 %v300
  %2442 = vmatprep.subr.bf16.mxu0 0
  %2443 = vmatpush1.bf16.msra.mxu0 %v301
  %2444 = vmatprep.subr.bf16.mxu0 0
  %2445 = vmatpush1.bf16.msra.mxu0 %v302
  %2446 = vmatprep.subr.bf16.mxu0 0
  %2447 = vmatpush1.bf16.msra.mxu0 %v303
  %2448 = vmatprep.subr.bf16.mxu0 0
  %2449 = vmatpush1.bf16.msra.mxu0 %v304
  %2450 = vmatprep.subr.bf16.mxu0 0
  %2451 = vmatpush1.bf16.msra.mxu0 %v305
  %2452 = vmatprep.subr.bf16.mxu0 0
  %2453 = vmatpush1.bf16.msra.mxu0 %v306
  %2454 = vmatprep.mubr.bf16.mxu0 %v2421
  %2455 = vmatmul.mubr.bf16.gmra.mrb[0].mxu0 %v2420
  %v2456 = vpop.f32.mrb[0].mxu0
  %v2457 = vadd.f32 0.0, %v2456
  %v2458 = vpop.f32.mrb[0].mxu0
  %v2459 = vpop.f32.mrb[0].mxu0
  %v2460 = vpop.f32.mrb[0].mxu0
  %2461 = vdwg.mxu0
  %v2464 = vunpack.c.l.s4 1966171168
  %v2465 = vunpack.c.0.s8 %v2464
  %v2466 = vlaneseq
  %v2467 = vshrl.u32 %v2466, 7
  %v2468 = vsub.s32 %v2465, %v2467
  %v2469 = vrot.slane %v2457, %v2468
  %v2470 = vcombine.high %v2469, %v2469
  %v2472 = vunpack.c.l.s4 1966171168
  %v2473 = vunpack.c.0.s8 %v2472
  %v2474 = vlaneseq
  %v2475 = vshrl.u32 %v2474, 7
  %v2476 = vsub.s32 %v2473, %v2475
  %v2477 = vrot.slane %v2469, %v2476
  %v2479 = vunpack.c.l.s4 1966171168
  %v2480 = vunpack.c.0.s8 %v2479
  %v2481 = vlaneseq
  %v2482 = vshrl.u32 %v2481, 7
  %v2483 = vsub.s32 %v2480, %v2482
  %v2484 = vrot.slane %v2470, %v2483
  %v2485 = vlaneseq
  %v2486 = vshrl.u32 %v2485, 7
  %v2487 = vsub.s32 0, %v2486
  %v2488 = vrot.slane %v2477, %v2487
  %v2489 = vlaneseq
  %v2490 = vshrl.u32 %v2489, 7
  %v2491 = vsub.s32 0, %v2490
  %v2492 = vrot.slane %v2484, %v2491
  %v2495 = vadd.f32 %v2488, %v109
  %v2496 = vadd.f32 %v2492, %v152
  %v2497 = vtanh.pop %v2495
  %v2498 = vtanh.pop %v2496
  %v2499 = vmul.f32 %v2497, %v404
  %v2500 = vmul.f32 %v2498, %v404
  %v2501 = vsel %vm70, %v2499, 0.0
  %2502 = vadd.xlane.f32.xlu0 %v2501
  %v2503 = vpop.xlane.xlu0 %2502
  %v2504 = vsel %vm70, %v2500, 0.0
  %2505 = vadd.xlane.f32.xlu0 %v2504
  %v2506 = vpop.xlane.xlu0 %2505
  %v2509 = vlaneseq
  %v2510 = vshrl.u32 %v2509, 7
  %v2511 = vsub.s32 %v417, %v2510
  %v2512 = vrot.slane %v2503, %v2511
  %v2513 = vlaneseq
  %v2514 = vshrl.u32 %v2513, 7
  %v2515 = vsub.s32 %v417, %v2514
  %v2516 = vrot.slane %v2506, %v2515
  %v2517 = vsel %vm426, %v2516, %v2512
  %v2519 = vsel %vm429, %v2517, -inf
  %2520 = vmax.xlane.f32.xlu0 %v2519
  %v2521 = vpop.xlane.xlu0 %2520
  %v2523 = vlaneseq
  %v2524 = vshrl.u32 %v2523, 7
  %v2525 = vsub.s32 0, %v2524
  %v2526 = vrot.slane %v2521, %v2525
  %v2527 = vlaneseq
  %v2528 = vshrl.u32 %v2527, 7
  %v2529 = vsub.s32 1, %v2528
  %v2530 = vrot.slane %v2521, %v2529
  %v2533 = vsub.f32 %v2503, %v2526
  %v2534 = vsub.f32 %v2506, %v2530
  %v2535 = vmul.f32 %v2533, 1.442695
  %v2536 = vpow.pop %v2535
  %v2537 = vmul.f32 %v2534, 1.442695
  %v2538 = vpow.pop %v2537
  %2540 = vset.pattern.permute.xlu0 0
  %2541 = vperm.xlu0 %2540, %v2536
  %v2542 = vpop.permute.xlu0 %2541
  %2545 = vset.pattern.permute.xlu0 0
  %2546 = vperm.xlu0 %2545, %v2538
  %v2547 = vpop.permute.xlu0 %2546
  %v2549 = vmul.f32 %v2542, %v43
  %v2550 = vmul.f32 %v2547, %v44
  %v2551 = vsel %vm70, %v2549, 0.0
  %v2552 = vrot.slane %v2551, 4
  %v2553 = vadd.f32 %v2551, %v2552
  %v2554 = vrot.slane %v2553, 2
  %v2555 = vadd.f32 %v2553, %v2554
  %v2556 = vrot.slane %v2555, 1
  %v2557 = vadd.f32 %v2555, %v2556
  %v2558 = vsel %vm70, %v2550, 0.0
  %v2559 = vrot.slane %v2558, 4
  %v2560 = vadd.f32 %v2558, %v2559
  %v2561 = vrot.slane %v2560, 2
  %v2562 = vadd.f32 %v2560, %v2561
  %v2563 = vrot.slane %v2562, 1
  %v2564 = vadd.f32 %v2562, %v2563
  %v2565 = vlaneseq
  %v2566 = vshrl.u32 %v2565, 7
  %v2567 = vsub.s32 %v417, %v2566
  %v2568 = vrot.slane %v2542, %v2567
  %v2569 = vlaneseq
  %v2570 = vshrl.u32 %v2569, 7
  %v2571 = vsub.s32 %v417, %v2570
  %v2572 = vrot.slane %v2547, %v2571
  %v2573 = vsel %vm426, %v2572, %v2568
  %v2575 = vsel %vm429, %v2573, 0.0
  %2576 = vadd.xlane.f32.xlu0 %v2575
  %v2577 = vpop.xlane.xlu0 %2576
  %v2578 = vrcp.pop %v2577
  %v2580 = vrot.slane %v2578, 1
  %v2583 = vmul.f32 %v2557, %v2578
  %v2584 = vmul.f32 %v2564, %v2580
  %v2585 = vmul.f32 %v2583, %v500
  %v2586 = vmul.f32 %v2584, %v500
  %v2589 = vrot.slane %v2586, 7
  %v2590 = vsel %vm426, %v2589, %v2585
  %v2592 = vsel %vm509, %v2590, 0.0
  %2593 = vadd.xlane.f32.xlu0 %v2592
  %v2594 = vpop.xlane.xlu0 %2593
  %v2595 = vmul.f32 %v2594, %v517
  %v2596 = vmul.f32 %v2594, %v521
  %v2597 = vmul.f32 %v2594, %v525
  %v2598 = vmul.f32 %v2594, %v529
  %2599 = vmatprep.subr.bf16.mxu0 %v635
  %2600 = vmatpush1.bf16.msra.mxu0 %v634
  %2601 = vmatprep.subr.bf16.mxu0 %v639
  %2602 = vmatpush1.bf16.msra.mxu0 %v638
  %2603 = vmatprep.subr.bf16.mxu0 %v643
  %2604 = vmatpush1.bf16.msra.mxu0 %v642
  %2605 = vmatprep.subr.bf16.mxu0 %v647
  %2606 = vmatpush1.bf16.msra.mxu0 %v646
  %2607 = vmatprep.subr.bf16.mxu0 %v651
  %2608 = vmatpush1.bf16.msra.mxu0 %v650
  %2609 = vmatprep.subr.bf16.mxu0 %v655
  %2610 = vmatpush1.bf16.msra.mxu0 %v654
  %2611 = vmatprep.subr.bf16.mxu0 %v659
  %2612 = vmatpush1.bf16.msra.mxu0 %v658
  %2613 = vmatprep.subr.bf16.mxu0 %v663
  %2614 = vmatpush1.bf16.msra.mxu0 %v662
  %2615 = vmatprep.subr.bf16.mxu0 0
  %2616 = vmatpush1.bf16.msra.mxu0 0
  %2617 = vmatprep.subr.bf16.mxu0 0
  %2618 = vmatpush1.bf16.msra.mxu0 0
  %2619 = vmatprep.subr.bf16.mxu0 0
  %2620 = vmatpush1.bf16.msra.mxu0 0
  %2621 = vmatprep.subr.bf16.mxu0 0
  %2622 = vmatpush1.bf16.msra.mxu0 0
  %2623 = vmatprep.subr.bf16.mxu0 0
  %2624 = vmatpush1.bf16.msra.mxu0 0
  %2625 = vmatprep.subr.bf16.mxu0 0
  %2626 = vmatpush1.bf16.msra.mxu0 0
  %2627 = vmatprep.subr.bf16.mxu0 0
  %2628 = vmatpush1.bf16.msra.mxu0 0
  %2629 = vmatprep.subr.bf16.mxu0 0
  %2630 = vmatpush1.bf16.msra.mxu0 0
  %2631 = vmatprep.mubr.bf16.mxu0 0
  %2632 = vmatmul.mubr.bf16.gmra.mrb[0].mxu0 %v2420
  %v2633 = vpop.f32.mrb[0].mxu0
  %v2634 = vadd.f32 0.0, %v2633
  %v2635 = vpop.f32.mrb[0].mxu0
  %v2636 = vadd.f32 0.0, %v2635
  %v2637 = vpop.f32.mrb[0].mxu0
  %v2638 = vpop.f32.mrb[0].mxu0
  %2639 = vdwg.mxu0
  %2640 = vmatprep.subr.bf16.mxu0 %v637
  %2641 = vmatpush1.bf16.msra.mxu0 %v636
  %2642 = vmatprep.subr.bf16.mxu0 %v641
  %2643 = vmatpush1.bf16.msra.mxu0 %v640
  %2644 = vmatprep.subr.bf16.mxu0 %v645
  %2645 = vmatpush1.bf16.msra.mxu0 %v644
  %2646 = vmatprep.subr.bf16.mxu0 %v649
  %2647 = vmatpush1.bf16.msra.mxu0 %v648
  %2648 = vmatprep.subr.bf16.mxu0 %v653
  %2649 = vmatpush1.bf16.msra.mxu0 %v652
  %2650 = vmatprep.subr.bf16.mxu0 %v657
  %2651 = vmatpush1.bf16.msra.mxu0 %v656
  %2652 = vmatprep.subr.bf16.mxu0 %v661
  %2653 = vmatpush1.bf16.msra.mxu0 %v660
  %2654 = vmatprep.subr.bf16.mxu0 %v665
  %2655 = vmatpush1.bf16.msra.mxu0 %v664
  %2656 = vmatprep.subr.bf16.mxu0 0
  %2657 = vmatpush1.bf16.msra.mxu0 0
  %2658 = vmatprep.subr.bf16.mxu0 0
  %2659 = vmatpush1.bf16.msra.mxu0 0
  %2660 = vmatprep.subr.bf16.mxu0 0
  %2661 = vmatpush1.bf16.msra.mxu0 0
  %2662 = vmatprep.subr.bf16.mxu0 0
  %2663 = vmatpush1.bf16.msra.mxu0 0
  %2664 = vmatprep.subr.bf16.mxu0 0
  %2665 = vmatpush1.bf16.msra.mxu0 0
  %2666 = vmatprep.subr.bf16.mxu0 0
  %2667 = vmatpush1.bf16.msra.mxu0 0
  %2668 = vmatprep.subr.bf16.mxu0 0
  %2669 = vmatpush1.bf16.msra.mxu0 0
  %2670 = vmatprep.subr.bf16.mxu0 0
  %2671 = vmatpush1.bf16.msra.mxu0 0
  %2672 = vmatprep.mubr.bf16.mxu0 0
  %2673 = vmatmul.mubr.bf16.gmra.mrb[0].mxu0 %v2420
  %v2674 = vpop.f32.mrb[0].mxu0
  %v2675 = vadd.f32 0.0, %v2674
  %v2676 = vpop.f32.mrb[0].mxu0
  %v2677 = vadd.f32 0.0, %v2676
  %v2678 = vpop.f32.mrb[0].mxu0
  %v2679 = vpop.f32.mrb[0].mxu0
  %2680 = vdwg.mxu0
  %v2681 = vadd.f32 %v2595, %v2634
  %v2682 = vadd.f32 %v2596, %v2636
  %v2683 = vadd.f32 %v2597, %v2675
  %v2684 = vadd.f32 %v2598, %v2677
  %s2685 = scalar_lea.vmem %s5, 48
  %v2686 = vld [vmem:[%s2685] sm:$0xff]
  %v2688 = vcombine.high %v2686, %v2686
  %v2690 = vunpack.c.l.s4 1983009808
  %v2691 = vunpack.c.0.s8 %v2690
  %v2692 = vlaneseq
  %v2693 = vshrl.u32 %v2692, 7
  %v2694 = vsub.s32 %v2691, %v2693
  %v2695 = vrot.slane %v2686, %v2694
  %v2697 = vunpack.c.l.s4 1983009808
  %v2698 = vunpack.c.0.s8 %v2697
  %v2699 = vlaneseq
  %v2700 = vshrl.u32 %v2699, 7
  %v2701 = vsub.s32 %v2698, %v2700
  %v2702 = vrot.slane %v2688, %v2701
  %v2703 = vcombine.high %v2695, %v2695
  %v2704 = vcombine.high %v2702, %v2702
  %v2709 = vadd.f32 %v2681, %v2695
  %v2710 = vadd.f32 %v2682, %v2703
  %v2711 = vadd.f32 %v2683, %v2702
  %v2712 = vadd.f32 %v2684, %v2704
  %v2713 = vxor.u32 %v2709, 2147483648
  %v2714 = vxor.u32 %v2710, 2147483648
  %v2715 = vxor.u32 %v2711, 2147483648
  %v2716 = vmul.f32 %v2713, 1.442695
  %v2717 = vpow.pop %v2716
  %v2718 = vmul.f32 %v2714, 1.442695
  %v2719 = vpow.pop %v2718
  %v2720 = vmul.f32 %v2715, 1.442695
  %v2721 = vpow.pop %v2720
  %v2722 = vadd.f32 %v2717, 1.0
  %v2723 = vadd.f32 %v2719, 1.0
  %v2724 = vadd.f32 %v2721, 1.0
  %v2725 = vrcp.pop %v2722
  %v2726 = vmul.f32 1.0, %v2725
  %v2727 = vrcp.pop %v2723
  %v2728 = vmul.f32 1.0, %v2727
  %v2729 = vrcp.pop %v2724
  %v2730 = vmul.f32 1.0, %v2729
  %v2731 = vtanh.pop %v2712
  %v2732 = vmul.f32 %v2728, %v2417
  %v2733 = vmul.f32 %v2726, %v2731
  %v2734 = vadd.f32 %v2732, %v2733
  %v2735 = vtanh.pop %v2734
  %v2736 = vmul.f32 %v2730, %v2735
  %v2737 = vpack.c.bf16 %v2736, %v2736
  %v2738 = vpack.c.bf16 %v2734, %v2734
  %2739 = vmatprep.subr.bf16.mxu0 0
  %2740 = vmatpush1.bf16.msra.mxu0 %v291
  %2741 = vmatprep.subr.bf16.mxu0 0
  %2742 = vmatpush1.bf16.msra.mxu0 %v292
  %2743 = vmatprep.subr.bf16.mxu0 0
  %2744 = vmatpush1.bf16.msra.mxu0 %v293
  %2745 = vmatprep.subr.bf16.mxu0 0
  %2746 = vmatpush1.bf16.msra.mxu0 %v294
  %2747 = vmatprep.subr.bf16.mxu0 0
  %2748 = vmatpush1.bf16.msra.mxu0 %v295
  %2749 = vmatprep.subr.bf16.mxu0 0
  %2750 = vmatpush1.bf16.msra.mxu0 %v296
  %2751 = vmatprep.subr.bf16.mxu0 0
  %2752 = vmatpush1.bf16.msra.mxu0 %v297
  %2753 = vmatprep.subr.bf16.mxu0 0
  %2754 = vmatpush1.bf16.msra.mxu0 %v298
  %2755 = vmatprep.subr.bf16.mxu0 0
  %2756 = vmatpush1.bf16.msra.mxu0 %v299
  %2757 = vmatprep.subr.bf16.mxu0 0
  %2758 = vmatpush1.bf16.msra.mxu0 %v300
  %2759 = vmatprep.subr.bf16.mxu0 0
  %2760 = vmatpush1.bf16.msra.mxu0 %v301
  %2761 = vmatprep.subr.bf16.mxu0 0
  %2762 = vmatpush1.bf16.msra.mxu0 %v302
  %2763 = vmatprep.subr.bf16.mxu0 0
  %2764 = vmatpush1.bf16.msra.mxu0 %v303
  %2765 = vmatprep.subr.bf16.mxu0 0
  %2766 = vmatpush1.bf16.msra.mxu0 %v304
  %2767 = vmatprep.subr.bf16.mxu0 0
  %2768 = vmatpush1.bf16.msra.mxu0 %v305
  %2769 = vmatprep.subr.bf16.mxu0 0
  %2770 = vmatpush1.bf16.msra.mxu0 %v306
  %2771 = vmatprep.mubr.bf16.mxu0 %v2738
  %2772 = vmatmul.mubr.bf16.gmra.mrb[0].mxu0 %v2737
  %v2773 = vpop.f32.mrb[0].mxu0
  %v2774 = vadd.f32 0.0, %v2773
  %v2775 = vpop.f32.mrb[0].mxu0
  %v2776 = vpop.f32.mrb[0].mxu0
  %v2777 = vpop.f32.mrb[0].mxu0
  %2778 = vdwg.mxu0
  %v2781 = vunpack.c.l.s4 1966171168
  %v2782 = vunpack.c.0.s8 %v2781
  %v2783 = vlaneseq
  %v2784 = vshrl.u32 %v2783, 7
  %v2785 = vsub.s32 %v2782, %v2784
  %v2786 = vrot.slane %v2774, %v2785
  %v2787 = vcombine.high %v2786, %v2786
  %v2789 = vunpack.c.l.s4 1966171168
  %v2790 = vunpack.c.0.s8 %v2789
  %v2791 = vlaneseq
  %v2792 = vshrl.u32 %v2791, 7
  %v2793 = vsub.s32 %v2790, %v2792
  %v2794 = vrot.slane %v2786, %v2793
  %v2796 = vunpack.c.l.s4 1966171168
  %v2797 = vunpack.c.0.s8 %v2796
  %v2798 = vlaneseq
  %v2799 = vshrl.u32 %v2798, 7
  %v2800 = vsub.s32 %v2797, %v2799
  %v2801 = vrot.slane %v2787, %v2800
  %v2802 = vlaneseq
  %v2803 = vshrl.u32 %v2802, 7
  %v2804 = vsub.s32 0, %v2803
  %v2805 = vrot.slane %v2794, %v2804
  %v2806 = vlaneseq
  %v2807 = vshrl.u32 %v2806, 7
  %v2808 = vsub.s32 0, %v2807
  %v2809 = vrot.slane %v2801, %v2808
  %v2812 = vadd.f32 %v2805, %v109
  %v2813 = vadd.f32 %v2809, %v152
  %v2814 = vtanh.pop %v2812
  %v2815 = vtanh.pop %v2813
  %v2816 = vmul.f32 %v2814, %v404
  %v2817 = vmul.f32 %v2815, %v404
  %v2818 = vsel %vm70, %v2816, 0.0
  %2819 = vadd.xlane.f32.xlu0 %v2818
  %v2820 = vpop.xlane.xlu0 %2819
  %v2821 = vsel %vm70, %v2817, 0.0
  %2822 = vadd.xlane.f32.xlu0 %v2821
  %v2823 = vpop.xlane.xlu0 %2822
  %v2826 = vlaneseq
  %v2827 = vshrl.u32 %v2826, 7
  %v2828 = vsub.s32 %v417, %v2827
  %v2829 = vrot.slane %v2820, %v2828
  %v2830 = vlaneseq
  %v2831 = vshrl.u32 %v2830, 7
  %v2832 = vsub.s32 %v417, %v2831
  %v2833 = vrot.slane %v2823, %v2832
  %v2834 = vsel %vm426, %v2833, %v2829
  %v2836 = vsel %vm429, %v2834, -inf
  %2837 = vmax.xlane.f32.xlu0 %v2836
  %v2838 = vpop.xlane.xlu0 %2837
  %v2840 = vlaneseq
  %v2841 = vshrl.u32 %v2840, 7
  %v2842 = vsub.s32 0, %v2841
  %v2843 = vrot.slane %v2838, %v2842
  %v2844 = vlaneseq
  %v2845 = vshrl.u32 %v2844, 7
  %v2846 = vsub.s32 1, %v2845
  %v2847 = vrot.slane %v2838, %v2846
  %v2850 = vsub.f32 %v2820, %v2843
  %v2851 = vsub.f32 %v2823, %v2847
  %v2852 = vmul.f32 %v2850, 1.442695
  %v2853 = vpow.pop %v2852
  %v2854 = vmul.f32 %v2851, 1.442695
  %v2855 = vpow.pop %v2854
  %2857 = vset.pattern.permute.xlu0 0
  %2858 = vperm.xlu0 %2857, %v2853
  %v2859 = vpop.permute.xlu0 %2858
  %2862 = vset.pattern.permute.xlu0 0
  %2863 = vperm.xlu0 %2862, %v2855
  %v2864 = vpop.permute.xlu0 %2863
  %v2866 = vmul.f32 %v2859, %v43
  %v2867 = vmul.f32 %v2864, %v44
  %v2868 = vsel %vm70, %v2866, 0.0
  %v2869 = vrot.slane %v2868, 4
  %v2870 = vadd.f32 %v2868, %v2869
  %v2871 = vrot.slane %v2870, 2
  %v2872 = vadd.f32 %v2870, %v2871
  %v2873 = vrot.slane %v2872, 1
  %v2874 = vadd.f32 %v2872, %v2873
  %v2875 = vsel %vm70, %v2867, 0.0
  %v2876 = vrot.slane %v2875, 4
  %v2877 = vadd.f32 %v2875, %v2876
  %v2878 = vrot.slane %v2877, 2
  %v2879 = vadd.f32 %v2877, %v2878
  %v2880 = vrot.slane %v2879, 1
  %v2881 = vadd.f32 %v2879, %v2880
  %v2882 = vlaneseq
  %v2883 = vshrl.u32 %v2882, 7
  %v2884 = vsub.s32 %v417, %v2883
  %v2885 = vrot.slane %v2859, %v2884
  %v2886 = vlaneseq
  %v2887 = vshrl.u32 %v2886, 7
  %v2888 = vsub.s32 %v417, %v2887
  %v2889 = vrot.slane %v2864, %v2888
  %v2890 = vsel %vm426, %v2889, %v2885
  %v2892 = vsel %vm429, %v2890, 0.0
  %2893 = vadd.xlane.f32.xlu0 %v2892
  %v2894 = vpop.xlane.xlu0 %2893
  %v2895 = vrcp.pop %v2894
  %v2897 = vrot.slane %v2895, 1
  %v2900 = vmul.f32 %v2874, %v2895
  %v2901 = vmul.f32 %v2881, %v2897
  %v2902 = vmul.f32 %v2900, %v500
  %v2903 = vmul.f32 %v2901, %v500
  %v2906 = vrot.slane %v2903, 7
  %v2907 = vsel %vm426, %v2906, %v2902
  %v2909 = vsel %vm509, %v2907, 0.0
  %2910 = vadd.xlane.f32.xlu0 %v2909
  %v2911 = vpop.xlane.xlu0 %2910
  %v2912 = vmul.f32 %v2911, %v517
  %v2913 = vmul.f32 %v2911, %v521
  %v2914 = vmul.f32 %v2911, %v525
  %v2915 = vmul.f32 %v2911, %v529
  %2916 = vmatprep.subr.bf16.mxu0 %v635
  %2917 = vmatpush1.bf16.msra.mxu0 %v634
  %2918 = vmatprep.subr.bf16.mxu0 %v639
  %2919 = vmatpush1.bf16.msra.mxu0 %v638
  %2920 = vmatprep.subr.bf16.mxu0 %v643
  %2921 = vmatpush1.bf16.msra.mxu0 %v642
  %2922 = vmatprep.subr.bf16.mxu0 %v647
  %2923 = vmatpush1.bf16.msra.mxu0 %v646
  %2924 = vmatprep.subr.bf16.mxu0 %v651
  %2925 = vmatpush1.bf16.msra.mxu0 %v650
  %2926 = vmatprep.subr.bf16.mxu0 %v655
  %2927 = vmatpush1.bf16.msra.mxu0 %v654
  %2928 = vmatprep.subr.bf16.mxu0 %v659
  %2929 = vmatpush1.bf16.msra.mxu0 %v658
  %2930 = vmatprep.subr.bf16.mxu0 %v663
  %2931 = vmatpush1.bf16.msra.mxu0 %v662
  %2932 = vmatprep.subr.bf16.mxu0 0
  %2933 = vmatpush1.bf16.msra.mxu0 0
  %2934 = vmatprep.subr.bf16.mxu0 0
  %2935 = vmatpush1.bf16.msra.mxu0 0
  %2936 = vmatprep.subr.bf16.mxu0 0
  %2937 = vmatpush1.bf16.msra.mxu0 0
  %2938 = vmatprep.subr.bf16.mxu0 0
  %2939 = vmatpush1.bf16.msra.mxu0 0
  %2940 = vmatprep.subr.bf16.mxu0 0
  %2941 = vmatpush1.bf16.msra.mxu0 0
  %2942 = vmatprep.subr.bf16.mxu0 0
  %2943 = vmatpush1.bf16.msra.mxu0 0
  %2944 = vmatprep.subr.bf16.mxu0 0
  %2945 = vmatpush1.bf16.msra.mxu0 0
  %2946 = vmatprep.subr.bf16.mxu0 0
  %2947 = vmatpush1.bf16.msra.mxu0 0
  %2948 = vmatprep.mubr.bf16.mxu0 0
  %2949 = vmatmul.mubr.bf16.gmra.mrb[0].mxu0 %v2737
  %v2950 = vpop.f32.mrb[0].mxu0
  %v2951 = vadd.f32 0.0, %v2950
  %v2952 = vpop.f32.mrb[0].mxu0
  %v2953 = vadd.f32 0.0, %v2952
  %v2954 = vpop.f32.mrb[0].mxu0
  %v2955 = vpop.f32.mrb[0].mxu0
  %2956 = vdwg.mxu0
  %2957 = vmatprep.subr.bf16.mxu0 %v637
  %2958 = vmatpush1.bf16.msra.mxu0 %v636
  %2959 = vmatprep.subr.bf16.mxu0 %v641
  %2960 = vmatpush1.bf16.msra.mxu0 %v640
  %2961 = vmatprep.subr.bf16.mxu0 %v645
  %2962 = vmatpush1.bf16.msra.mxu0 %v644
  %2963 = vmatprep.subr.bf16.mxu0 %v649
  %2964 = vmatpush1.bf16.msra.mxu0 %v648
  %2965 = vmatprep.subr.bf16.mxu0 %v653
  %2966 = vmatpush1.bf16.msra.mxu0 %v652
  %2967 = vmatprep.subr.bf16.mxu0 %v657
  %2968 = vmatpush1.bf16.msra.mxu0 %v656
  %2969 = vmatprep.subr.bf16.mxu0 %v661
  %2970 = vmatpush1.bf16.msra.mxu0 %v660
  %2971 = vmatprep.subr.bf16.mxu0 %v665
  %2972 = vmatpush1.bf16.msra.mxu0 %v664
  %2973 = vmatprep.subr.bf16.mxu0 0
  %2974 = vmatpush1.bf16.msra.mxu0 0
  %2975 = vmatprep.subr.bf16.mxu0 0
  %2976 = vmatpush1.bf16.msra.mxu0 0
  %2977 = vmatprep.subr.bf16.mxu0 0
  %2978 = vmatpush1.bf16.msra.mxu0 0
  %2979 = vmatprep.subr.bf16.mxu0 0
  %2980 = vmatpush1.bf16.msra.mxu0 0
  %2981 = vmatprep.subr.bf16.mxu0 0
  %2982 = vmatpush1.bf16.msra.mxu0 0
  %2983 = vmatprep.subr.bf16.mxu0 0
  %2984 = vmatpush1.bf16.msra.mxu0 0
  %2985 = vmatprep.subr.bf16.mxu0 0
  %2986 = vmatpush1.bf16.msra.mxu0 0
  %2987 = vmatprep.subr.bf16.mxu0 0
  %2988 = vmatpush1.bf16.msra.mxu0 0
  %2989 = vmatprep.mubr.bf16.mxu0 0
  %2990 = vmatmul.mubr.bf16.gmra.mrb[0].mxu0 %v2737
  %v2991 = vpop.f32.mrb[0].mxu0
  %v2992 = vadd.f32 0.0, %v2991
  %v2993 = vpop.f32.mrb[0].mxu0
  %v2994 = vadd.f32 0.0, %v2993
  %v2995 = vpop.f32.mrb[0].mxu0
  %v2996 = vpop.f32.mrb[0].mxu0
  %2997 = vdwg.mxu0
  %v2998 = vadd.f32 %v2912, %v2951
  %v2999 = vadd.f32 %v2913, %v2953
  %v3000 = vadd.f32 %v2914, %v2992
  %v3001 = vadd.f32 %v2915, %v2994
  %s3002 = scalar_lea.vmem %s5, 56
  %v3003 = vld [vmem:[%s3002] sm:$0xff]
  %v3005 = vcombine.high %v3003, %v3003
  %v3007 = vunpack.c.l.s4 1983009808
  %v3008 = vunpack.c.0.s8 %v3007
  %v3009 = vlaneseq
  %v3010 = vshrl.u32 %v3009, 7
  %v3011 = vsub.s32 %v3008, %v3010
  %v3012 = vrot.slane %v3003, %v3011
  %v3014 = vunpack.c.l.s4 1983009808
  %v3015 = vunpack.c.0.s8 %v3014
  %v3016 = vlaneseq
  %v3017 = vshrl.u32 %v3016, 7
  %v3018 = vsub.s32 %v3015, %v3017
  %v3019 = vrot.slane %v3005, %v3018
  %v3020 = vcombine.high %v3012, %v3012
  %v3021 = vcombine.high %v3019, %v3019
  %v3026 = vadd.f32 %v2998, %v3012
  %v3027 = vadd.f32 %v2999, %v3020
  %v3028 = vadd.f32 %v3000, %v3019
  %v3029 = vadd.f32 %v3001, %v3021
  %v3030 = vxor.u32 %v3026, 2147483648
  %v3031 = vxor.u32 %v3027, 2147483648
  %v3032 = vxor.u32 %v3028, 2147483648
  %v3033 = vmul.f32 %v3030, 1.442695
  %v3034 = vpow.pop %v3033
  %v3035 = vmul.f32 %v3031, 1.442695
  %v3036 = vpow.pop %v3035
  %v3037 = vmul.f32 %v3032, 1.442695
  %v3038 = vpow.pop %v3037
  %v3039 = vadd.f32 %v3034, 1.0
  %v3040 = vadd.f32 %v3036, 1.0
  %v3041 = vadd.f32 %v3038, 1.0
  %v3042 = vrcp.pop %v3039
  %v3043 = vmul.f32 1.0, %v3042
  %v3044 = vrcp.pop %v3040
  %v3045 = vmul.f32 1.0, %v3044
  %v3046 = vrcp.pop %v3041
  %v3047 = vmul.f32 1.0, %v3046
  %v3048 = vtanh.pop %v3029
  %v3049 = vmul.f32 %v3045, %v2734
  %v3050 = vmul.f32 %v3043, %v3048
  %v3051 = vadd.f32 %v3049, %v3050
  %v3052 = vtanh.pop %v3051
  %v3053 = vmul.f32 %v3047, %v3052
  %v3055 = vlaneseq
  %v3056 = vshrl.u32 %v3055, 7
  %v3057 = vsub.s32 0, %v3056
  %v3058 = vrot.slane %v224, %v3057
  %v3060 = vmul.f32 %v3053, %v3058
  %vm3061 = vcmask 1041408
  %v3062 = vsel %vm3061, %v3060, 0.0
  %3063 = vadd.xlane.f32.xlu0 %v3062
  %v3064 = vpop.xlane.xlu0 %3063
  %v3066 = vlaneseq
  %v3067 = vshrl.u32 %v3066, 7
  %v3068 = vsub.s32 0, %v3067
  %v3069 = vrot.slane %v225, %v3068
  %v3071 = vmul.f32 %v2900, %v3069
  %v3072 = vmul.f32 %v2901, %v3069
  %v3075 = vrot.slane %v3072, 7
  %v3076 = vsel %vm426, %v3075, %v3071
  %v3078 = vsel %vm509, %v3076, 0.0
  %3079 = vadd.xlane.f32.xlu0 %v3078
  %v3080 = vpop.xlane.xlu0 %3079
  %v3081 = vadd.f32 %v3064, %v3080
  %v3082 = vstv %s226
  %v3083 = vadd.f32 %v3081, %v3082
  %vm3084 = vcmask 1024
  %3085 = vst.msk [vmem:[%s12] sm:$0x3] %vm3084, %v3083
  // Predicated region
  $region50: #{decoder_forward.1} parent=0 // pred_check
    _
  $region51: #{decoder_forward.1} parent=0 // pred_check_branch
    %3087 = sbr.rel (0) target = $region53
  $region52: #{decoder_forward.1} parent=0 // pred_region
    _
  $region53: #{decoder_forward.1} parent=0 // pred_fallthru
    _
  // Predicated region
  $region54: #{decoder_forward.1} parent=0 // pred_check
    _
  $region55: #{decoder_forward.1} parent=0 // pred_check_branch
    %3089 = sbr.rel (0) target = $region57
  $region56: #{decoder_forward.1} parent=0 // pred_region
    _
  $region57: #{decoder_forward.1} parent=0 // pred_fallthru
    _

</llo_original>
